<compile_context>
chip_gen: v5e
topology: v5e:2x2
jax: 0.10.0
libtpu: 0.0.40
codegen_flags: <defaults>
</compile_context>

<pallas_src>
import numpy as np
import jax
import jax.numpy as jnp
from jax.experimental import pallas as pl
from jax.experimental.pallas import tpu as pltpu


# ----------------------------------------------------------------------------
# Fused kernel: diag encoder + med encoder (interleaved recurrences) + MLP head
# ----------------------------------------------------------------------------
def _model_kernel(
        # diag encoder inputs
        d_x_ref, d_mask_ref, d_wxz_ref, d_bin_ref, d_whh_ref,
        d_attwf_ref, d_attwb_ref, d_attb_ref,
        # med encoder inputs
        m_x_ref, m_mask_ref, m_wxz_ref, m_bin_ref, m_whh_ref,
        m_attwf_ref, m_attwb_ref, m_attb_ref,
        # head inputs
        sexage_ref, w1_ref, b1_ref, w2_ref,
        # outputs
        logits_ref, original_ref,
        # scratch
        d_zin_s, d_outf_s, d_outb_s, m_zin_s, m_outf_s, m_outb_s):

    B_pad = sexage_ref.shape[0]
    d_H = d_whh_ref.shape[0] // 2
    m_H = m_whh_ref.shape[0] // 2
    d_T = d_x_ref.shape[0] // B_pad
    m_T = m_x_ref.shape[0] // B_pad

    # (1) hoisted fused input projection (embedding already folded into W_xz in
    #     the wrapper); biases folded in once here. bf16 operands, f32 accum.
    d_zin_s[...] = (jnp.dot(d_x_ref[...], d_wxz_ref[...],
                            preferred_element_type=jnp.float32) + d_bin_ref[...])
    m_zin_s[...] = (jnp.dot(m_x_ref[...], m_wxz_ref[...],
                            preferred_element_type=jnp.float32) + m_bin_ref[...])

    d_whh = d_whh_ref[...]          # (2H, 8H) bf16, block-diagonal
    m_whh = m_whh_ref[...]

    # One recurrence step for one encoder. Gate-column layout (width 8H):
    #   [i_f, i_b, f_f, f_b, o_f, o_b, g_f, g_b]  (each block H lanes)
    # so i/f/o/g extraction is pure lane-slab slicing and the fwd/bwd state
    # [h_f | h_b] maps 1:1 onto each gate slab's lanes.
    def make_step(zin_s, outf_s, outb_s, w_hh, T, H):
        col = jax.lax.broadcasted_iota(jnp.int32, (B_pad, 8 * H), 1)
        fwd_cols = (col % (2 * H)) < H          # loop-invariant lane mask

        def step(t, h2, c2):
            rf = pl.multiple_of(t * B_pad, B_pad)              # fwd time t
            rb = pl.multiple_of((T - 1 - t) * B_pad, B_pad)    # bwd time T-1-t
            # merge the two precomputed pre-activation rows (fwd cols from rf,
            # bwd cols from rb), then add the single fused recurrent matmul.
            z = jnp.where(fwd_cols,
                          zin_s[pl.ds(rf, B_pad), :],
                          zin_s[pl.ds(rb, B_pad), :])
            z = z + jnp.dot(h2.astype(jnp.bfloat16), w_hh,
                            preferred_element_type=jnp.float32)
            s = jax.nn.sigmoid(z[:, 0:6 * H])        # [i | f | o]
            g = jnp.tanh(z[:, 6 * H:8 * H])          # [g]
            c2 = s[:, 2 * H:4 * H] * c2 + s[:, 0:2 * H] * g
            h2 = s[:, 4 * H:6 * H] * jnp.tanh(c2)
            # (3) aligned full 8-row, full-width scratch stores.
            outf_s[pl.ds(rf, B_pad), :] = h2[:, 0:H]
            outb_s[pl.ds(rb, B_pad), :] = h2[:, H:2 * H]
            return h2, c2
        return step

    d_step = make_step(d_zin_s, d_outf_s, d_outb_s, d_whh, d_T, d_H)
    m_step = make_step(m_zin_s, m_outf_s, m_outb_s, m_whh, m_T, m_H)

    d_h = jnp.zeros((B_pad, 2 * d_H), jnp.float32)
    d_c = jnp.zeros((B_pad, 2 * d_H), jnp.float32)
    m_h = jnp.zeros((B_pad, 2 * m_H), jnp.float32)
    m_c = jnp.zeros((B_pad, 2 * m_H), jnp.float32)

    # (8) interleave diag & med recurrences: two independent matmul chains.
    T_lo = min(d_T, m_T)

    def both(t, carry):
        dh, dc, mh, mc = carry
        dh, dc = d_step(t, dh, dc)
        mh, mc = m_step(t, mh, mc)
        return dh, dc, mh, mc

    d_h, d_c, m_h, m_c = jax.lax.fori_loop(
        0, T_lo, both, (d_h, d_c, m_h, m_c), unroll=True)

    if d_T > T_lo:                    # static branch (shapes known at trace)
        _ = jax.lax.fori_loop(T_lo, d_T,
                              lambda t, c: d_step(t, c[0], c[1]),
                              (d_h, d_c), unroll=True)
    if m_T > T_lo:
        _ = jax.lax.fori_loop(T_lo, m_T,
                              lambda t, c: m_step(t, m_h, m_c)
                              if False else m_step(t, c[0], c[1]),
                              (m_h, m_c), unroll=True)

    # (5) masked attention: (T, 8, ·) reshape + axis-0 weighted sums (VPU adds,
    #     no selector matrix, no cross-lane reductions); approx reciprocal on
    #     the denominator (logits are tanh-bounded so exp() cannot overflow).
    def attention(x_ref, mask_ref, attwf_ref, attwb_ref, attb_ref,
                  outf_s, outb_s, T, H):
        of = outf_s[...]                                   # (T*B, H) f32
        ob = outb_s[...]
        logits = jnp.tanh(
            jnp.dot(of, attwf_ref[...], preferred_element_type=jnp.float32)
            + jnp.dot(ob, attwb_ref[...], preferred_element_type=jnp.float32)
            + attb_ref[...])                               # (T*B, 1)
        e = jnp.exp(logits) * mask_ref[...]                # (T*B, 1)
        e3 = e.reshape(T, B_pad, 1)
        inv = pl.reciprocal(jnp.sum(e3, axis=0) + 1e-7, approx=True)   # (B,1)
        hf = inv * jnp.sum(e3 * of.reshape(T, B_pad, H), axis=0)
        hb = inv * jnp.sum(e3 * ob.reshape(T, B_pad, H), axis=0)
        x = x_ref[...].astype(jnp.float32)                 # (T*B, V)
        original = inv * jnp.sum(e3 * x.reshape(T, B_pad, x.shape[1]), axis=0)
        return jnp.concatenate([hf, hb], axis=-1), original

    d_hidden, d_orig = attention(d_x_ref, d_mask_ref, d_attwf_ref, d_attwb_ref,
                                 d_attb_ref, d_outf_s, d_outb_s, d_T, d_H)
    m_hidden, m_orig = attention(m_x_ref, m_mask_ref, m_attwf_ref, m_attwb_ref,
                                 m_attb_ref, m_outf_s, m_outb_s, m_T, m_H)

    sa = sexage_ref[...]                                   # (B_pad, 2)

    # (4) lane-dense output writes (padded to a 128-lane multiple).
    used = d_orig.shape[1] + m_orig.shape[1] + 2
    pad_w = original_ref.shape[1] - used
    pieces = [d_orig, m_orig, sa]
    if pad_w > 0:
        pieces.append(jnp.zeros((B_pad, pad_w), jnp.float32))
    original_ref[...] = jnp.concatenate(pieces, axis=-1)

    hidden = jnp.concatenate([d_hidden, m_hidden, sa], axis=-1)
    z1 = jnp.maximum(
        jnp.dot(hidden, w1_ref[...], preferred_element_type=jnp.float32)
        + b1_ref[...], 0.0)
    logits_ref[...] = jnp.dot(z1, w2_ref[...],             # (B_pad, 128)
                              preferred_element_type=jnp.float32)


# ----------------------------------------------------------------------------
# Wrapper-side parameter packing / input layout prep
# ----------------------------------------------------------------------------
def _pack_encoder(p):
    """Pack (i,f,g,o)-ordered per-direction LSTM params into the fused layout.

    Column order (width 8H): [i_f, i_b, f_f, f_b, o_f, o_b, g_f, g_b].
    The embedding Linear (no bias) is folded into the input projection.
    """
    H = p["w_hh_f"].shape[0]

    def gsplit(w):
        return (w[..., 0:H], w[..., H:2 * H], w[..., 2 * H:3 * H],
                w[..., 3 * H:4 * H])

    i_f, f_f, g_f, o_f = gsplit(p["w_ih_f"])
    i_b, f_b, g_b, o_b = gsplit(p["w_ih_b"])
    w_in = jnp.concatenate([i_f, i_b, f_f, f_b, o_f, o_b, g_f, g_b], axis=1)
    w_xz = jnp.dot(p["emb_w"], w_in).astype(jnp.bfloat16)     # (V, 8H)

    bi_f, bf_f, bg_f, bo_f = gsplit(p["b_f"])
    bi_b, bf_b, bg_b, bo_b = gsplit(p["b_b"])
    b_in = jnp.concatenate([bi_f, bi_b, bf_f, bf_b, bo_f, bo_b, bg_f, bg_b],
                           axis=1)                            # (1, 8H) f32

    hi_f, hf_f, hg_f, ho_f = gsplit(p["w_hh_f"])
    hi_b, hf_b, hg_b, ho_b = gsplit(p["w_hh_b"])
    z = jnp.zeros((H, H), jnp.float32)
    w_hh = jnp.concatenate([
        jnp.concatenate([hi_f, z, hf_f, z, ho_f, z, hg_f, z], axis=1),
        jnp.concatenate([z, hi_b, z, hf_b, z, ho_b, z, hg_b], axis=1)],
        axis=0).astype(jnp.bfloat16)                          # (2H, 8H)

    return dict(w_xz=w_xz, b_in=b_in, w_hh=w_hh, H=H,
                att_wf=p["att_wf"], att_wb=p["att_wb"], att_b=p["att_b"])


def _prep_x(x, B_pad):
    """(B,T,V) -> time-major, batch-padded (T*B_pad, V) bf16 + f32 mask."""
    B, T, V = x.shape
    xp = jnp.zeros((T, B_pad, V), jnp.float32)
    xp = xp.at[:, :B, :].set(jnp.transpose(x.astype(jnp.float32), (1, 0, 2)))
    x_flat = xp.reshape(T * B_pad, V)
    mask = (jnp.sum(x_flat, axis=-1, keepdims=True) != 0.0).astype(jnp.float32)
    return x_flat.astype(jnp.bfloat16), mask


def model_forward(params, diag_inputs, med_inputs, sexes, ages):
    B, T_d, V_d = diag_inputs.shape
    _, T_m, V_m = med_inputs.shape
    B_pad = ((B + 7) // 8) * 8                 # (3) 8-sublane batch padding

    d_x, d_mask = _prep_x(diag_inputs, B_pad)
    m_x, m_mask = _prep_x(med_inputs, B_pad)
    dp = _pack_encoder(params["diag"])
    mp = _pack_encoder(params["med"])
    H_d, H_m = dp["H"], mp["H"]

    sa = jnp.zeros((B_pad, 2), jnp.float32)
    sa = sa.at[:B, 0].set(sexes.astype(jnp.float32))
    sa = sa.at[:B, 1].set(ages.astype(jnp.float32))

    hidden_size = params["w1"].shape[1]
    LOGIT_PAD = 128                                           # (4) lane-dense
    ORIG_PAD = ((V_d + V_m + 2 + 127) // 128) * 128
    w2_pad = jnp.zeros((hidden_size, LOGIT_PAD), jnp.float32)
    w2_pad = w2_pad.at[:, 0:1].set(params["w2"])

    vmem = pl.BlockSpec(memory_space=pltpu.MemorySpace.VMEM)
    out_logits, out_orig = pl.pallas_call(
        _model_kernel,
        out_shape=(jax.ShapeDtypeStruct((B_pad, LOGIT_PAD), jnp.float32),
                   jax.ShapeDtypeStruct((B_pad, ORIG_PAD), jnp.float32)),
        in_specs=[vmem] * 20,
        out_specs=(vmem, vmem),
        scratch_shapes=[
            pltpu.VMEM((T_d * B_pad, 8 * H_d), jnp.float32),  # diag zin
            pltpu.VMEM((T_d * B_pad, H_d), jnp.float32),      # diag fwd out
            pltpu.VMEM((T_d * B_pad, H_d), jnp.float32),      # diag bwd out
            pltpu.VMEM((T_m * B_pad, 8 * H_m), jnp.float32),  # med zin
            pltpu.VMEM((T_m * B_pad, H_m), jnp.float32),      # med fwd out
            pltpu.VMEM((T_m * B_pad, H_m), jnp.float32),      # med bwd out
        ],
        # Tiny footprint here; cap kept conservative so the same config fits
        # v7x's 64 MiB VMEM as well as v5e/v6e's 128 MiB.
        compiler_params=pltpu.CompilerParams(
            vmem_limit_bytes=32 * 1024 * 1024),
    )(d_x, d_mask, dp["w_xz"], dp["b_in"], dp["w_hh"],
      dp["att_wf"], dp["att_wb"], dp["att_b"],
      m_x, m_mask, mp["w_xz"], mp["b_in"], mp["w_hh"],
      mp["att_wf"], mp["att_wb"], mp["att_b"],
      sa, params["w1"], params["b1"], w2_pad)

    return out_logits[:B, 0], out_orig[:B, :V_d + V_m + 2]


# ----------------------------------------------------------------------------
# Deterministic parameter init (shapes follow LSTMModel.__init__; gate order
# i, f, g, o per direction — the wrapper re-packs into the fused layout)
# ----------------------------------------------------------------------------
def init_params(key, diag_vocab, med_vocab, diag_emb, med_emb,
                diag_hid, med_hid, hidden_size):
    def dense(k, shape, scale=0.1):
        return scale * jax.random.normal(k, shape, dtype=jnp.float32)

    def enc_params(k, V, E, H):
        kk = jax.random.split(k, 10)
        return dict(
            emb_w=dense(kk[0], (V, E)),         # Linear(V, E, bias=False), pre-T
            w_ih_f=dense(kk[1], (E, 4 * H)),    # gates packed (i, f, g, o)
            w_hh_f=dense(kk[2], (H, 4 * H)),
            b_f=dense(kk[3], (1, 4 * H)),       # b_ih + b_hh combined
            w_ih_b=dense(kk[4], (E, 4 * H)),
            w_hh_b=dense(kk[5], (H, 4 * H)),
            b_b=dense(kk[6], (1, 4 * H)),
            att_wf=dense(kk[7], (H, 1)),        # Linear(2H, 1) weight, fwd half
            att_wb=dense(kk[8], (H, 1)),        # Linear(2H, 1) weight, bwd half
            att_b=dense(kk[9], (1, 1)),
        )

    ks = jax.random.split(key, 5)
    D = 2 * diag_hid + 2 * med_hid + 2
    return dict(
        diag=enc_params(ks[0], diag_vocab, diag_emb, diag_hid),
        med=enc_params(ks[1], med_vocab, med_emb, med_hid),
        w1=dense(ks[2], (D, hidden_size)),      # lstm2hidden_ipw, pre-T
        b1=dense(ks[3], (1, hidden_size)),
        w2=dense(ks[4], (hidden_size, 1)),      # hidden2out_ipw (no bias), pre-T
    )


# ----------------------------------------------------------------------------
# Pure-JAX reference (for self-check)
# ----------------------------------------------------------------------------
def _encoder_ref(x, p):
    B, T, V = x.shape
    H = p["w_hh_f"].shape[0]
    emb = x @ p["emb_w"]                                       # (B, T, E)

    def run(w_ih, w_hh, b, reverse):
        h = jnp.zeros((B, H), jnp.float32)
        c = jnp.zeros((B, H), jnp.float32)
        out = [None] * T
        ts = range(T - 1, -1, -1) if reverse else range(T)
        for t in ts:
            z = emb[:, t, :] @ w_ih + h @ w_hh + b
            i = jax.nn.sigmoid(z[:, :H])
            f = jax.nn.sigmoid(z[:, H:2 * H])
            g = jnp.tanh(z[:, 2 * H:3 * H])
            o = jax.nn.sigmoid(z[:, 3 * H:])
            c = f * c + i * g
            h = o * jnp.tanh(c)
            out[t] = h
        return jnp.stack(out, axis=1)                          # (B, T, H)

    out_f = run(p["w_ih_f"], p["w_hh_f"], p["b_f"], False)
    out_b = run(p["w_ih_b"], p["w_hh_b"], p["b_b"], True)
    outputs = jnp.concatenate([out_f, out_b], axis=-1)         # (B, T, 2H)
    logits = jnp.tanh(out_f @ p["att_wf"][:, 0] + out_b @ p["att_wb"][:, 0]
                      + p["att_b"][0, 0])                      # (B, T)
    mask = (x.sum(-1) != 0).astype(jnp.float32)
    e = jnp.exp(logits) * mask
    att = e / (e.sum(axis=1, keepdims=True) + 1e-7)
    hidden = (outputs * att[:, :, None]).sum(axis=1)
    original = (x * att[:, :, None]).sum(axis=1)
    return hidden, original


def model_ref(params, diag, med, sexes, ages):
    dh, do = _encoder_ref(diag.astype(jnp.float32), params["diag"])
    mh, mo = _encoder_ref(med.astype(jnp.float32), params["med"])
    s = sexes.astype(jnp.float32).reshape(-1, 1)
    a = ages.astype(jnp.float32).reshape(-1, 1)
    original = jnp.concatenate([do, mo, s, a], axis=1)
    hidden = jnp.concatenate([dh, mh, s, a], axis=1)
    z = jnp.maximum(hidden @ params["w1"] + params["b1"], 0.0)
    return (z @ params["w2"])[:, 0], original


# ----------------------------------------------------------------------------
if __name__ == "__main__":
    B = 2
    T_DIAG, T_MED = 8, 6
    DIAG_V, MED_V = 24, 16
    DIAG_E, MED_E = 16, 16
    DIAG_H, MED_H = 16, 16   # bidirectional -> 8H = 128 lanes per encoder
    HIDDEN = 32

    key = jax.random.PRNGKey(0)
    k_in, k_par = jax.random.split(key)
    kd, km, ks, ka = jax.random.split(k_in, 4)

    diag = (jax.random.uniform(kd, (B, T_DIAG, DIAG_V)) < 0.3).astype(jnp.float32)
    med = (jax.random.uniform(km, (B, T_MED, MED_V)) < 0.3).astype(jnp.float32)
    # zero-pad trailing timesteps so the attention mask path is exercised
    diag = diag.at[1, -2:, :].set(0.0)
    med = med.at[0, -1:, :].set(0.0)
    sexes = jax.random.randint(ks, (B,), 0, 2)
    ages = jax.random.uniform(ka, (B,), minval=20.0, maxval=80.0)

    params = init_params(k_par, DIAG_V, MED_V, DIAG_E, MED_E,
                         DIAG_H, MED_H, HIDDEN)

    fwd = jax.jit(model_forward)
    logits, original = fwd(params, diag, med, sexes, ages)
    jax.block_until_ready((logits, original))

    ref_logits, ref_original = model_ref(params, diag, med, sexes, ages)
    # bf16 MXU operands + approx reciprocal -> modestly relaxed tolerances.
    np.testing.assert_allclose(np.asarray(logits), np.asarray(ref_logits),
                               rtol=5e-2, atol=2e-2)
    np.testing.assert_allclose(np.asarray(original), np.asarray(ref_original),
                               rtol=5e-2, atol=2e-2)
    print("KERNEL_OK")
</pallas_src>

<mosaic_0001>
module attributes {stable_mosaic.version = 11 : i64} {
  func.func @_model_kernel(%arg0: memref<64x24xbf16, #tpu.memory_space<vmem>>, %arg1: memref<64x1xf32, #tpu.memory_space<vmem>>, %arg2: memref<24x128xbf16, #tpu.memory_space<vmem>>, %arg3: memref<1x128xf32, #tpu.memory_space<vmem>>, %arg4: memref<32x128xbf16, #tpu.memory_space<vmem>>, %arg5: memref<16x1xf32, #tpu.memory_space<vmem>>, %arg6: memref<16x1xf32, #tpu.memory_space<vmem>>, %arg7: memref<1x1xf32, #tpu.memory_space<vmem>>, %arg8: memref<48x16xbf16, #tpu.memory_space<vmem>>, %arg9: memref<48x1xf32, #tpu.memory_space<vmem>>, %arg10: memref<16x128xbf16, #tpu.memory_space<vmem>>, %arg11: memref<1x128xf32, #tpu.memory_space<vmem>>, %arg12: memref<32x128xbf16, #tpu.memory_space<vmem>>, %arg13: memref<16x1xf32, #tpu.memory_space<vmem>>, %arg14: memref<16x1xf32, #tpu.memory_space<vmem>>, %arg15: memref<1x1xf32, #tpu.memory_space<vmem>>, %arg16: memref<8x2xf32, #tpu.memory_space<vmem>>, %arg17: memref<66x32xf32, #tpu.memory_space<vmem>>, %arg18: memref<1x32xf32, #tpu.memory_space<vmem>>, %arg19: memref<32x128xf32, #tpu.memory_space<vmem>>, %arg20: memref<8x128xf32, #tpu.memory_space<vmem>>, %arg21: memref<8x128xf32, #tpu.memory_space<vmem>>, %arg22: memref<64x128xf32, #tpu.memory_space<vmem>>, %arg23: memref<64x16xf32, #tpu.memory_space<vmem>>, %arg24: memref<64x16xf32, #tpu.memory_space<vmem>>, %arg25: memref<48x128xf32, #tpu.memory_space<vmem>>, %arg26: memref<48x16xf32, #tpu.memory_space<vmem>>, %arg27: memref<48x16xf32, #tpu.memory_space<vmem>>) attributes {dimension_semantics = [], scalar_prefetch = 0 : i64, scratch_operands = 6 : i64, tpu.core_type = #tpu.core_type<tc>} {
    %c0 = arith.constant 0 : index
    %c0_0 = arith.constant 0 : index
    %0 = vector.load %arg0[%c0, %c0_0] : memref<64x24xbf16, #tpu.memory_space<vmem>>, vector<64x24xbf16>
    %c0_1 = arith.constant 0 : index
    %c0_2 = arith.constant 0 : index
    %1 = vector.load %arg2[%c0_1, %c0_2] : memref<24x128xbf16, #tpu.memory_space<vmem>>, vector<24x128xbf16>
    %cst = arith.constant dense<0.000000e+00> : vector<64x128xf32>
    %2 = tpu.matmul %0, %1, %cst {dimension_numbers = #tpu.dot_dimension_numbers<[1], [0], [0], [1], [0, 0, 1, 1], [], []>} : vector<64x24xbf16>, vector<24x128xbf16>, vector<64x128xf32> -> vector<64x128xf32>
    %c0_3 = arith.constant 0 : index
    %c0_4 = arith.constant 0 : index
    %3 = vector.load %arg3[%c0_3, %c0_4] : memref<1x128xf32, #tpu.memory_space<vmem>>, vector<1x128xf32>
    %4 = vector.broadcast %3 : vector<1x128xf32> to vector<64x128xf32>
    %5 = arith.addf %2, %4 : vector<64x128xf32>
    %c0_5 = arith.constant 0 : index
    %c0_6 = arith.constant 0 : index
    %6 = vector.load %arg22[%c0_5, %c0_6] : memref<64x128xf32, #tpu.memory_space<vmem>>, vector<64x128xf32>
    tpu.vector_store %arg22[%c0_5, %c0_6], %5 {strides = array<i32>} : memref<64x128xf32, #tpu.memory_space<vmem>>, vector<64x128xf32>,
    %c0_7 = arith.constant 0 : index
    %c0_8 = arith.constant 0 : index
    %7 = vector.load %arg8[%c0_7, %c0_8] : memref<48x16xbf16, #tpu.memory_space<vmem>>, vector<48x16xbf16>
    %c0_9 = arith.constant 0 : index
    %c0_10 = arith.constant 0 : index
    %8 = vector.load %arg10[%c0_9, %c0_10] : memref<16x128xbf16, #tpu.memory_space<vmem>>, vector<16x128xbf16>
    %cst_11 = arith.constant dense<0.000000e+00> : vector<48x128xf32>
    %9 = tpu.matmul %7, %8, %cst_11 {dimension_numbers = #tpu.dot_dimension_numbers<[1], [0], [0], [1], [0, 0, 1, 1], [], []>} : vector<48x16xbf16>, vector<16x128xbf16>, vector<48x128xf32> -> vector<48x128xf32>
    %c0_12 = arith.constant 0 : index
    %c0_13 = arith.constant 0 : index
    %10 = vector.load %arg11[%c0_12, %c0_13] : memref<1x128xf32, #tpu.memory_space<vmem>>, vector<1x128xf32>
    %11 = vector.broadcast %10 : vector<1x128xf32> to vector<48x128xf32>
    %12 = arith.addf %9, %11 : vector<48x128xf32>
    %c0_14 = arith.constant 0 : index
    %c0_15 = arith.constant 0 : index
    %13 = vector.load %arg25[%c0_14, %c0_15] : memref<48x128xf32, #tpu.memory_space<vmem>>, vector<48x128xf32>
    tpu.vector_store %arg25[%c0_14, %c0_15], %12 {strides = array<i32>} : memref<48x128xf32, #tpu.memory_space<vmem>>, vector<48x128xf32>,
    %c0_16 = arith.constant 0 : index
    %c0_17 = arith.constant 0 : index
    %14 = vector.load %arg4[%c0_16, %c0_17] : memref<32x128xbf16, #tpu.memory_space<vmem>>, vector<32x128xbf16>
    %c0_18 = arith.constant 0 : index
    %c0_19 = arith.constant 0 : index
    %15 = vector.load %arg12[%c0_18, %c0_19] : memref<32x128xbf16, #tpu.memory_space<vmem>>, vector<32x128xbf16>
    %16 = tpu.iota {dimensions = array<i32: 1>} : vector<8x128xi32>
    %c32_i32 = arith.constant 32 : i32
    %c0_i32 = arith.constant 0 : i32
    %17 = arith.cmpi eq, %c32_i32, %c0_i32 : i32
    %c1_i32 = arith.constant 1 : i32
    %18 = arith.select %17, %c1_i32, %c32_i32 : i32
    %19 = vector.broadcast %18 : i32 to vector<8x128xi32>
    %20 = arith.remsi %16, %19 : vector<8x128xi32>
    %c0_i32_20 = arith.constant 0 : i32
    %21 = vector.broadcast %c0_i32_20 : i32 to vector<8x128xi32>
    %22 = arith.cmpi ne, %20, %21 : vector<8x128xi32>
    %c0_i32_21 = arith.constant 0 : i32
    %23 = vector.broadcast %c0_i32_21 : i32 to vector<8x128xi32>
    %24 = arith.cmpi slt, %20, %23 : vector<8x128xi32>
    %c0_i32_22 = arith.constant 0 : i32
    %25 = arith.cmpi slt, %18, %c0_i32_22 : i32
    %26 = vector.broadcast %25 : i1 to vector<8x128xi1>
    %27 = vector.broadcast %26 : vector<8x128xi1> to vector<8x128xi1>
    %28 = arith.xori %24, %27 : vector<8x128xi1>
    %29 = arith.andi %28, %22 : vector<8x128xi1>
    %30 = vector.broadcast %18 : i32 to vector<8x128xi32>
    %31 = arith.addi %20, %30 : vector<8x128xi32>
    %32 = arith.select %29, %31, %20 : vector<8x128xi1>, vector<8x128xi32>
    %c16_i32 = arith.constant 16 : i32
    %33 = vector.broadcast %c16_i32 : i32 to vector<8x128xi32>
    %34 = arith.cmpi slt, %32, %33 : vector<8x128xi32>
    %35 = tpu.iota {dimensions = array<i32: 1>} : vector<8x128xi32>
    %c32_i32_23 = arith.constant 32 : i32
    %c0_i32_24 = arith.constant 0 : i32
    %36 = arith.cmpi eq, %c32_i32_23, %c0_i32_24 : i32
    %c1_i32_25 = arith.constant 1 : i32
    %37 = arith.select %36, %c1_i32_25, %c32_i32_23 : i32
    %38 = vector.broadcast %37 : i32 to vector<8x128xi32>
    %39 = arith.remsi %35, %38 : vector<8x128xi32>
    %c0_i32_26 = arith.constant 0 : i32
    %40 = vector.broadcast %c0_i32_26 : i32 to vector<8x128xi32>
    %41 = arith.cmpi ne, %39, %40 : vector<8x128xi32>
    %c0_i32_27 = arith.constant 0 : i32
    %42 = vector.broadcast %c0_i32_27 : i32 to vector<8x128xi32>
    %43 = arith.cmpi slt, %39, %42 : vector<8x128xi32>
    %c0_i32_28 = arith.constant 0 : i32
    %44 = arith.cmpi slt, %37, %c0_i32_28 : i32
    %45 = vector.broadcast %44 : i1 to vector<8x128xi1>
    %46 = vector.broadcast %45 : vector<8x128xi1> to vector<8x128xi1>
    %47 = arith.xori %43, %46 : vector<8x128xi1>
    %48 = arith.andi %47, %41 : vector<8x128xi1>
    %49 = vector.broadcast %37 : i32 to vector<8x128xi32>
    %50 = arith.addi %39, %49 : vector<8x128xi32>
    %51 = arith.select %48, %50, %39 : vector<8x128xi1>, vector<8x128xi32>
    %c16_i32_29 = arith.constant 16 : i32
    %52 = vector.broadcast %c16_i32_29 : i32 to vector<8x128xi32>
    %53 = arith.cmpi slt, %51, %52 : vector<8x128xi32>
    %cst_30 = arith.constant 0.000000e+00 : f32
    %54 = vector.broadcast %cst_30 : f32 to vector<8x32xf32>
    %cst_31 = arith.constant 0.000000e+00 : f32
    %55 = vector.broadcast %cst_31 : f32 to vector<8x32xf32>
    %cst_32 = arith.constant 0.000000e+00 : f32
    %56 = vector.broadcast %cst_32 : f32 to vector<8x32xf32>
    %cst_33 = arith.constant 0.000000e+00 : f32
    %57 = vector.broadcast %cst_33 : f32 to vector<8x32xf32>
    %c0_i32_34 = arith.constant 0 : i32
    %c8_i32 = arith.constant 8 : i32
    %58 = arith.muli %c0_i32_34, %c8_i32 : i32
    %59 = tpu.assume_multiple %58, 8 : i32
    %c7_i32 = arith.constant 7 : i32
    %60 = arith.subi %c7_i32, %c0_i32_34 : i32
    %c8_i32_35 = arith.constant 8 : i32
    %61 = arith.muli %60, %c8_i32_35 : i32
    %62 = tpu.assume_multiple %61, 8 : i32
    %63 = arith.index_cast %59 : i32 to index
    %c0_36 = arith.constant 0 : index
    %64 = vector.load %arg22[%63, %c0_36] : memref<64x128xf32, #tpu.memory_space<vmem>>, vector<8x128xf32>
    %65 = arith.index_cast %62 : i32 to index
    %c0_37 = arith.constant 0 : index
    %66 = vector.load %arg22[%65, %c0_37] : memref<64x128xf32, #tpu.memory_space<vmem>>, vector<8x128xf32>
    %67 = arith.select %34, %64, %66 : vector<8x128xi1>, vector<8x128xf32>
    %68 = arith.truncf %54 : vector<8x32xf32> to vector<8x32xbf16>
    %cst_38 = arith.constant dense<0.000000e+00> : vector<8x128xf32>
    %69 = tpu.matmul %68, %14, %cst_38 {dimension_numbers = #tpu.dot_dimension_numbers<[1], [0], [0], [1], [0, 0, 1, 1], [], []>} : vector<8x32xbf16>, vector<32x128xbf16>, vector<8x128xf32> -> vector<8x128xf32>
    %70 = arith.addf %67, %69 : vector<8x128xf32>
    %71 = vector.extract_strided_slice %70 {offsets = [0, 0], sizes = [8, 96], strides = [1, 1]} : vector<8x128xf32> to vector<8x96xf32>
    %72 = arith.negf %71 : vector<8x96xf32>
    %73 = math.exp %72 : vector<8x96xf32>
    %cst_39 = arith.constant 1.000000e+00 : f32
    %74 = vector.broadcast %cst_39 : f32 to vector<8x96xf32>
    %75 = arith.addf %74, %73 : vector<8x96xf32>
    %76 = arith.divf %74, %75 : vector<8x96xf32>
    %77 = vector.extract_strided_slice %70 {offsets = [0, 96], sizes = [8, 32], strides = [1, 1]} : vector<8x128xf32> to vector<8x32xf32>
    %78 = math.tanh %77 : vector<8x32xf32>
    %79 = vector.extract_strided_slice %76 {offsets = [0, 32], sizes = [8, 32], strides = [1, 1]} : vector<8x96xf32> to vector<8x32xf32>
    %80 = arith.mulf %79, %55 : vector<8x32xf32>
    %81 = vector.extract_strided_slice %76 {offsets = [0, 0], sizes = [8, 32], strides = [1, 1]} : vector<8x96xf32> to vector<8x32xf32>
    %82 = arith.mulf %81, %78 : vector<8x32xf32>
    %83 = arith.addf %80, %82 : vector<8x32xf32>
    %84 = vector.extract_strided_slice %76 {offsets = [0, 64], sizes = [8, 32], strides = [1, 1]} : vector<8x96xf32> to vector<8x32xf32>
    %85 = math.tanh %83 : vector<8x32xf32>
    %86 = arith.mulf %84, %85 : vector<8x32xf32>
    %87 = vector.extract_strided_slice %86 {offsets = [0, 0], sizes = [8, 16], strides = [1, 1]} : vector<8x32xf32> to vector<8x16xf32>
    %88 = arith.index_cast %59 : i32 to index
    %c0_40 = arith.constant 0 : index
    %89 = vector.load %arg23[%88, %c0_40] : memref<64x16xf32, #tpu.memory_space<vmem>>, vector<8x16xf32>
    tpu.vector_store %arg23[%88, %c0_40], %87 {strides = array<i32>} : memref<64x16xf32, #tpu.memory_space<vmem>>, vector<8x16xf32>,
    %90 = vector.extract_strided_slice %86 {offsets = [0, 16], sizes = [8, 16], strides = [1, 1]} : vector<8x32xf32> to vector<8x16xf32>
    %91 = arith.index_cast %62 : i32 to index
    %c0_41 = arith.constant 0 : index
    %92 = vector.load %arg24[%91, %c0_41] : memref<64x16xf32, #tpu.memory_space<vmem>>, vector<8x16xf32>
    tpu.vector_store %arg24[%91, %c0_41], %90 {strides = array<i32>} : memref<64x16xf32, #tpu.memory_space<vmem>>, vector<8x16xf32>,
    %c8_i32_42 = arith.constant 8 : i32
    %93 = arith.muli %c0_i32_34, %c8_i32_42 : i32
    %94 = tpu.assume_multiple %93, 8 : i32
    %c5_i32 = arith.constant 5 : i32
    %95 = arith.subi %c5_i32, %c0_i32_34 : i32
    %c8_i32_43 = arith.constant 8 : i32
    %96 = arith.muli %95, %c8_i32_43 : i32
    %97 = tpu.assume_multiple %96, 8 : i32
    %98 = arith.index_cast %94 : i32 to index
    %c0_44 = arith.constant 0 : index
    %99 = vector.load %arg25[%98, %c0_44] : memref<48x128xf32, #tpu.memory_space<vmem>>, vector<8x128xf32>
    %100 = arith.index_cast %97 : i32 to index
    %c0_45 = arith.constant 0 : index
    %101 = vector.load %arg25[%100, %c0_45] : memref<48x128xf32, #tpu.memory_space<vmem>>, vector<8x128xf32>
    %102 = arith.select %53, %99, %101 : vector<8x128xi1>, vector<8x128xf32>
    %103 = arith.truncf %56 : vector<8x32xf32> to vector<8x32xbf16>
    %cst_46 = arith.constant dense<0.000000e+00> : vector<8x128xf32>
    %104 = tpu.matmul %103, %15, %cst_46 {dimension_numbers = #tpu.dot_dimension_numbers<[1], [0], [0], [1], [0, 0, 1, 1], [], []>} : vector<8x32xbf16>, vector<32x128xbf16>, vector<8x128xf32> -> vector<8x128xf32>
    %105 = arith.addf %102, %104 : vector<8x128xf32>
    %106 = vector.extract_strided_slice %105 {offsets = [0, 0], sizes = [8, 96], strides = [1, 1]} : vector<8x128xf32> to vector<8x96xf32>
    %107 = arith.negf %106 : vector<8x96xf32>
    %108 = math.exp %107 : vector<8x96xf32>
    %cst_47 = arith.constant 1.000000e+00 : f32
    %109 = vector.broadcast %cst_47 : f32 to vector<8x96xf32>
    %110 = arith.addf %109, %108 : vector<8x96xf32>
    %111 = arith.divf %109, %110 : vector<8x96xf32>
    %112 = vector.extract_strided_slice %105 {offsets = [0, 96], sizes = [8, 32], strides = [1, 1]} : vector<8x128xf32> to vector<8x32xf32>
    %113 = math.tanh %112 : vector<8x32xf32>
    %114 = vector.extract_strided_slice %111 {offsets = [0, 32], sizes = [8, 32], strides = [1, 1]} : vector<8x96xf32> to vector<8x32xf32>
    %115 = arith.mulf %114, %57 : vector<8x32xf32>
    %116 = vector.extract_strided_slice %111 {offsets = [0, 0], sizes = [8, 32], strides = [1, 1]} : vector<8x96xf32> to vector<8x32xf32>
    %117 = arith.mulf %116, %113 : vector<8x32xf32>
    %118 = arith.addf %115, %117 : vector<8x32xf32>
    %119 = vector.extract_strided_slice %111 {offsets = [0, 64], sizes = [8, 32], strides = [1, 1]} : vector<8x96xf32> to vector<8x32xf32>
    %120 = math.tanh %118 : vector<8x32xf32>
    %121 = arith.mulf %119, %120 : vector<8x32xf32>
    %122 = vector.extract_strided_slice %121 {offsets = [0, 0], sizes = [8, 16], strides = [1, 1]} : vector<8x32xf32> to vector<8x16xf32>
    %123 = arith.index_cast %94 : i32 to index
    %c0_48 = arith.constant 0 : index
    %124 = vector.load %arg26[%123, %c0_48] : memref<48x16xf32, #tpu.memory_space<vmem>>, vector<8x16xf32>
    tpu.vector_store %arg26[%123, %c0_48], %122 {strides = array<i32>} : memref<48x16xf32, #tpu.memory_space<vmem>>, vector<8x16xf32>,
    %125 = vector.extract_strided_slice %121 {offsets = [0, 16], sizes = [8, 16], strides = [1, 1]} : vector<8x32xf32> to vector<8x16xf32>
    %126 = arith.index_cast %97 : i32 to index
    %c0_49 = arith.constant 0 : index
    %127 = vector.load %arg27[%126, %c0_49] : memref<48x16xf32, #tpu.memory_space<vmem>>, vector<8x16xf32>
    tpu.vector_store %arg27[%126, %c0_49], %125 {strides = array<i32>} : memref<48x16xf32, #tpu.memory_space<vmem>>, vector<8x16xf32>,
    %c1_i32_50 = arith.constant 1 : i32
    %c8_i32_51 = arith.constant 8 : i32
    %128 = arith.muli %c1_i32_50, %c8_i32_51 : i32
    %129 = tpu.assume_multiple %128, 8 : i32
    %c7_i32_52 = arith.constant 7 : i32
    %130 = arith.subi %c7_i32_52, %c1_i32_50 : i32
    %c8_i32_53 = arith.constant 8 : i32
    %131 = arith.muli %130, %c8_i32_53 : i32
    %132 = tpu.assume_multiple %131, 8 : i32
    %133 = arith.index_cast %129 : i32 to index
    %c0_54 = arith.constant 0 : index
    %134 = vector.load %arg22[%133, %c0_54] : memref<64x128xf32, #tpu.memory_space<vmem>>, vector<8x128xf32>
    %135 = arith.index_cast %132 : i32 to index
    %c0_55 = arith.constant 0 : index
    %136 = vector.load %arg22[%135, %c0_55] : memref<64x128xf32, #tpu.memory_space<vmem>>, vector<8x128xf32>
    %137 = arith.select %34, %134, %136 : vector<8x128xi1>, vector<8x128xf32>
    %138 = arith.truncf %86 : vector<8x32xf32> to vector<8x32xbf16>
    %cst_56 = arith.constant dense<0.000000e+00> : vector<8x128xf32>
    %139 = tpu.matmul %138, %14, %cst_56 {dimension_numbers = #tpu.dot_dimension_numbers<[1], [0], [0], [1], [0, 0, 1, 1], [], []>} : vector<8x32xbf16>, vector<32x128xbf16>, vector<8x128xf32> -> vector<8x128xf32>
    %140 = arith.addf %137, %139 : vector<8x128xf32>
    %141 = vector.extract_strided_slice %140 {offsets = [0, 0], sizes = [8, 96], strides = [1, 1]} : vector<8x128xf32> to vector<8x96xf32>
    %142 = arith.negf %141 : vector<8x96xf32>
    %143 = math.exp %142 : vector<8x96xf32>
    %cst_57 = arith.constant 1.000000e+00 : f32
    %144 = vector.broadcast %cst_57 : f32 to vector<8x96xf32>
    %145 = arith.addf %144, %143 : vector<8x96xf32>
    %146 = arith.divf %144, %145 : vector<8x96xf32>
    %147 = vector.extract_strided_slice %140 {offsets = [0, 96], sizes = [8, 32], strides = [1, 1]} : vector<8x128xf32> to vector<8x32xf32>
    %148 = math.tanh %147 : vector<8x32xf32>
    %149 = vector.extract_strided_slice %146 {offsets = [0, 32], sizes = [8, 32], strides = [1, 1]} : vector<8x96xf32> to vector<8x32xf32>
    %150 = arith.mulf %149, %83 : vector<8x32xf32>
    %151 = vector.extract_strided_slice %146 {offsets = [0, 0], sizes = [8, 32], strides = [1, 1]} : vector<8x96xf32> to vector<8x32xf32>
    %152 = arith.mulf %151, %148 : vector<8x32xf32>
    %153 = arith.addf %150, %152 : vector<8x32xf32>
    %154 = vector.extract_strided_slice %146 {offsets = [0, 64], sizes = [8, 32], strides = [1, 1]} : vector<8x96xf32> to vector<8x32xf32>
    %155 = math.tanh %153 : vector<8x32xf32>
    %156 = arith.mulf %154, %155 : vector<8x32xf32>
    %157 = vector.extract_strided_slice %156 {offsets = [0, 0], sizes = [8, 16], strides = [1, 1]} : vector<8x32xf32> to vector<8x16xf32>
    %158 = arith.index_cast %129 : i32 to index
    %c0_58 = arith.constant 0 : index
    %159 = vector.load %arg23[%158, %c0_58] : memref<64x16xf32, #tpu.memory_space<vmem>>, vector<8x16xf32>
    tpu.vector_store %arg23[%158, %c0_58], %157 {strides = array<i32>} : memref<64x16xf32, #tpu.memory_space<vmem>>, vector<8x16xf32>,
    %160 = vector.extract_strided_slice %156 {offsets = [0, 16], sizes = [8, 16], strides = [1, 1]} : vector<8x32xf32> to vector<8x16xf32>
    %161 = arith.index_cast %132 : i32 to index
    %c0_59 = arith.constant 0 : index
    %162 = vector.load %arg24[%161, %c0_59] : memref<64x16xf32, #tpu.memory_space<vmem>>, vector<8x16xf32>
    tpu.vector_store %arg24[%161, %c0_59], %160 {strides = array<i32>} : memref<64x16xf32, #tpu.memory_space<vmem>>, vector<8x16xf32>,
    %c8_i32_60 = arith.constant 8 : i32
    %163 = arith.muli %c1_i32_50, %c8_i32_60 : i32
    %164 = tpu.assume_multiple %163, 8 : i32
    %c5_i32_61 = arith.constant 5 : i32
    %165 = arith.subi %c5_i32_61, %c1_i32_50 : i32
    %c8_i32_62 = arith.constant 8 : i32
    %166 = arith.muli %165, %c8_i32_62 : i32
    %167 = tpu.assume_multiple %166, 8 : i32
    %168 = arith.index_cast %164 : i32 to index
    %c0_63 = arith.constant 0 : index
    %169 = vector.load %arg25[%168, %c0_63] : memref<48x128xf32, #tpu.memory_space<vmem>>, vector<8x128xf32>
    %170 = arith.index_cast %167 : i32 to index
    %c0_64 = arith.constant 0 : index
    %171 = vector.load %arg25[%170, %c0_64] : memref<48x128xf32, #tpu.memory_space<vmem>>, vector<8x128xf32>
    %172 = arith.select %53, %169, %171 : vector<8x128xi1>, vector<8x128xf32>
    %173 = arith.truncf %121 : vector<8x32xf32> to vector<8x32xbf16>
    %cst_65 = arith.constant dense<0.000000e+00> : vector<8x128xf32>
    %174 = tpu.matmul %173, %15, %cst_65 {dimension_numbers = #tpu.dot_dimension_numbers<[1], [0], [0], [1], [0, 0, 1, 1], [], []>} : vector<8x32xbf16>, vector<32x128xbf16>, vector<8x128xf32> -> vector<8x128xf32>
    %175 = arith.addf %172, %174 : vector<8x128xf32>
    %176 = vector.extract_strided_slice %175 {offsets = [0, 0], sizes = [8, 96], strides = [1, 1]} : vector<8x128xf32> to vector<8x96xf32>
    %177 = arith.negf %176 : vector<8x96xf32>
    %178 = math.exp %177 : vector<8x96xf32>
    %cst_66 = arith.constant 1.000000e+00 : f32
    %179 = vector.broadcast %cst_66 : f32 to vector<8x96xf32>
    %180 = arith.addf %179, %178 : vector<8x96xf32>
    %181 = arith.divf %179, %180 : vector<8x96xf32>
    %182 = vector.extract_strided_slice %175 {offsets = [0, 96], sizes = [8, 32], strides = [1, 1]} : vector<8x128xf32> to vector<8x32xf32>
    %183 = math.tanh %182 : vector<8x32xf32>
    %184 = vector.extract_strided_slice %181 {offsets = [0, 32], sizes = [8, 32], strides = [1, 1]} : vector<8x96xf32> to vector<8x32xf32>
    %185 = arith.mulf %184, %118 : vector<8x32xf32>
    %186 = vector.extract_strided_slice %181 {offsets = [0, 0], sizes = [8, 32], strides = [1, 1]} : vector<8x96xf32> to vector<8x32xf32>
    %187 = arith.mulf %186, %183 : vector<8x32xf32>
    %188 = arith.addf %185, %187 : vector<8x32xf32>
    %189 = vector.extract_strided_slice %181 {offsets = [0, 64], sizes = [8, 32], strides = [1, 1]} : vector<8x96xf32> to vector<8x32xf32>
    %190 = math.tanh %188 : vector<8x32xf32>
    %191 = arith.mulf %189, %190 : vector<8x32xf32>
    %192 = vector.extract_strided_slice %191 {offsets = [0, 0], sizes = [8, 16], strides = [1, 1]} : vector<8x32xf32> to vector<8x16xf32>
    %193 = arith.index_cast %164 : i32 to index
    %c0_67 = arith.constant 0 : index
    %194 = vector.load %arg26[%193, %c0_67] : memref<48x16xf32, #tpu.memory_space<vmem>>, vector<8x16xf32>
    tpu.vector_store %arg26[%193, %c0_67], %192 {strides = array<i32>} : memref<48x16xf32, #tpu.memory_space<vmem>>, vector<8x16xf32>,
    %195 = vector.extract_strided_slice %191 {offsets = [0, 16], sizes = [8, 16], strides = [1, 1]} : vector<8x32xf32> to vector<8x16xf32>
    %196 = arith.index_cast %167 : i32 to index
    %c0_68 = arith.constant 0 : index
    %197 = vector.load %arg27[%196, %c0_68] : memref<48x16xf32, #tpu.memory_space<vmem>>, vector<8x16xf32>
    tpu.vector_store %arg27[%196, %c0_68], %195 {strides = array<i32>} : memref<48x16xf32, #tpu.memory_space<vmem>>, vector<8x16xf32>,
    %c2_i32 = arith.constant 2 : i32
    %c8_i32_69 = arith.constant 8 : i32
    %198 = arith.muli %c2_i32, %c8_i32_69 : i32
    %199 = tpu.assume_multiple %198, 8 : i32
    %c7_i32_70 = arith.constant 7 : i32
    %200 = arith.subi %c7_i32_70, %c2_i32 : i32
    %c8_i32_71 = arith.constant 8 : i32
    %201 = arith.muli %200, %c8_i32_71 : i32
    %202 = tpu.assume_multiple %201, 8 : i32
    %203 = arith.index_cast %199 : i32 to index
    %c0_72 = arith.constant 0 : index
    %204 = vector.load %arg22[%203, %c0_72] : memref<64x128xf32, #tpu.memory_space<vmem>>, vector<8x128xf32>
    %205 = arith.index_cast %202 : i32 to index
    %c0_73 = arith.constant 0 : index
    %206 = vector.load %arg22[%205, %c0_73] : memref<64x128xf32, #tpu.memory_space<vmem>>, vector<8x128xf32>
    %207 = arith.select %34, %204, %206 : vector<8x128xi1>, vector<8x128xf32>
    %208 = arith.truncf %156 : vector<8x32xf32> to vector<8x32xbf16>
    %cst_74 = arith.constant dense<0.000000e+00> : vector<8x128xf32>
    %209 = tpu.matmul %208, %14, %cst_74 {dimension_numbers = #tpu.dot_dimension_numbers<[1], [0], [0], [1], [0, 0, 1, 1], [], []>} : vector<8x32xbf16>, vector<32x128xbf16>, vector<8x128xf32> -> vector<8x128xf32>
    %210 = arith.addf %207, %209 : vector<8x128xf32>
    %211 = vector.extract_strided_slice %210 {offsets = [0, 0], sizes = [8, 96], strides = [1, 1]} : vector<8x128xf32> to vector<8x96xf32>
    %212 = arith.negf %211 : vector<8x96xf32>
    %213 = math.exp %212 : vector<8x96xf32>
    %cst_75 = arith.constant 1.000000e+00 : f32
    %214 = vector.broadcast %cst_75 : f32 to vector<8x96xf32>
    %215 = arith.addf %214, %213 : vector<8x96xf32>
    %216 = arith.divf %214, %215 : vector<8x96xf32>
    %217 = vector.extract_strided_slice %210 {offsets = [0, 96], sizes = [8, 32], strides = [1, 1]} : vector<8x128xf32> to vector<8x32xf32>
    %218 = math.tanh %217 : vector<8x32xf32>
    %219 = vector.extract_strided_slice %216 {offsets = [0, 32], sizes = [8, 32], strides = [1, 1]} : vector<8x96xf32> to vector<8x32xf32>
    %220 = arith.mulf %219, %153 : vector<8x32xf32>
    %221 = vector.extract_strided_slice %216 {offsets = [0, 0], sizes = [8, 32], strides = [1, 1]} : vector<8x96xf32> to vector<8x32xf32>
    %222 = arith.mulf %221, %218 : vector<8x32xf32>
    %223 = arith.addf %220, %222 : vector<8x32xf32>
    %224 = vector.extract_strided_slice %216 {offsets = [0, 64], sizes = [8, 32], strides = [1, 1]} : vector<8x96xf32> to vector<8x32xf32>
    %225 = math.tanh %223 : vector<8x32xf32>
    %226 = arith.mulf %224, %225 : vector<8x32xf32>
    %227 = vector.extract_strided_slice %226 {offsets = [0, 0], sizes = [8, 16], strides = [1, 1]} : vector<8x32xf32> to vector<8x16xf32>
    %228 = arith.index_cast %199 : i32 to index
    %c0_76 = arith.constant 0 : index
    %229 = vector.load %arg23[%228, %c0_76] : memref<64x16xf32, #tpu.memory_space<vmem>>, vector<8x16xf32>
    tpu.vector_store %arg23[%228, %c0_76], %227 {strides = array<i32>} : memref<64x16xf32, #tpu.memory_space<vmem>>, vector<8x16xf32>,
    %230 = vector.extract_strided_slice %226 {offsets = [0, 16], sizes = [8, 16], strides = [1, 1]} : vector<8x32xf32> to vector<8x16xf32>
    %231 = arith.index_cast %202 : i32 to index
    %c0_77 = arith.constant 0 : index
    %232 = vector.load %arg24[%231, %c0_77] : memref<64x16xf32, #tpu.memory_space<vmem>>, vector<8x16xf32>
    tpu.vector_store %arg24[%231, %c0_77], %230 {strides = array<i32>} : memref<64x16xf32, #tpu.memory_space<vmem>>, vector<8x16xf32>,
    %c8_i32_78 = arith.constant 8 : i32
    %233 = arith.muli %c2_i32, %c8_i32_78 : i32
    %234 = tpu.assume_multiple %233, 8 : i32
    %c5_i32_79 = arith.constant 5 : i32
    %235 = arith.subi %c5_i32_79, %c2_i32 : i32
    %c8_i32_80 = arith.constant 8 : i32
    %236 = arith.muli %235, %c8_i32_80 : i32
    %237 = tpu.assume_multiple %236, 8 : i32
    %238 = arith.index_cast %234 : i32 to index
    %c0_81 = arith.constant 0 : index
    %239 = vector.load %arg25[%238, %c0_81] : memref<48x128xf32, #tpu.memory_space<vmem>>, vector<8x128xf32>
    %240 = arith.index_cast %237 : i32 to index
    %c0_82 = arith.constant 0 : index
    %241 = vector.load %arg25[%240, %c0_82] : memref<48x128xf32, #tpu.memory_space<vmem>>, vector<8x128xf32>
    %242 = arith.select %53, %239, %241 : vector<8x128xi1>, vector<8x128xf32>
    %243 = arith.truncf %191 : vector<8x32xf32> to vector<8x32xbf16>
    %cst_83 = arith.constant dense<0.000000e+00> : vector<8x128xf32>
    %244 = tpu.matmul %243, %15, %cst_83 {dimension_numbers = #tpu.dot_dimension_numbers<[1], [0], [0], [1], [0, 0, 1, 1], [], []>} : vector<8x32xbf16>, vector<32x128xbf16>, vector<8x128xf32> -> vector<8x128xf32>
    %245 = arith.addf %242, %244 : vector<8x128xf32>
    %246 = vector.extract_strided_slice %245 {offsets = [0, 0], sizes = [8, 96], strides = [1, 1]} : vector<8x128xf32> to vector<8x96xf32>
    %247 = arith.negf %246 : vector<8x96xf32>
    %248 = math.exp %247 : vector<8x96xf32>
    %cst_84 = arith.constant 1.000000e+00 : f32
    %249 = vector.broadcast %cst_84 : f32 to vector<8x96xf32>
    %250 = arith.addf %249, %248 : vector<8x96xf32>
    %251 = arith.divf %249, %250 : vector<8x96xf32>
    %252 = vector.extract_strided_slice %245 {offsets = [0, 96], sizes = [8, 32], strides = [1, 1]} : vector<8x128xf32> to vector<8x32xf32>
    %253 = math.tanh %252 : vector<8x32xf32>
    %254 = vector.extract_strided_slice %251 {offsets = [0, 32], sizes = [8, 32], strides = [1, 1]} : vector<8x96xf32> to vector<8x32xf32>
    %255 = arith.mulf %254, %188 : vector<8x32xf32>
    %256 = vector.extract_strided_slice %251 {offsets = [0, 0], sizes = [8, 32], strides = [1, 1]} : vector<8x96xf32> to vector<8x32xf32>
    %257 = arith.mulf %256, %253 : vector<8x32xf32>
    %258 = arith.addf %255, %257 : vector<8x32xf32>
    %259 = vector.extract_strided_slice %251 {offsets = [0, 64], sizes = [8, 32], strides = [1, 1]} : vector<8x96xf32> to vector<8x32xf32>
    %260 = math.tanh %258 : vector<8x32xf32>
    %261 = arith.mulf %259, %260 : vector<8x32xf32>
    %262 = vector.extract_strided_slice %261 {offsets = [0, 0], sizes = [8, 16], strides = [1, 1]} : vector<8x32xf32> to vector<8x16xf32>
    %263 = arith.index_cast %234 : i32 to index
    %c0_85 = arith.constant 0 : index
    %264 = vector.load %arg26[%263, %c0_85] : memref<48x16xf32, #tpu.memory_space<vmem>>, vector<8x16xf32>
    tpu.vector_store %arg26[%263, %c0_85], %262 {strides = array<i32>} : memref<48x16xf32, #tpu.memory_space<vmem>>, vector<8x16xf32>,
    %265 = vector.extract_strided_slice %261 {offsets = [0, 16], sizes = [8, 16], strides = [1, 1]} : vector<8x32xf32> to vector<8x16xf32>
    %266 = arith.index_cast %237 : i32 to index
    %c0_86 = arith.constant 0 : index
    %267 = vector.load %arg27[%266, %c0_86] : memref<48x16xf32, #tpu.memory_space<vmem>>, vector<8x16xf32>
    tpu.vector_store %arg27[%266, %c0_86], %265 {strides = array<i32>} : memref<48x16xf32, #tpu.memory_space<vmem>>, vector<8x16xf32>,
    %c3_i32 = arith.constant 3 : i32
    %c8_i32_87 = arith.constant 8 : i32
    %268 = arith.muli %c3_i32, %c8_i32_87 : i32
    %269 = tpu.assume_multiple %268, 8 : i32
    %c7_i32_88 = arith.constant 7 : i32
    %270 = arith.subi %c7_i32_88, %c3_i32 : i32
    %c8_i32_89 = arith.constant 8 : i32
    %271 = arith.muli %270, %c8_i32_89 : i32
    %272 = tpu.assume_multiple %271, 8 : i32
    %273 = arith.index_cast %269 : i32 to index
    %c0_90 = arith.constant 0 : index
    %274 = vector.load %arg22[%273, %c0_90] : memref<64x128xf32, #tpu.memory_space<vmem>>, vector<8x128xf32>
    %275 = arith.index_cast %272 : i32 to index
    %c0_91 = arith.constant 0 : index
    %276 = vector.load %arg22[%275, %c0_91] : memref<64x128xf32, #tpu.memory_space<vmem>>, vector<8x128xf32>
    %277 = arith.select %34, %274, %276 : vector<8x128xi1>, vector<8x128xf32>
    %278 = arith.truncf %226 : vector<8x32xf32> to vector<8x32xbf16>
    %cst_92 = arith.constant dense<0.000000e+00> : vector<8x128xf32>
    %279 = tpu.matmul %278, %14, %cst_92 {dimension_numbers = #tpu.dot_dimension_numbers<[1], [0], [0], [1], [0, 0, 1, 1], [], []>} : vector<8x32xbf16>, vector<32x128xbf16>, vector<8x128xf32> -> vector<8x128xf32>
    %280 = arith.addf %277, %279 : vector<8x128xf32>
    %281 = vector.extract_strided_slice %280 {offsets = [0, 0], sizes = [8, 96], strides = [1, 1]} : vector<8x128xf32> to vector<8x96xf32>
    %282 = arith.negf %281 : vector<8x96xf32>
    %283 = math.exp %282 : vector<8x96xf32>
    %cst_93 = arith.constant 1.000000e+00 : f32
    %284 = vector.broadcast %cst_93 : f32 to vector<8x96xf32>
    %285 = arith.addf %284, %283 : vector<8x96xf32>
    %286 = arith.divf %284, %285 : vector<8x96xf32>
    %287 = vector.extract_strided_slice %280 {offsets = [0, 96], sizes = [8, 32], strides = [1, 1]} : vector<8x128xf32> to vector<8x32xf32>
    %288 = math.tanh %287 : vector<8x32xf32>
    %289 = vector.extract_strided_slice %286 {offsets = [0, 32], sizes = [8, 32], strides = [1, 1]} : vector<8x96xf32> to vector<8x32xf32>
    %290 = arith.mulf %289, %223 : vector<8x32xf32>
    %291 = vector.extract_strided_slice %286 {offsets = [0, 0], sizes = [8, 32], strides = [1, 1]} : vector<8x96xf32> to vector<8x32xf32>
    %292 = arith.mulf %291, %288 : vector<8x32xf32>
    %293 = arith.addf %290, %292 : vector<8x32xf32>
    %294 = vector.extract_strided_slice %286 {offsets = [0, 64], sizes = [8, 32], strides = [1, 1]} : vector<8x96xf32> to vector<8x32xf32>
    %295 = math.tanh %293 : vector<8x32xf32>
    %296 = arith.mulf %294, %295 : vector<8x32xf32>
    %297 = vector.extract_strided_slice %296 {offsets = [0, 0], sizes = [8, 16], strides = [1, 1]} : vector<8x32xf32> to vector<8x16xf32>
    %298 = arith.index_cast %269 : i32 to index
    %c0_94 = arith.constant 0 : index
    %299 = vector.load %arg23[%298, %c0_94] : memref<64x16xf32, #tpu.memory_space<vmem>>, vector<8x16xf32>
    tpu.vector_store %arg23[%298, %c0_94], %297 {strides = array<i32>} : memref<64x16xf32, #tpu.memory_space<vmem>>, vector<8x16xf32>,
    %300 = vector.extract_strided_slice %296 {offsets = [0, 16], sizes = [8, 16], strides = [1, 1]} : vector<8x32xf32> to vector<8x16xf32>
    %301 = arith.index_cast %272 : i32 to index
    %c0_95 = arith.constant 0 : index
    %302 = vector.load %arg24[%301, %c0_95] : memref<64x16xf32, #tpu.memory_space<vmem>>, vector<8x16xf32>
    tpu.vector_store %arg24[%301, %c0_95], %300 {strides = array<i32>} : memref<64x16xf32, #tpu.memory_space<vmem>>, vector<8x16xf32>,
    %c8_i32_96 = arith.constant 8 : i32
    %303 = arith.muli %c3_i32, %c8_i32_96 : i32
    %304 = tpu.assume_multiple %303, 8 : i32
    %c5_i32_97 = arith.constant 5 : i32
    %305 = arith.subi %c5_i32_97, %c3_i32 : i32
    %c8_i32_98 = arith.constant 8 : i32
    %306 = arith.muli %305, %c8_i32_98 : i32
    %307 = tpu.assume_multiple %306, 8 : i32
    %308 = arith.index_cast %304 : i32 to index
    %c0_99 = arith.constant 0 : index
    %309 = vector.load %arg25[%308, %c0_99] : memref<48x128xf32, #tpu.memory_space<vmem>>, vector<8x128xf32>
    %310 = arith.index_cast %307 : i32 to index
    %c0_100 = arith.constant 0 : index
    %311 = vector.load %arg25[%310, %c0_100] : memref<48x128xf32, #tpu.memory_space<vmem>>, vector<8x128xf32>
    %312 = arith.select %53, %309, %311 : vector<8x128xi1>, vector<8x128xf32>
    %313 = arith.truncf %261 : vector<8x32xf32> to vector<8x32xbf16>
    %cst_101 = arith.constant dense<0.000000e+00> : vector<8x128xf32>
    %314 = tpu.matmul %313, %15, %cst_101 {dimension_numbers = #tpu.dot_dimension_numbers<[1], [0], [0], [1], [0, 0, 1, 1], [], []>} : vector<8x32xbf16>, vector<32x128xbf16>, vector<8x128xf32> -> vector<8x128xf32>
    %315 = arith.addf %312, %314 : vector<8x128xf32>
    %316 = vector.extract_strided_slice %315 {offsets = [0, 0], sizes = [8, 96], strides = [1, 1]} : vector<8x128xf32> to vector<8x96xf32>
    %317 = arith.negf %316 : vector<8x96xf32>
    %318 = math.exp %317 : vector<8x96xf32>
    %cst_102 = arith.constant 1.000000e+00 : f32
    %319 = vector.broadcast %cst_102 : f32 to vector<8x96xf32>
    %320 = arith.addf %319, %318 : vector<8x96xf32>
    %321 = arith.divf %319, %320 : vector<8x96xf32>
    %322 = vector.extract_strided_slice %315 {offsets = [0, 96], sizes = [8, 32], strides = [1, 1]} : vector<8x128xf32> to vector<8x32xf32>
    %323 = math.tanh %322 : vector<8x32xf32>
    %324 = vector.extract_strided_slice %321 {offsets = [0, 32], sizes = [8, 32], strides = [1, 1]} : vector<8x96xf32> to vector<8x32xf32>
    %325 = arith.mulf %324, %258 : vector<8x32xf32>
    %326 = vector.extract_strided_slice %321 {offsets = [0, 0], sizes = [8, 32], strides = [1, 1]} : vector<8x96xf32> to vector<8x32xf32>
    %327 = arith.mulf %326, %323 : vector<8x32xf32>
    %328 = arith.addf %325, %327 : vector<8x32xf32>
    %329 = vector.extract_strided_slice %321 {offsets = [0, 64], sizes = [8, 32], strides = [1, 1]} : vector<8x96xf32> to vector<8x32xf32>
    %330 = math.tanh %328 : vector<8x32xf32>
    %331 = arith.mulf %329, %330 : vector<8x32xf32>
    %332 = vector.extract_strided_slice %331 {offsets = [0, 0], sizes = [8, 16], strides = [1, 1]} : vector<8x32xf32> to vector<8x16xf32>
    %333 = arith.index_cast %304 : i32 to index
    %c0_103 = arith.constant 0 : index
    %334 = vector.load %arg26[%333, %c0_103] : memref<48x16xf32, #tpu.memory_space<vmem>>, vector<8x16xf32>
    tpu.vector_store %arg26[%333, %c0_103], %332 {strides = array<i32>} : memref<48x16xf32, #tpu.memory_space<vmem>>, vector<8x16xf32>,
    %335 = vector.extract_strided_slice %331 {offsets = [0, 16], sizes = [8, 16], strides = [1, 1]} : vector<8x32xf32> to vector<8x16xf32>
    %336 = arith.index_cast %307 : i32 to index
    %c0_104 = arith.constant 0 : index
    %337 = vector.load %arg27[%336, %c0_104] : memref<48x16xf32, #tpu.memory_space<vmem>>, vector<8x16xf32>
    tpu.vector_store %arg27[%336, %c0_104], %335 {strides = array<i32>} : memref<48x16xf32, #tpu.memory_space<vmem>>, vector<8x16xf32>,
    %c4_i32 = arith.constant 4 : i32
    %c8_i32_105 = arith.constant 8 : i32
    %338 = arith.muli %c4_i32, %c8_i32_105 : i32
    %339 = tpu.assume_multiple %338, 8 : i32
    %c7_i32_106 = arith.constant 7 : i32
    %340 = arith.subi %c7_i32_106, %c4_i32 : i32
    %c8_i32_107 = arith.constant 8 : i32
    %341 = arith.muli %340, %c8_i32_107 : i32
    %342 = tpu.assume_multiple %341, 8 : i32
    %343 = arith.index_cast %339 : i32 to index
    %c0_108 = arith.constant 0 : index
    %344 = vector.load %arg22[%343, %c0_108] : memref<64x128xf32, #tpu.memory_space<vmem>>, vector<8x128xf32>
    %345 = arith.index_cast %342 : i32 to index
    %c0_109 = arith.constant 0 : index
    %346 = vector.load %arg22[%345, %c0_109] : memref<64x128xf32, #tpu.memory_space<vmem>>, vector<8x128xf32>
    %347 = arith.select %34, %344, %346 : vector<8x128xi1>, vector<8x128xf32>
    %348 = arith.truncf %296 : vector<8x32xf32> to vector<8x32xbf16>
    %cst_110 = arith.constant dense<0.000000e+00> : vector<8x128xf32>
    %349 = tpu.matmul %348, %14, %cst_110 {dimension_numbers = #tpu.dot_dimension_numbers<[1], [0], [0], [1], [0, 0, 1, 1], [], []>} : vector<8x32xbf16>, vector<32x128xbf16>, vector<8x128xf32> -> vector<8x128xf32>
    %350 = arith.addf %347, %349 : vector<8x128xf32>
    %351 = vector.extract_strided_slice %350 {offsets = [0, 0], sizes = [8, 96], strides = [1, 1]} : vector<8x128xf32> to vector<8x96xf32>
    %352 = arith.negf %351 : vector<8x96xf32>
    %353 = math.exp %352 : vector<8x96xf32>
    %cst_111 = arith.constant 1.000000e+00 : f32
    %354 = vector.broadcast %cst_111 : f32 to vector<8x96xf32>
    %355 = arith.addf %354, %353 : vector<8x96xf32>
    %356 = arith.divf %354, %355 : vector<8x96xf32>
    %357 = vector.extract_strided_slice %350 {offsets = [0, 96], sizes = [8, 32], strides = [1, 1]} : vector<8x128xf32> to vector<8x32xf32>
    %358 = math.tanh %357 : vector<8x32xf32>
    %359 = vector.extract_strided_slice %356 {offsets = [0, 32], sizes = [8, 32], strides = [1, 1]} : vector<8x96xf32> to vector<8x32xf32>
    %360 = arith.mulf %359, %293 : vector<8x32xf32>
    %361 = vector.extract_strided_slice %356 {offsets = [0, 0], sizes = [8, 32], strides = [1, 1]} : vector<8x96xf32> to vector<8x32xf32>
    %362 = arith.mulf %361, %358 : vector<8x32xf32>
    %363 = arith.addf %360, %362 : vector<8x32xf32>
    %364 = vector.extract_strided_slice %356 {offsets = [0, 64], sizes = [8, 32], strides = [1, 1]} : vector<8x96xf32> to vector<8x32xf32>
    %365 = math.tanh %363 : vector<8x32xf32>
    %366 = arith.mulf %364, %365 : vector<8x32xf32>
    %367 = vector.extract_strided_slice %366 {offsets = [0, 0], sizes = [8, 16], strides = [1, 1]} : vector<8x32xf32> to vector<8x16xf32>
    %368 = arith.index_cast %339 : i32 to index
    %c0_112 = arith.constant 0 : index
    %369 = vector.load %arg23[%368, %c0_112] : memref<64x16xf32, #tpu.memory_space<vmem>>, vector<8x16xf32>
    tpu.vector_store %arg23[%368, %c0_112], %367 {strides = array<i32>} : memref<64x16xf32, #tpu.memory_space<vmem>>, vector<8x16xf32>,
    %370 = vector.extract_strided_slice %366 {offsets = [0, 16], sizes = [8, 16], strides = [1, 1]} : vector<8x32xf32> to vector<8x16xf32>
    %371 = arith.index_cast %342 : i32 to index
    %c0_113 = arith.constant 0 : index
    %372 = vector.load %arg24[%371, %c0_113] : memref<64x16xf32, #tpu.memory_space<vmem>>, vector<8x16xf32>
    tpu.vector_store %arg24[%371, %c0_113], %370 {strides = array<i32>} : memref<64x16xf32, #tpu.memory_space<vmem>>, vector<8x16xf32>,
    %c8_i32_114 = arith.constant 8 : i32
    %373 = arith.muli %c4_i32, %c8_i32_114 : i32
    %374 = tpu.assume_multiple %373, 8 : i32
    %c5_i32_115 = arith.constant 5 : i32
    %375 = arith.subi %c5_i32_115, %c4_i32 : i32
    %c8_i32_116 = arith.constant 8 : i32
    %376 = arith.muli %375, %c8_i32_116 : i32
    %377 = tpu.assume_multiple %376, 8 : i32
    %378 = arith.index_cast %374 : i32 to index
    %c0_117 = arith.constant 0 : index
    %379 = vector.load %arg25[%378, %c0_117] : memref<48x128xf32, #tpu.memory_space<vmem>>, vector<8x128xf32>
    %380 = arith.index_cast %377 : i32 to index
    %c0_118 = arith.constant 0 : index
    %381 = vector.load %arg25[%380, %c0_118] : memref<48x128xf32, #tpu.memory_space<vmem>>, vector<8x128xf32>
    %382 = arith.select %53, %379, %381 : vector<8x128xi1>, vector<8x128xf32>
    %383 = arith.truncf %331 : vector<8x32xf32> to vector<8x32xbf16>
    %cst_119 = arith.constant dense<0.000000e+00> : vector<8x128xf32>
    %384 = tpu.matmul %383, %15, %cst_119 {dimension_numbers = #tpu.dot_dimension_numbers<[1], [0], [0], [1], [0, 0, 1, 1], [], []>} : vector<8x32xbf16>, vector<32x128xbf16>, vector<8x128xf32> -> vector<8x128xf32>
    %385 = arith.addf %382, %384 : vector<8x128xf32>
    %386 = vector.extract_strided_slice %385 {offsets = [0, 0], sizes = [8, 96], strides = [1, 1]} : vector<8x128xf32> to vector<8x96xf32>
    %387 = arith.negf %386 : vector<8x96xf32>
    %388 = math.exp %387 : vector<8x96xf32>
    %cst_120 = arith.constant 1.000000e+00 : f32
    %389 = vector.broadcast %cst_120 : f32 to vector<8x96xf32>
    %390 = arith.addf %389, %388 : vector<8x96xf32>
    %391 = arith.divf %389, %390 : vector<8x96xf32>
    %392 = vector.extract_strided_slice %385 {offsets = [0, 96], sizes = [8, 32], strides = [1, 1]} : vector<8x128xf32> to vector<8x32xf32>
    %393 = math.tanh %392 : vector<8x32xf32>
    %394 = vector.extract_strided_slice %391 {offsets = [0, 32], sizes = [8, 32], strides = [1, 1]} : vector<8x96xf32> to vector<8x32xf32>
    %395 = arith.mulf %394, %328 : vector<8x32xf32>
    %396 = vector.extract_strided_slice %391 {offsets = [0, 0], sizes = [8, 32], strides = [1, 1]} : vector<8x96xf32> to vector<8x32xf32>
    %397 = arith.mulf %396, %393 : vector<8x32xf32>
    %398 = arith.addf %395, %397 : vector<8x32xf32>
    %399 = vector.extract_strided_slice %391 {offsets = [0, 64], sizes = [8, 32], strides = [1, 1]} : vector<8x96xf32> to vector<8x32xf32>
    %400 = math.tanh %398 : vector<8x32xf32>
    %401 = arith.mulf %399, %400 : vector<8x32xf32>
    %402 = vector.extract_strided_slice %401 {offsets = [0, 0], sizes = [8, 16], strides = [1, 1]} : vector<8x32xf32> to vector<8x16xf32>
    %403 = arith.index_cast %374 : i32 to index
    %c0_121 = arith.constant 0 : index
    %404 = vector.load %arg26[%403, %c0_121] : memref<48x16xf32, #tpu.memory_space<vmem>>, vector<8x16xf32>
    tpu.vector_store %arg26[%403, %c0_121], %402 {strides = array<i32>} : memref<48x16xf32, #tpu.memory_space<vmem>>, vector<8x16xf32>,
    %405 = vector.extract_strided_slice %401 {offsets = [0, 16], sizes = [8, 16], strides = [1, 1]} : vector<8x32xf32> to vector<8x16xf32>
    %406 = arith.index_cast %377 : i32 to index
    %c0_122 = arith.constant 0 : index
    %407 = vector.load %arg27[%406, %c0_122] : memref<48x16xf32, #tpu.memory_space<vmem>>, vector<8x16xf32>
    tpu.vector_store %arg27[%406, %c0_122], %405 {strides = array<i32>} : memref<48x16xf32, #tpu.memory_space<vmem>>, vector<8x16xf32>,
    %c5_i32_123 = arith.constant 5 : i32
    %c8_i32_124 = arith.constant 8 : i32
    %408 = arith.muli %c5_i32_123, %c8_i32_124 : i32
    %409 = tpu.assume_multiple %408, 8 : i32
    %c7_i32_125 = arith.constant 7 : i32
    %410 = arith.subi %c7_i32_125, %c5_i32_123 : i32
    %c8_i32_126 = arith.constant 8 : i32
    %411 = arith.muli %410, %c8_i32_126 : i32
    %412 = tpu.assume_multiple %411, 8 : i32
    %413 = arith.index_cast %409 : i32 to index
    %c0_127 = arith.constant 0 : index
    %414 = vector.load %arg22[%413, %c0_127] : memref<64x128xf32, #tpu.memory_space<vmem>>, vector<8x128xf32>
    %415 = arith.index_cast %412 : i32 to index
    %c0_128 = arith.constant 0 : index
    %416 = vector.load %arg22[%415, %c0_128] : memref<64x128xf32, #tpu.memory_space<vmem>>, vector<8x128xf32>
    %417 = arith.select %34, %414, %416 : vector<8x128xi1>, vector<8x128xf32>
    %418 = arith.truncf %366 : vector<8x32xf32> to vector<8x32xbf16>
    %cst_129 = arith.constant dense<0.000000e+00> : vector<8x128xf32>
    %419 = tpu.matmul %418, %14, %cst_129 {dimension_numbers = #tpu.dot_dimension_numbers<[1], [0], [0], [1], [0, 0, 1, 1], [], []>} : vector<8x32xbf16>, vector<32x128xbf16>, vector<8x128xf32> -> vector<8x128xf32>
    %420 = arith.addf %417, %419 : vector<8x128xf32>
    %421 = vector.extract_strided_slice %420 {offsets = [0, 0], sizes = [8, 96], strides = [1, 1]} : vector<8x128xf32> to vector<8x96xf32>
    %422 = arith.negf %421 : vector<8x96xf32>
    %423 = math.exp %422 : vector<8x96xf32>
    %cst_130 = arith.constant 1.000000e+00 : f32
    %424 = vector.broadcast %cst_130 : f32 to vector<8x96xf32>
    %425 = arith.addf %424, %423 : vector<8x96xf32>
    %426 = arith.divf %424, %425 : vector<8x96xf32>
    %427 = vector.extract_strided_slice %420 {offsets = [0, 96], sizes = [8, 32], strides = [1, 1]} : vector<8x128xf32> to vector<8x32xf32>
    %428 = math.tanh %427 : vector<8x32xf32>
    %429 = vector.extract_strided_slice %426 {offsets = [0, 32], sizes = [8, 32], strides = [1, 1]} : vector<8x96xf32> to vector<8x32xf32>
    %430 = arith.mulf %429, %363 : vector<8x32xf32>
    %431 = vector.extract_strided_slice %426 {offsets = [0, 0], sizes = [8, 32], strides = [1, 1]} : vector<8x96xf32> to vector<8x32xf32>
    %432 = arith.mulf %431, %428 : vector<8x32xf32>
    %433 = arith.addf %430, %432 : vector<8x32xf32>
    %434 = vector.extract_strided_slice %426 {offsets = [0, 64], sizes = [8, 32], strides = [1, 1]} : vector<8x96xf32> to vector<8x32xf32>
    %435 = math.tanh %433 : vector<8x32xf32>
    %436 = arith.mulf %434, %435 : vector<8x32xf32>
    %437 = vector.extract_strided_slice %436 {offsets = [0, 0], sizes = [8, 16], strides = [1, 1]} : vector<8x32xf32> to vector<8x16xf32>
    %438 = arith.index_cast %409 : i32 to index
    %c0_131 = arith.constant 0 : index
    %439 = vector.load %arg23[%438, %c0_131] : memref<64x16xf32, #tpu.memory_space<vmem>>, vector<8x16xf32>
    tpu.vector_store %arg23[%438, %c0_131], %437 {strides = array<i32>} : memref<64x16xf32, #tpu.memory_space<vmem>>, vector<8x16xf32>,
    %440 = vector.extract_strided_slice %436 {offsets = [0, 16], sizes = [8, 16], strides = [1, 1]} : vector<8x32xf32> to vector<8x16xf32>
    %441 = arith.index_cast %412 : i32 to index
    %c0_132 = arith.constant 0 : index
    %442 = vector.load %arg24[%441, %c0_132] : memref<64x16xf32, #tpu.memory_space<vmem>>, vector<8x16xf32>
    tpu.vector_store %arg24[%441, %c0_132], %440 {strides = array<i32>} : memref<64x16xf32, #tpu.memory_space<vmem>>, vector<8x16xf32>,
    %c8_i32_133 = arith.constant 8 : i32
    %443 = arith.muli %c5_i32_123, %c8_i32_133 : i32
    %444 = tpu.assume_multiple %443, 8 : i32
    %c5_i32_134 = arith.constant 5 : i32
    %445 = arith.subi %c5_i32_134, %c5_i32_123 : i32
    %c8_i32_135 = arith.constant 8 : i32
    %446 = arith.muli %445, %c8_i32_135 : i32
    %447 = tpu.assume_multiple %446, 8 : i32
    %448 = arith.index_cast %444 : i32 to index
    %c0_136 = arith.constant 0 : index
    %449 = vector.load %arg25[%448, %c0_136] : memref<48x128xf32, #tpu.memory_space<vmem>>, vector<8x128xf32>
    %450 = arith.index_cast %447 : i32 to index
    %c0_137 = arith.constant 0 : index
    %451 = vector.load %arg25[%450, %c0_137] : memref<48x128xf32, #tpu.memory_space<vmem>>, vector<8x128xf32>
    %452 = arith.select %53, %449, %451 : vector<8x128xi1>, vector<8x128xf32>
    %453 = arith.truncf %401 : vector<8x32xf32> to vector<8x32xbf16>
    %cst_138 = arith.constant dense<0.000000e+00> : vector<8x128xf32>
    %454 = tpu.matmul %453, %15, %cst_138 {dimension_numbers = #tpu.dot_dimension_numbers<[1], [0], [0], [1], [0, 0, 1, 1], [], []>} : vector<8x32xbf16>, vector<32x128xbf16>, vector<8x128xf32> -> vector<8x128xf32>
    %455 = arith.addf %452, %454 : vector<8x128xf32>
    %456 = vector.extract_strided_slice %455 {offsets = [0, 0], sizes = [8, 96], strides = [1, 1]} : vector<8x128xf32> to vector<8x96xf32>
    %457 = arith.negf %456 : vector<8x96xf32>
    %458 = math.exp %457 : vector<8x96xf32>
    %cst_139 = arith.constant 1.000000e+00 : f32
    %459 = vector.broadcast %cst_139 : f32 to vector<8x96xf32>
    %460 = arith.addf %459, %458 : vector<8x96xf32>
    %461 = arith.divf %459, %460 : vector<8x96xf32>
    %462 = vector.extract_strided_slice %455 {offsets = [0, 96], sizes = [8, 32], strides = [1, 1]} : vector<8x128xf32> to vector<8x32xf32>
    %463 = math.tanh %462 : vector<8x32xf32>
    %464 = vector.extract_strided_slice %461 {offsets = [0, 32], sizes = [8, 32], strides = [1, 1]} : vector<8x96xf32> to vector<8x32xf32>
    %465 = arith.mulf %464, %398 : vector<8x32xf32>
    %466 = vector.extract_strided_slice %461 {offsets = [0, 0], sizes = [8, 32], strides = [1, 1]} : vector<8x96xf32> to vector<8x32xf32>
    %467 = arith.mulf %466, %463 : vector<8x32xf32>
    %468 = arith.addf %465, %467 : vector<8x32xf32>
    %469 = vector.extract_strided_slice %461 {offsets = [0, 64], sizes = [8, 32], strides = [1, 1]} : vector<8x96xf32> to vector<8x32xf32>
    %470 = math.tanh %468 : vector<8x32xf32>
    %471 = arith.mulf %469, %470 : vector<8x32xf32>
    %472 = vector.extract_strided_slice %471 {offsets = [0, 0], sizes = [8, 16], strides = [1, 1]} : vector<8x32xf32> to vector<8x16xf32>
    %473 = arith.index_cast %444 : i32 to index
    %c0_140 = arith.constant 0 : index
    %474 = vector.load %arg26[%473, %c0_140] : memref<48x16xf32, #tpu.memory_space<vmem>>, vector<8x16xf32>
    tpu.vector_store %arg26[%473, %c0_140], %472 {strides = array<i32>} : memref<48x16xf32, #tpu.memory_space<vmem>>, vector<8x16xf32>,
    %475 = vector.extract_strided_slice %471 {offsets = [0, 16], sizes = [8, 16], strides = [1, 1]} : vector<8x32xf32> to vector<8x16xf32>
    %476 = arith.index_cast %447 : i32 to index
    %c0_141 = arith.constant 0 : index
    %477 = vector.load %arg27[%476, %c0_141] : memref<48x16xf32, #tpu.memory_space<vmem>>, vector<8x16xf32>
    tpu.vector_store %arg27[%476, %c0_141], %475 {strides = array<i32>} : memref<48x16xf32, #tpu.memory_space<vmem>>, vector<8x16xf32>,
    %c6_i32 = arith.constant 6 : i32
    %c6_i32_142 = arith.constant 6 : i32
    %c8_i32_143 = arith.constant 8 : i32
    %478 = arith.muli %c6_i32_142, %c8_i32_143 : i32
    %479 = tpu.assume_multiple %478, 8 : i32
    %c7_i32_144 = arith.constant 7 : i32
    %480 = arith.subi %c7_i32_144, %c6_i32_142 : i32
    %c8_i32_145 = arith.constant 8 : i32
    %481 = arith.muli %480, %c8_i32_145 : i32
    %482 = tpu.assume_multiple %481, 8 : i32
    %483 = arith.index_cast %479 : i32 to index
    %c0_146 = arith.constant 0 : index
    %484 = vector.load %arg22[%483, %c0_146] : memref<64x128xf32, #tpu.memory_space<vmem>>, vector<8x128xf32>
    %485 = arith.index_cast %482 : i32 to index
    %c0_147 = arith.constant 0 : index
    %486 = vector.load %arg22[%485, %c0_147] : memref<64x128xf32, #tpu.memory_space<vmem>>, vector<8x128xf32>
    %487 = arith.select %34, %484, %486 : vector<8x128xi1>, vector<8x128xf32>
    %488 = arith.truncf %436 : vector<8x32xf32> to vector<8x32xbf16>
    %cst_148 = arith.constant dense<0.000000e+00> : vector<8x128xf32>
    %489 = tpu.matmul %488, %14, %cst_148 {dimension_numbers = #tpu.dot_dimension_numbers<[1], [0], [0], [1], [0, 0, 1, 1], [], []>} : vector<8x32xbf16>, vector<32x128xbf16>, vector<8x128xf32> -> vector<8x128xf32>
    %490 = arith.addf %487, %489 : vector<8x128xf32>
    %491 = vector.extract_strided_slice %490 {offsets = [0, 0], sizes = [8, 96], strides = [1, 1]} : vector<8x128xf32> to vector<8x96xf32>
    %492 = arith.negf %491 : vector<8x96xf32>
    %493 = math.exp %492 : vector<8x96xf32>
    %cst_149 = arith.constant 1.000000e+00 : f32
    %494 = vector.broadcast %cst_149 : f32 to vector<8x96xf32>
    %495 = arith.addf %494, %493 : vector<8x96xf32>
    %496 = arith.divf %494, %495 : vector<8x96xf32>
    %497 = vector.extract_strided_slice %490 {offsets = [0, 96], sizes = [8, 32], strides = [1, 1]} : vector<8x128xf32> to vector<8x32xf32>
    %498 = math.tanh %497 : vector<8x32xf32>
    %499 = vector.extract_strided_slice %496 {offsets = [0, 32], sizes = [8, 32], strides = [1, 1]} : vector<8x96xf32> to vector<8x32xf32>
    %500 = arith.mulf %499, %433 : vector<8x32xf32>
    %501 = vector.extract_strided_slice %496 {offsets = [0, 0], sizes = [8, 32], strides = [1, 1]} : vector<8x96xf32> to vector<8x32xf32>
    %502 = arith.mulf %501, %498 : vector<8x32xf32>
    %503 = arith.addf %500, %502 : vector<8x32xf32>
    %504 = vector.extract_strided_slice %496 {offsets = [0, 64], sizes = [8, 32], strides = [1, 1]} : vector<8x96xf32> to vector<8x32xf32>
    %505 = math.tanh %503 : vector<8x32xf32>
    %506 = arith.mulf %504, %505 : vector<8x32xf32>
    %507 = vector.extract_strided_slice %506 {offsets = [0, 0], sizes = [8, 16], strides = [1, 1]} : vector<8x32xf32> to vector<8x16xf32>
    %508 = arith.index_cast %479 : i32 to index
    %c0_150 = arith.constant 0 : index
    %509 = vector.load %arg23[%508, %c0_150] : memref<64x16xf32, #tpu.memory_space<vmem>>, vector<8x16xf32>
    tpu.vector_store %arg23[%508, %c0_150], %507 {strides = array<i32>} : memref<64x16xf32, #tpu.memory_space<vmem>>, vector<8x16xf32>,
    %510 = vector.extract_strided_slice %506 {offsets = [0, 16], sizes = [8, 16], strides = [1, 1]} : vector<8x32xf32> to vector<8x16xf32>
    %511 = arith.index_cast %482 : i32 to index
    %c0_151 = arith.constant 0 : index
    %512 = vector.load %arg24[%511, %c0_151] : memref<64x16xf32, #tpu.memory_space<vmem>>, vector<8x16xf32>
    tpu.vector_store %arg24[%511, %c0_151], %510 {strides = array<i32>} : memref<64x16xf32, #tpu.memory_space<vmem>>, vector<8x16xf32>,
    %c7_i32_152 = arith.constant 7 : i32
    %c8_i32_153 = arith.constant 8 : i32
    %513 = arith.muli %c7_i32_152, %c8_i32_153 : i32
    %514 = tpu.assume_multiple %513, 8 : i32
    %c7_i32_154 = arith.constant 7 : i32
    %515 = arith.subi %c7_i32_154, %c7_i32_152 : i32
    %c8_i32_155 = arith.constant 8 : i32
    %516 = arith.muli %515, %c8_i32_155 : i32
    %517 = tpu.assume_multiple %516, 8 : i32
    %518 = arith.index_cast %514 : i32 to index
    %c0_156 = arith.constant 0 : index
    %519 = vector.load %arg22[%518, %c0_156] : memref<64x128xf32, #tpu.memory_space<vmem>>, vector<8x128xf32>
    %520 = arith.index_cast %517 : i32 to index
    %c0_157 = arith.constant 0 : index
    %521 = vector.load %arg22[%520, %c0_157] : memref<64x128xf32, #tpu.memory_space<vmem>>, vector<8x128xf32>
    %522 = arith.select %34, %519, %521 : vector<8x128xi1>, vector<8x128xf32>
    %523 = arith.truncf %506 : vector<8x32xf32> to vector<8x32xbf16>
    %cst_158 = arith.constant dense<0.000000e+00> : vector<8x128xf32>
    %524 = tpu.matmul %523, %14, %cst_158 {dimension_numbers = #tpu.dot_dimension_numbers<[1], [0], [0], [1], [0, 0, 1, 1], [], []>} : vector<8x32xbf16>, vector<32x128xbf16>, vector<8x128xf32> -> vector<8x128xf32>
    %525 = arith.addf %522, %524 : vector<8x128xf32>
    %526 = vector.extract_strided_slice %525 {offsets = [0, 0], sizes = [8, 96], strides = [1, 1]} : vector<8x128xf32> to vector<8x96xf32>
    %527 = arith.negf %526 : vector<8x96xf32>
    %528 = math.exp %527 : vector<8x96xf32>
    %cst_159 = arith.constant 1.000000e+00 : f32
    %529 = vector.broadcast %cst_159 : f32 to vector<8x96xf32>
    %530 = arith.addf %529, %528 : vector<8x96xf32>
    %531 = arith.divf %529, %530 : vector<8x96xf32>
    %532 = vector.extract_strided_slice %525 {offsets = [0, 96], sizes = [8, 32], strides = [1, 1]} : vector<8x128xf32> to vector<8x32xf32>
    %533 = math.tanh %532 : vector<8x32xf32>
    %534 = vector.extract_strided_slice %531 {offsets = [0, 32], sizes = [8, 32], strides = [1, 1]} : vector<8x96xf32> to vector<8x32xf32>
    %535 = arith.mulf %534, %503 : vector<8x32xf32>
    %536 = vector.extract_strided_slice %531 {offsets = [0, 0], sizes = [8, 32], strides = [1, 1]} : vector<8x96xf32> to vector<8x32xf32>
    %537 = arith.mulf %536, %533 : vector<8x32xf32>
    %538 = arith.addf %535, %537 : vector<8x32xf32>
    %539 = vector.extract_strided_slice %531 {offsets = [0, 64], sizes = [8, 32], strides = [1, 1]} : vector<8x96xf32> to vector<8x32xf32>
    %540 = math.tanh %538 : vector<8x32xf32>
    %541 = arith.mulf %539, %540 : vector<8x32xf32>
    %542 = vector.extract_strided_slice %541 {offsets = [0, 0], sizes = [8, 16], strides = [1, 1]} : vector<8x32xf32> to vector<8x16xf32>
    %543 = arith.index_cast %514 : i32 to index
    %c0_160 = arith.constant 0 : index
    %544 = vector.load %arg23[%543, %c0_160] : memref<64x16xf32, #tpu.memory_space<vmem>>, vector<8x16xf32>
    tpu.vector_store %arg23[%543, %c0_160], %542 {strides = array<i32>} : memref<64x16xf32, #tpu.memory_space<vmem>>, vector<8x16xf32>,
    %545 = vector.extract_strided_slice %541 {offsets = [0, 16], sizes = [8, 16], strides = [1, 1]} : vector<8x32xf32> to vector<8x16xf32>
    %546 = arith.index_cast %517 : i32 to index
    %c0_161 = arith.constant 0 : index
    %547 = vector.load %arg24[%546, %c0_161] : memref<64x16xf32, #tpu.memory_space<vmem>>, vector<8x16xf32>
    tpu.vector_store %arg24[%546, %c0_161], %545 {strides = array<i32>} : memref<64x16xf32, #tpu.memory_space<vmem>>, vector<8x16xf32>,
    %c2_i32_162 = arith.constant 2 : i32
    %c0_163 = arith.constant 0 : index
    %c0_164 = arith.constant 0 : index
    %548 = vector.load %arg23[%c0_163, %c0_164] : memref<64x16xf32, #tpu.memory_space<vmem>>, vector<64x16xf32>
    %c0_165 = arith.constant 0 : index
    %c0_166 = arith.constant 0 : index
    %549 = vector.load %arg24[%c0_165, %c0_166] : memref<64x16xf32, #tpu.memory_space<vmem>>, vector<64x16xf32>
    %c0_167 = arith.constant 0 : index
    %c0_168 = arith.constant 0 : index
    %550 = vector.load %arg5[%c0_167, %c0_168] : memref<16x1xf32, #tpu.memory_space<vmem>>, vector<16x1xf32>
    %cst_169 = arith.constant dense<0.000000e+00> : vector<64x1xf32>
    %551 = tpu.matmul %548, %550, %cst_169 {dimension_numbers = #tpu.dot_dimension_numbers<[1], [0], [0], [1], [0, 0, 1, 1], [], []>} : vector<64x16xf32>, vector<16x1xf32>, vector<64x1xf32> -> vector<64x1xf32>
    %c0_170 = arith.constant 0 : index
    %c0_171 = arith.constant 0 : index
    %552 = vector.load %arg6[%c0_170, %c0_171] : memref<16x1xf32, #tpu.memory_space<vmem>>, vector<16x1xf32>
    %cst_172 = arith.constant dense<0.000000e+00> : vector<64x1xf32>
    %553 = tpu.matmul %549, %552, %cst_172 {dimension_numbers = #tpu.dot_dimension_numbers<[1], [0], [0], [1], [0, 0, 1, 1], [], []>} : vector<64x16xf32>, vector<16x1xf32>, vector<64x1xf32> -> vector<64x1xf32>
    %554 = arith.addf %551, %553 : vector<64x1xf32>
    %c0_173 = arith.constant 0 : index
    %c0_174 = arith.constant 0 : index
    %555 = vector.load %arg7[%c0_173, %c0_174] : memref<1x1xf32, #tpu.memory_space<vmem>>, vector<1x1xf32>
    %556 = vector.broadcast %555 : vector<1x1xf32> to vector<64x1xf32>
    %557 = arith.addf %554, %556 : vector<64x1xf32>
    %558 = math.tanh %557 : vector<64x1xf32>
    %559 = math.exp %558 : vector<64x1xf32>
    %c0_175 = arith.constant 0 : index
    %c0_176 = arith.constant 0 : index
    %560 = vector.load %arg1[%c0_175, %c0_176] : memref<64x1xf32, #tpu.memory_space<vmem>>, vector<64x1xf32>
    %561 = arith.mulf %559, %560 : vector<64x1xf32>
    %562 = vector.shape_cast %561 : vector<64x1xf32> to vector<8x8x1xf32>
    %cst_177 = arith.constant dense<0.000000e+00> : vector<8x1xf32>
    %563 = vector.multi_reduction <add>, %562, %cst_177 [0] : vector<8x8x1xf32> to vector<8x1xf32>
    %cst_178 = arith.constant 1.000000e-07 : f32
    %564 = vector.broadcast %cst_178 : f32 to vector<8x1xf32>
    %565 = arith.addf %563, %564 : vector<8x1xf32>
    %566 = tpu.reciprocal %565 {approx = true} : vector<8x1xf32> -> vector<8x1xf32>
    %567 = vector.shape_cast %548 : vector<64x16xf32> to vector<8x8x16xf32>
    %568 = vector.broadcast %562 : vector<8x8x1xf32> to vector<8x8x16xf32>
    %569 = arith.mulf %568, %567 : vector<8x8x16xf32>
    %cst_179 = arith.constant dense<0.000000e+00> : vector<8x16xf32>
    %570 = vector.multi_reduction <add>, %569, %cst_179 [0] : vector<8x8x16xf32> to vector<8x16xf32>
    %571 = vector.broadcast %566 : vector<8x1xf32> to vector<8x16xf32>
    %572 = arith.mulf %571, %570 : vector<8x16xf32>
    %573 = vector.shape_cast %549 : vector<64x16xf32> to vector<8x8x16xf32>
    %574 = vector.broadcast %562 : vector<8x8x1xf32> to vector<8x8x16xf32>
    %575 = arith.mulf %574, %573 : vector<8x8x16xf32>
    %cst_180 = arith.constant dense<0.000000e+00> : vector<8x16xf32>
    %576 = vector.multi_reduction <add>, %575, %cst_180 [0] : vector<8x8x16xf32> to vector<8x16xf32>
    %577 = vector.broadcast %566 : vector<8x1xf32> to vector<8x16xf32>
    %578 = arith.mulf %577, %576 : vector<8x16xf32>
    %c0_181 = arith.constant 0 : index
    %c0_182 = arith.constant 0 : index
    %579 = vector.load %arg0[%c0_181, %c0_182] : memref<64x24xbf16, #tpu.memory_space<vmem>>, vector<64x24xbf16>
    %580 = arith.extf %579 : vector<64x24xbf16> to vector<64x24xf32>
    %581 = vector.shape_cast %580 : vector<64x24xf32> to vector<8x8x24xf32>
    %582 = vector.broadcast %562 : vector<8x8x1xf32> to vector<8x8x24xf32>
    %583 = arith.mulf %582, %581 : vector<8x8x24xf32>
    %cst_183 = arith.constant dense<0.000000e+00> : vector<8x24xf32>
    %584 = vector.multi_reduction <add>, %583, %cst_183 [0] : vector<8x8x24xf32> to vector<8x24xf32>
    %585 = vector.broadcast %566 : vector<8x1xf32> to vector<8x24xf32>
    %586 = arith.mulf %585, %584 : vector<8x24xf32>
    %587 = tpu.concatenate %572, %578 in 1 : vector<8x16xf32>, vector<8x16xf32> -> vector<8x32xf32>
    %c0_184 = arith.constant 0 : index
    %c0_185 = arith.constant 0 : index
    %588 = vector.load %arg26[%c0_184, %c0_185] : memref<48x16xf32, #tpu.memory_space<vmem>>, vector<48x16xf32>
    %c0_186 = arith.constant 0 : index
    %c0_187 = arith.constant 0 : index
    %589 = vector.load %arg27[%c0_186, %c0_187] : memref<48x16xf32, #tpu.memory_space<vmem>>, vector<48x16xf32>
    %c0_188 = arith.constant 0 : index
    %c0_189 = arith.constant 0 : index
    %590 = vector.load %arg13[%c0_188, %c0_189] : memref<16x1xf32, #tpu.memory_space<vmem>>, vector<16x1xf32>
    %cst_190 = arith.constant dense<0.000000e+00> : vector<48x1xf32>
    %591 = tpu.matmul %588, %590, %cst_190 {dimension_numbers = #tpu.dot_dimension_numbers<[1], [0], [0], [1], [0, 0, 1, 1], [], []>} : vector<48x16xf32>, vector<16x1xf32>, vector<48x1xf32> -> vector<48x1xf32>
    %c0_191 = arith.constant 0 : index
    %c0_192 = arith.constant 0 : index
    %592 = vector.load %arg14[%c0_191, %c0_192] : memref<16x1xf32, #tpu.memory_space<vmem>>, vector<16x1xf32>
    %cst_193 = arith.constant dense<0.000000e+00> : vector<48x1xf32>
    %593 = tpu.matmul %589, %592, %cst_193 {dimension_numbers = #tpu.dot_dimension_numbers<[1], [0], [0], [1], [0, 0, 1, 1], [], []>} : vector<48x16xf32>, vector<16x1xf32>, vector<48x1xf32> -> vector<48x1xf32>
    %594 = arith.addf %591, %593 : vector<48x1xf32>
    %c0_194 = arith.constant 0 : index
    %c0_195 = arith.constant 0 : index
    %595 = vector.load %arg15[%c0_194, %c0_195] : memref<1x1xf32, #tpu.memory_space<vmem>>, vector<1x1xf32>
    %596 = vector.broadcast %595 : vector<1x1xf32> to vector<48x1xf32>
    %597 = arith.addf %594, %596 : vector<48x1xf32>
    %598 = math.tanh %597 : vector<48x1xf32>
    %599 = math.exp %598 : vector<48x1xf32>
    %c0_196 = arith.constant 0 : index
    %c0_197 = arith.constant 0 : index
    %600 = vector.load %arg9[%c0_196, %c0_197] : memref<48x1xf32, #tpu.memory_space<vmem>>, vector<48x1xf32>
    %601 = arith.mulf %599, %600 : vector<48x1xf32>
    %602 = vector.shape_cast %601 : vector<48x1xf32> to vector<6x8x1xf32>
    %cst_198 = arith.constant dense<0.000000e+00> : vector<8x1xf32>
    %603 = vector.multi_reduction <add>, %602, %cst_198 [0] : vector<6x8x1xf32> to vector<8x1xf32>
    %cst_199 = arith.constant 1.000000e-07 : f32
    %604 = vector.broadcast %cst_199 : f32 to vector<8x1xf32>
    %605 = arith.addf %603, %604 : vector<8x1xf32>
    %606 = tpu.reciprocal %605 {approx = true} : vector<8x1xf32> -> vector<8x1xf32>
    %607 = vector.shape_cast %588 : vector<48x16xf32> to vector<6x8x16xf32>
    %608 = vector.broadcast %602 : vector<6x8x1xf32> to vector<6x8x16xf32>
    %609 = arith.mulf %608, %607 : vector<6x8x16xf32>
    %cst_200 = arith.constant dense<0.000000e+00> : vector<8x16xf32>
    %610 = vector.multi_reduction <add>, %609, %cst_200 [0] : vector<6x8x16xf32> to vector<8x16xf32>
    %611 = vector.broadcast %606 : vector<8x1xf32> to vector<8x16xf32>
    %612 = arith.mulf %611, %610 : vector<8x16xf32>
    %613 = vector.shape_cast %589 : vector<48x16xf32> to vector<6x8x16xf32>
    %614 = vector.broadcast %602 : vector<6x8x1xf32> to vector<6x8x16xf32>
    %615 = arith.mulf %614, %613 : vector<6x8x16xf32>
    %cst_201 = arith.constant dense<0.000000e+00> : vector<8x16xf32>
    %616 = vector.multi_reduction <add>, %615, %cst_201 [0] : vector<6x8x16xf32> to vector<8x16xf32>
    %617 = vector.broadcast %606 : vector<8x1xf32> to vector<8x16xf32>
    %618 = arith.mulf %617, %616 : vector<8x16xf32>
    %c0_202 = arith.constant 0 : index
    %c0_203 = arith.constant 0 : index
    %619 = vector.load %arg8[%c0_202, %c0_203] : memref<48x16xbf16, #tpu.memory_space<vmem>>, vector<48x16xbf16>
    %620 = arith.extf %619 : vector<48x16xbf16> to vector<48x16xf32>
    %621 = vector.shape_cast %620 : vector<48x16xf32> to vector<6x8x16xf32>
    %622 = vector.broadcast %602 : vector<6x8x1xf32> to vector<6x8x16xf32>
    %623 = arith.mulf %622, %621 : vector<6x8x16xf32>
    %cst_204 = arith.constant dense<0.000000e+00> : vector<8x16xf32>
    %624 = vector.multi_reduction <add>, %623, %cst_204 [0] : vector<6x8x16xf32> to vector<8x16xf32>
    %625 = vector.broadcast %606 : vector<8x1xf32> to vector<8x16xf32>
    %626 = arith.mulf %625, %624 : vector<8x16xf32>
    %627 = tpu.concatenate %612, %618 in 1 : vector<8x16xf32>, vector<8x16xf32> -> vector<8x32xf32>
    %c0_205 = arith.constant 0 : index
    %c0_206 = arith.constant 0 : index
    %628 = vector.load %arg16[%c0_205, %c0_206] : memref<8x2xf32, #tpu.memory_space<vmem>>, vector<8x2xf32>
    %cst_207 = arith.constant 0.000000e+00 : f32
    %629 = vector.broadcast %cst_207 : f32 to vector<8x86xf32>
    %630 = tpu.concatenate %586, %626, %628, %629 in 1 : vector<8x24xf32>, vector<8x16xf32>, vector<8x2xf32>, vector<8x86xf32> -> vector<8x128xf32>
    %c0_208 = arith.constant 0 : index
    %c0_209 = arith.constant 0 : index
    %631 = vector.load %arg21[%c0_208, %c0_209] : memref<8x128xf32, #tpu.memory_space<vmem>>, vector<8x128xf32>
    tpu.vector_store %arg21[%c0_208, %c0_209], %630 {strides = array<i32>} : memref<8x128xf32, #tpu.memory_space<vmem>>, vector<8x128xf32>,
    %632 = tpu.concatenate %587, %627, %628 in 1 : vector<8x32xf32>, vector<8x32xf32>, vector<8x2xf32> -> vector<8x66xf32>
    %c0_210 = arith.constant 0 : index
    %c0_211 = arith.constant 0 : index
    %633 = vector.load %arg17[%c0_210, %c0_211] : memref<66x32xf32, #tpu.memory_space<vmem>>, vector<66x32xf32>
    %cst_212 = arith.constant dense<0.000000e+00> : vector<8x32xf32>
    %634 = tpu.matmul %632, %633, %cst_212 {dimension_numbers = #tpu.dot_dimension_numbers<[1], [0], [0], [1], [0, 0, 1, 1], [], []>} : vector<8x66xf32>, vector<66x32xf32>, vector<8x32xf32> -> vector<8x32xf32>
    %c0_213 = arith.constant 0 : index
    %c0_214 = arith.constant 0 : index
    %635 = vector.load %arg18[%c0_213, %c0_214] : memref<1x32xf32, #tpu.memory_space<vmem>>, vector<1x32xf32>
    %636 = vector.broadcast %635 : vector<1x32xf32> to vector<8x32xf32>
    %637 = arith.addf %634, %636 : vector<8x32xf32>
    %cst_215 = arith.constant 0.000000e+00 : f32
    %638 = vector.broadcast %cst_215 : f32 to vector<8x32xf32>
    %639 = arith.maximumf %637, %638 : vector<8x32xf32>
    %c0_216 = arith.constant 0 : index
    %c0_217 = arith.constant 0 : index
    %640 = vector.load %arg19[%c0_216, %c0_217] : memref<32x128xf32, #tpu.memory_space<vmem>>, vector<32x128xf32>
    %cst_218 = arith.constant dense<0.000000e+00> : vector<8x128xf32>
    %641 = tpu.matmul %639, %640, %cst_218 {dimension_numbers = #tpu.dot_dimension_numbers<[1], [0], [0], [1], [0, 0, 1, 1], [], []>} : vector<8x32xf32>, vector<32x128xf32>, vector<8x128xf32> -> vector<8x128xf32>
    %c0_219 = arith.constant 0 : index
    %c0_220 = arith.constant 0 : index
    %642 = vector.load %arg20[%c0_219, %c0_220] : memref<8x128xf32, #tpu.memory_space<vmem>>, vector<8x128xf32>
    tpu.vector_store %arg20[%c0_219, %c0_220], %641 {strides = array<i32>} : memref<8x128xf32, #tpu.memory_space<vmem>>, vector<8x128xf32>,
    return
  }
}

</mosaic_0001>

<llo_original>
// kernel: model_forward.1
$region0: #{model_forward.1}
  #allocation0 [shape = 'u32[]', space=smem, size = 0x4, offset = 0x4, fixed_abs, tag = 'smem constant byte address 0x4 - core index']
  #allocation1 [shape = 'u32[72,128]{1,0:T(1,128)}', space=vmem, size = 0x9000, scoped, tag = 'internal scratch']
  #allocation2 [shape = 'f32[64,128]{1,0:T(8,128)}', space=vmem, size = 0x8000, scoped, tag = 'scratch operand']
  #allocation3 [shape = 'f32[64,16]{1,0:T(8,128)}', space=vmem, size = 0x8000, scoped, tag = 'scratch operand']
  #allocation4 [shape = 'f32[64,16]{1,0:T(8,128)}', space=vmem, size = 0x8000, scoped, tag = 'scratch operand']
  #allocation5 [shape = 'f32[48,128]{1,0:T(8,128)}', space=vmem, size = 0x6000, scoped, tag = 'scratch operand']
  #allocation6 [shape = 'f32[48,16]{1,0:T(8,128)}', space=vmem, size = 0x6000, scoped, tag = 'scratch operand']
  #allocation7 [shape = 'f32[48,16]{1,0:T(8,128)}', space=vmem, size = 0x6000, scoped, tag = 'scratch operand']
  #allocation8 [shape = 'f32[1,1]{1,0:T(1,128)S(1)}', space=vmem, size = 0x200, scoped, tag = 'scoped memory for model_forward.1']
  #allocation9 [shape = 'f32[1,1]{1,0:T(1,128)S(1)}', space=vmem, size = 0x200, scoped, tag = 'scoped memory for model_forward.1']
  %s0 = inlined_call_operand.vmem [shape: bf16[64,24], index: 0, kind: input, shape index: {}]
  %s1 = inlined_call_operand.vmem [shape: f32[64,1], index: 1, kind: input, shape index: {}]
  %s2 = inlined_call_operand.vmem [shape: bf16[24,128], index: 2, kind: input, shape index: {}]
  %s3 = inlined_call_operand.vmem [shape: f32[1,128], index: 3, kind: input, shape index: {}]
  %s4 = inlined_call_operand.vmem [shape: bf16[32,128], index: 4, kind: input, shape index: {}]
  %s5 = inlined_call_operand.vmem [shape: f32[16,1], index: 5, kind: input, shape index: {}]
  %s6 = inlined_call_operand.vmem [shape: f32[16,1], index: 6, kind: input, shape index: {}]
  %s7 = inlined_call_operand.<no memory space> [shape: f32[1,1], index: 7, kind: input, shape index: {}]
  %s8 = inlined_call_operand.vmem [shape: bf16[48,16], index: 8, kind: input, shape index: {}]
  %s9 = inlined_call_operand.vmem [shape: f32[48,1], index: 9, kind: input, shape index: {}]
  %s10 = inlined_call_operand.vmem [shape: bf16[16,128], index: 10, kind: input, shape index: {}]
  %s11 = inlined_call_operand.vmem [shape: f32[1,128], index: 11, kind: input, shape index: {}]
  %s12 = inlined_call_operand.vmem [shape: bf16[32,128], index: 12, kind: input, shape index: {}]
  %s13 = inlined_call_operand.vmem [shape: f32[16,1], index: 13, kind: input, shape index: {}]
  %s14 = inlined_call_operand.vmem [shape: f32[16,1], index: 14, kind: input, shape index: {}]
  %s15 = inlined_call_operand.<no memory space> [shape: f32[1,1], index: 15, kind: input, shape index: {}]
  %s16 = inlined_call_operand.vmem [shape: f32[8,2], index: 16, kind: input, shape index: {}]
  %s17 = inlined_call_operand.vmem [shape: f32[66,32], index: 17, kind: input, shape index: {}]
  %s18 = inlined_call_operand.vmem [shape: f32[1,32], index: 18, kind: input, shape index: {}]
  %s19 = inlined_call_operand.vmem [shape: f32[32,128], index: 19, kind: input, shape index: {}]
  %s20 = inlined_call_operand.vmem [shape: f32[8,128], index: 20, kind: output, shape index: {0}]
  %s21 = inlined_call_operand.vmem [shape: f32[8,128], index: 21, kind: output, shape index: {1}]
  %22 = xla_tuple %s20, %s21
  %s23 = sld [smem:[#allocation0]]
  $region98: #{model_forward.1} parent=0
    _
  %s25 = ssub.s32 1, %s23
  %s26 = scalar_select 0, %s25, %s23
  %v27 = vstv %s7
  %28 = vst [vmem:[#allocation8] sm:$0x1] %v27
  %v29 = vstv %s15
  %30 = vst [vmem:[#allocation9] sm:$0x1] %v29
  // Predicated region
  $region2: #{model_forward.1} parent=0 // pred_check
    _
  $region3: #{model_forward.1} parent=0 // pred_check_branch
    %32 = sbr.rel (0) target = $region5
  $region4: #{model_forward.1} parent=0 // pred_region
    _
  $region5: #{model_forward.1} parent=0 // pred_fallthru
    _
  // Predicated region
  $region6: #{model_forward.1} parent=0 // pred_check
    _
  $region7: #{model_forward.1} parent=0 // pred_check_branch
    %34 = sbr.rel (0) target = $region9
  $region8: #{model_forward.1} parent=0 // pred_region
    _
  $region9: #{model_forward.1} parent=0 // pred_fallthru
    _
  // Predicated region
  $region10: #{model_forward.1} parent=0 // pred_check
    _
  $region11: #{model_forward.1} parent=0 // pred_check_branch
    %36 = sbr.rel (0) target = $region13
  $region12: #{model_forward.1} parent=0 // pred_region
    _
  $region13: #{model_forward.1} parent=0 // pred_fallthru
    _
  // Predicated region
  $region14: #{model_forward.1} parent=0 // pred_check
    _
  $region15: #{model_forward.1} parent=0 // pred_check_branch
    %38 = sbr.rel (0) target = $region17
  $region16: #{model_forward.1} parent=0 // pred_region
    _
  $region17: #{model_forward.1} parent=0 // pred_fallthru
    _
  // Predicated region
  $region18: #{model_forward.1} parent=0 // pred_check
    _
  $region19: #{model_forward.1} parent=0 // pred_check_branch
    %40 = sbr.rel (0) target = $region21
  $region20: #{model_forward.1} parent=0 // pred_region
    _
  $region21: #{model_forward.1} parent=0 // pred_fallthru
    _
  // Predicated region
  $region22: #{model_forward.1} parent=0 // pred_check
    _
  $region23: #{model_forward.1} parent=0 // pred_check_branch
    %42 = sbr.rel (0) target = $region25
  $region24: #{model_forward.1} parent=0 // pred_region
    _
  $region25: #{model_forward.1} parent=0 // pred_fallthru
    _
  // Predicated region
  $region26: #{model_forward.1} parent=0 // pred_check
    _
  $region27: #{model_forward.1} parent=0 // pred_check_branch
    %44 = sbr.rel (0) target = $region29
  $region28: #{model_forward.1} parent=0 // pred_region
    _
  $region29: #{model_forward.1} parent=0 // pred_fallthru
    _
  // Predicated region
  $region30: #{model_forward.1} parent=0 // pred_check
    _
  $region31: #{model_forward.1} parent=0 // pred_check_branch
    %46 = sbr.rel (0) target = $region33
  $region32: #{model_forward.1} parent=0 // pred_region
    _
  $region33: #{model_forward.1} parent=0 // pred_fallthru
    _
  // Predicated region
  $region34: #{model_forward.1} parent=0 // pred_check
    _
  $region35: #{model_forward.1} parent=0 // pred_check_branch
    %48 = sbr.rel (0) target = $region37
  $region36: #{model_forward.1} parent=0 // pred_region
    _
  $region37: #{model_forward.1} parent=0 // pred_fallthru
    _
  // Predicated region
  $region38: #{model_forward.1} parent=0 // pred_check
    _
  $region39: #{model_forward.1} parent=0 // pred_check_branch
    %50 = sbr.rel (0) target = $region41
  $region40: #{model_forward.1} parent=0 // pred_region
    _
  $region41: #{model_forward.1} parent=0 // pred_fallthru
    _
  // Predicated region
  $region42: #{model_forward.1} parent=0 // pred_check
    _
  $region43: #{model_forward.1} parent=0 // pred_check_branch
    %52 = sbr.rel (0) target = $region45
  $region44: #{model_forward.1} parent=0 // pred_region
    _
  $region45: #{model_forward.1} parent=0 // pred_fallthru
    _
  // Predicated region
  $region46: #{model_forward.1} parent=0 // pred_check
    _
  $region47: #{model_forward.1} parent=0 // pred_check_branch
    %54 = sbr.rel (0) target = $region49
  $region48: #{model_forward.1} parent=0 // pred_region
    _
  $region49: #{model_forward.1} parent=0 // pred_fallthru
    _
  // Predicated region
  $region50: #{model_forward.1} parent=0 // pred_check
    _
  $region51: #{model_forward.1} parent=0 // pred_check_branch
    %56 = sbr.rel (0) target = $region53
  $region52: #{model_forward.1} parent=0 // pred_region
    _
  $region53: #{model_forward.1} parent=0 // pred_fallthru
    _
  // Predicated region
  $region54: #{model_forward.1} parent=0 // pred_check
    _
  $region55: #{model_forward.1} parent=0 // pred_check_branch
    %58 = sbr.rel (0) target = $region57
  $region56: #{model_forward.1} parent=0 // pred_region
    _
  $region57: #{model_forward.1} parent=0 // pred_fallthru
    _
  // Predicated region
  $region58: #{model_forward.1} parent=0 // pred_check
    _
  $region59: #{model_forward.1} parent=0 // pred_check_branch
    %60 = sbr.rel (0) target = $region61
  $region60: #{model_forward.1} parent=0 // pred_region
    _
  $region61: #{model_forward.1} parent=0 // pred_fallthru
    _
  // Predicated region
  $region62: #{model_forward.1} parent=0 // pred_check
    _
  $region63: #{model_forward.1} parent=0 // pred_check_branch
    %62 = sbr.rel (0) target = $region65
  $region64: #{model_forward.1} parent=0 // pred_region
    _
  $region65: #{model_forward.1} parent=0 // pred_fallthru
    _
  // Predicated region
  $region66: #{model_forward.1} parent=0 // pred_check
    _
  $region67: #{model_forward.1} parent=0 // pred_check_branch
    %64 = sbr.rel (0) target = $region69
  $region68: #{model_forward.1} parent=0 // pred_region
    _
  $region69: #{model_forward.1} parent=0 // pred_fallthru
    _
  // Predicated region
  $region70: #{model_forward.1} parent=0 // pred_check
    _
  $region71: #{model_forward.1} parent=0 // pred_check_branch
    %66 = sbr.rel (0) target = $region73
  $region72: #{model_forward.1} parent=0 // pred_region
    _
  $region73: #{model_forward.1} parent=0 // pred_fallthru
    _
  // Predicated region
  $region74: #{model_forward.1} parent=0 // pred_check
    _
  $region75: #{model_forward.1} parent=0 // pred_check_branch
    %68 = sbr.rel (0) target = $region77
  $region76: #{model_forward.1} parent=0 // pred_region
    _
  $region77: #{model_forward.1} parent=0 // pred_fallthru
    _
  // Predicated region
  $region78: #{model_forward.1} parent=0 // pred_check
    _
  $region79: #{model_forward.1} parent=0 // pred_check_branch
    %70 = sbr.rel (0) target = $region81
  $region80: #{model_forward.1} parent=0 // pred_region
    _
  $region81: #{model_forward.1} parent=0 // pred_fallthru
    _
  %v72 = vld [vmem:[%s0] sm:$0xf]
  %v73 = vld [vmem:[%s0 + $0x4] sm:$0xf]
  %v74 = vld [vmem:[%s0 + $0x8] sm:$0xf]
  %v75 = vld [vmem:[%s0 + $0xc] sm:$0xf]
  %v76 = vld [vmem:[%s0 + $0x10] sm:$0xf]
  %v77 = vld [vmem:[%s0 + $0x14] sm:$0xf]
  %v78 = vld [vmem:[%s0 + $0x18] sm:$0xf]
  %v79 = vld [vmem:[%s0 + $0x1c] sm:$0xf]
  %v80 = vld [vmem:[%s2] sm:$0xf]
  %v81 = vld [vmem:[%s2 + $0x4] sm:$0xf]
  %v82 = vld [vmem:[%s2 + $0x8] sm:$0xf]
  %v83 = vld [vmem:[%s3] sm:$0x1]
  %v85 = vperm.slane %v83, 0
  %v95 = vunpack.c.l.b16 %v72
  %v96 = vunpack.c.l.b16 %v73
  %v97 = vunpack.c.l.b16 %v74
  %v98 = vunpack.c.l.b16 %v75
  %v99 = vunpack.c.l.b16 %v76
  %v100 = vunpack.c.l.b16 %v77
  %v101 = vunpack.c.l.b16 %v78
  %v102 = vunpack.c.l.b16 %v79
  %v103 = vpack.c.b16 %v96, %v95
  %v104 = vpack.c.b16 %v98, %v97
  %v105 = vpack.c.b16 %v100, %v99
  %v106 = vpack.c.b16 %v102, %v101
  %v110 = vunpack.c.l.b16 %v80
  %v111 = vunpack.c.l.b16 %v81
  %v112 = vunpack.c.l.b16 %v82
  %v113 = vpack.c.b16 %v111, %v110
  %v114 = vpack.c.b16 %v112, %v112
  %vm116 = vcmask 195584
  %v118 = vsel %vm116, %v103, 0
  %v121 = vsel %vm116, %v104, 0
  %v124 = vsel %vm116, %v105, 0
  %v127 = vsel %vm116, %v106, 0
  %vm129 = vcmask 1043456
  %v131 = vsel %vm129, %v114, 0
  %133 = vmatpush.bf16.msra.mxu0 0
  %134 = vmatpush.bf16.msra.mxu0 0
  %135 = vmatpush.bf16.msra.mxu0 0
  %136 = vmatpush.bf16.msra.mxu0 0
  %137 = vmatpush.bf16.msra.mxu0 0
  %138 = vmatpush.bf16.msra.mxu0 0
  %139 = vmatpush.bf16.msra.mxu0 %v131
  %140 = vmatpush.bf16.msra.mxu0 %v113
  %141 = vmatmul.bf16.gmra.mxu0 %v118
  %v142 = vpop.f32.mrf.mxu0
  %v143 = vadd.f32 %v85, %v142
  %v144 = vpop.f32.mrf.mxu0
  %v145 = vadd.f32 %v85, %v144
  %146 = vmatmul.bf16.gmra.mxu0 %v121
  %v147 = vpop.f32.mrf.mxu0
  %v148 = vadd.f32 %v85, %v147
  %v149 = vpop.f32.mrf.mxu0
  %v150 = vadd.f32 %v85, %v149
  %151 = vmatmul.bf16.gmra.mxu0 %v124
  %v152 = vpop.f32.mrf.mxu0
  %v153 = vadd.f32 %v85, %v152
  %v154 = vpop.f32.mrf.mxu0
  %v155 = vadd.f32 %v85, %v154
  %156 = vmatmul.bf16.gmra.mxu0 %v127
  %v157 = vpop.f32.mrf.mxu0
  %v158 = vadd.f32 %v85, %v157
  %v159 = vpop.f32.mrf.mxu0
  %v160 = vadd.f32 %v85, %v159
  %161 = vdwg.mxu0
  %162 = vst [vmem:[#allocation2] sm:$0xff] %v143
  %163 = vst [vmem:[#allocation2 + $0x8] sm:$0xff] %v145
  %164 = vst [vmem:[#allocation2 + $0x10] sm:$0xff] %v148
  %165 = vst [vmem:[#allocation2 + $0x18] sm:$0xff] %v150
  %166 = vst [vmem:[#allocation2 + $0x20] sm:$0xff] %v153
  %167 = vst [vmem:[#allocation2 + $0x28] sm:$0xff] %v155
  %168 = vst [vmem:[#allocation2 + $0x30] sm:$0xff] %v158
  %169 = vst [vmem:[#allocation2 + $0x38] sm:$0xff] %v160
  %v170 = vld [vmem:[%s8] sm:$0xf]
  %v171 = vld [vmem:[%s8 + $0x4] sm:$0xf]
  %v172 = vld [vmem:[%s8 + $0x8] sm:$0xf]
  %v173 = vld [vmem:[%s8 + $0xc] sm:$0xf]
  %v174 = vld [vmem:[%s8 + $0x10] sm:$0xf]
  %v175 = vld [vmem:[%s8 + $0x14] sm:$0xf]
  %v176 = vld [vmem:[%s10] sm:$0xf]
  %v177 = vld [vmem:[%s10 + $0x4] sm:$0xf]
  %v178 = vld [vmem:[%s11] sm:$0x1]
  %v180 = vperm.slane %v178, 0
  %v188 = vunpack.c.l.b16 %v170
  %v189 = vunpack.c.l.b16 %v171
  %v190 = vunpack.c.l.b16 %v172
  %v191 = vunpack.c.l.b16 %v173
  %v192 = vunpack.c.l.b16 %v174
  %v193 = vunpack.c.l.b16 %v175
  %v194 = vpack.c.b16 %v189, %v188
  %v195 = vpack.c.b16 %v191, %v190
  %v196 = vpack.c.b16 %v193, %v192
  %v199 = vunpack.c.l.b16 %v176
  %v200 = vunpack.c.l.b16 %v177
  %v201 = vpack.c.b16 %v200, %v199
  %vm203 = vcmask 130048
  %v205 = vsel %vm203, %v194, 0
  %v208 = vsel %vm203, %v195, 0
  %v211 = vsel %vm203, %v196, 0
  %213 = vmatpush.bf16.msra.mxu0 0
  %214 = vmatpush.bf16.msra.mxu0 0
  %215 = vmatpush.bf16.msra.mxu0 0
  %216 = vmatpush.bf16.msra.mxu0 0
  %217 = vmatpush.bf16.msra.mxu0 0
  %218 = vmatpush.bf16.msra.mxu0 0
  %219 = vmatpush.bf16.msra.mxu0 0
  %220 = vmatpush.bf16.msra.mxu0 %v201
  %221 = vmatmul.bf16.gmra.mxu0 %v205
  %v222 = vpop.f32.mrf.mxu0
  %v223 = vadd.f32 %v180, %v222
  %v224 = vpop.f32.mrf.mxu0
  %v225 = vadd.f32 %v180, %v224
  %226 = vmatmul.bf16.gmra.mxu0 %v208
  %v227 = vpop.f32.mrf.mxu0
  %v228 = vadd.f32 %v180, %v227
  %v229 = vpop.f32.mrf.mxu0
  %v230 = vadd.f32 %v180, %v229
  %231 = vmatmul.bf16.gmra.mxu0 %v211
  %v232 = vpop.f32.mrf.mxu0
  %v233 = vadd.f32 %v180, %v232
  %v234 = vpop.f32.mrf.mxu0
  %v235 = vadd.f32 %v180, %v234
  %236 = vdwg.mxu0
  %237 = vst [vmem:[#allocation5] sm:$0xff] %v223
  %238 = vst [vmem:[#allocation5 + $0x8] sm:$0xff] %v225
  %239 = vst [vmem:[#allocation5 + $0x10] sm:$0xff] %v228
  %240 = vst [vmem:[#allocation5 + $0x18] sm:$0xff] %v230
  %241 = vst [vmem:[#allocation5 + $0x20] sm:$0xff] %v233
  %242 = vst [vmem:[#allocation5 + $0x28] sm:$0xff] %v235
  %v243 = vld [vmem:[%s4] sm:$0xf]
  %v244 = vld [vmem:[%s4 + $0x4] sm:$0xf]
  %v245 = vld [vmem:[%s4 + $0x8] sm:$0xf]
  %v246 = vld [vmem:[%s4 + $0xc] sm:$0xf]
  %v247 = vld [vmem:[%s12] sm:$0xf]
  %v248 = vld [vmem:[%s12 + $0x4] sm:$0xf]
  %v249 = vld [vmem:[%s12 + $0x8] sm:$0xf]
  %v250 = vld [vmem:[%s12 + $0xc] sm:$0xf]
  %v251 = vlaneseq
  %v252 = vand.u32 %v251, 127
  %vm253 = vcmp.lt.s32.totalorder %v252, 0
  %v254 = vsub.s32 0, %v252
  %v255 = vsel %vm253, %v254, %v252
  %v256 = vshrl.u32 %v255, 5
  %v257 = vand.u32 %v255, 31
  %v258 = vsub.s32 0, %v257
  %v259 = vsel %vm253, %v258, %v257
  %vm260 = vcmp.ne.s32.totalorder %v259, 0
  %vm261 = vcmp.lt.s32.totalorder %v259, 0
  %vm262 = vmand %vm261, %vm260
  %v263 = vadd.s32 %v259, 32
  %v264 = vsel %vm262, %v263, %v259
  %vm265 = vcmp.lt.s32.totalorder %v264, 16
  %v266 = vld [vmem:[#allocation2] sm:$0xff]
  %s267 = scalar_lea.vmem [#allocation2], 56
  %v268 = vld [vmem:[%s267] sm:$0xff]
  %v269 = vsel %vm265, %v266, %v268
  %v274 = vunpack.c.l.b16 %v243
  %v275 = vunpack.c.l.b16 %v244
  %v276 = vunpack.c.l.b16 %v245
  %v277 = vunpack.c.l.b16 %v246
  %v278 = vpack.c.b16 %v275, %v274
  %v279 = vpack.c.b16 %v277, %v276
  %vm282 = vcmask 261120
  %v284 = vsel %vm282, 0, 0
  %286 = vmatpush.bf16.msra.mxu0 0
  %287 = vmatpush.bf16.msra.mxu0 0
  %288 = vmatpush.bf16.msra.mxu0 0
  %289 = vmatpush.bf16.msra.mxu0 0
  %290 = vmatpush.bf16.msra.mxu0 0
  %291 = vmatpush.bf16.msra.mxu0 0
  %292 = vmatpush.bf16.msra.mxu0 %v279
  %293 = vmatpush.bf16.msra.mxu0 %v278
  %294 = vmatmul.bf16.gmra.mxu0 %v284
  %v295 = vpop.f32.mrf.mxu0
  %v296 = vadd.f32 0.0, %v295
  %v297 = vpop.f32.mrf.mxu0
  %298 = vdwg.mxu0
  %v299 = vadd.f32 %v269, %v296
  %v300 = vxor.u32 %v299, 2147483648
  %v301 = vmul.f32 %v300, 1.442695
  %v302 = vpow.pop %v301
  %v303 = vadd.f32 %v302, 1.0
  %v304 = vrcp.pop %v303
  %v305 = vmul.f32 %v303, %v304
  %v306 = vsub.f32 1.0, %v305
  %v307 = vmul.f32 %v304, %v306
  %v308 = vadd.f32 %v304, %v307
  %vm309 = vweird.f32 %v303
  %vm310 = vweird.f32 %v304
  %vm311 = vmor %vm309, %vm310
  %v312 = vsel %vm311, %v304, %v308
  %v313 = vand.u32 2147483647, %v303
  %vm314 = vcmp.eq.f32.partialorder %v313, 8.507059e+37
  %v315 = vand.u32 %v303, 2147483648
  %v316 = vor.u32 1.1754944e-38, %v315
  %v317 = vsel %vm314, %v316, %v312
  %v318 = vmul.f32 1.0, %v317
  %v319 = vtanh.pop %v299
  %v320 = vmul.f32 %v318, 0.0
  %322 = vrot.lane.b32.xlu0 %v319, 32
  %v323 = vpop.permute.xlu0 %322
  %v325 = vmul.f32 %v318, %v323
  %327 = vrot.lane.b32.xlu0 %v325, 32
  %v328 = vpop.permute.xlu0 %327
  %v330 = vadd.f32 %v320, %v328
  %v331 = vtanh.pop %v330
  %333 = vrot.lane.b32.xlu0 %v331, 32
  %v334 = vpop.permute.xlu0 %333
  %v336 = vmul.f32 %v318, %v334
  %338 = vrot.lane.b32.xlu0 %v336, 64
  %v339 = vpop.permute.xlu0 %338
  %341 = vst.msk [vmem:[#allocation3] sm:$0xff] %vm203, %v339
  %342 = vrot.lane.b32.xlu0 %v336, 48
  %v343 = vpop.permute.xlu0 %342
  %s345 = scalar_lea.vmem [#allocation4], 56
  %346 = vst.msk [vmem:[%s345] sm:$0xff] %vm203, %v343
  %v347 = vld [vmem:[#allocation5] sm:$0xff]
  %s348 = scalar_lea.vmem [#allocation5], 40
  %v349 = vld [vmem:[%s348] sm:$0xff]
  %v350 = vsel %vm265, %v347, %v349
  %v355 = vunpack.c.l.b16 %v247
  %v356 = vunpack.c.l.b16 %v248
  %v357 = vunpack.c.l.b16 %v249
  %v358 = vunpack.c.l.b16 %v250
  %v359 = vpack.c.b16 %v356, %v355
  %v360 = vpack.c.b16 %v358, %v357
  %363 = vmatpush.bf16.msra.mxu0 0
  %364 = vmatpush.bf16.msra.mxu0 0
  %365 = vmatpush.bf16.msra.mxu0 0
  %366 = vmatpush.bf16.msra.mxu0 0
  %367 = vmatpush.bf16.msra.mxu0 0
  %368 = vmatpush.bf16.msra.mxu0 0
  %369 = vmatpush.bf16.msra.mxu0 %v360
  %370 = vmatpush.bf16.msra.mxu0 %v359
  %371 = vmatmul.bf16.gmra.mxu0 %v284
  %v372 = vpop.f32.mrf.mxu0
  %v373 = vadd.f32 0.0, %v372
  %v374 = vpop.f32.mrf.mxu0
  %375 = vdwg.mxu0
  %v376 = vadd.f32 %v350, %v373
  %v377 = vxor.u32 %v376, 2147483648
  %v378 = vmul.f32 %v377, 1.442695
  %v379 = vpow.pop %v378
  %v380 = vadd.f32 %v379, 1.0
  %v381 = vrcp.pop %v380
  %v382 = vmul.f32 %v380, %v381
  %v383 = vsub.f32 1.0, %v382
  %v384 = vmul.f32 %v381, %v383
  %v385 = vadd.f32 %v381, %v384
  %vm386 = vweird.f32 %v380
  %vm387 = vweird.f32 %v381
  %vm388 = vmor %vm386, %vm387
  %v389 = vsel %vm388, %v381, %v385
  %v390 = vand.u32 2147483647, %v380
  %vm391 = vcmp.eq.f32.partialorder %v390, 8.507059e+37
  %v392 = vand.u32 %v380, 2147483648
  %v393 = vor.u32 1.1754944e-38, %v392
  %v394 = vsel %vm391, %v393, %v389
  %v395 = vmul.f32 1.0, %v394
  %v396 = vtanh.pop %v376
  %v397 = vmul.f32 %v395, 0.0
  %399 = vrot.lane.b32.xlu0 %v396, 32
  %v400 = vpop.permute.xlu0 %399
  %v402 = vmul.f32 %v395, %v400
  %404 = vrot.lane.b32.xlu0 %v402, 32
  %v405 = vpop.permute.xlu0 %404
  %v407 = vadd.f32 %v397, %v405
  %v408 = vtanh.pop %v407
  %410 = vrot.lane.b32.xlu0 %v408, 32
  %v411 = vpop.permute.xlu0 %410
  %v413 = vmul.f32 %v395, %v411
  %415 = vrot.lane.b32.xlu0 %v413, 64
  %v416 = vpop.permute.xlu0 %415
  %418 = vst.msk [vmem:[#allocation6] sm:$0xff] %vm203, %v416
  %419 = vrot.lane.b32.xlu0 %v413, 48
  %v420 = vpop.permute.xlu0 %419
  %s422 = scalar_lea.vmem [#allocation7], 40
  %423 = vst.msk [vmem:[%s422] sm:$0xff] %vm203, %v420
  %s424 = scalar_lea.vmem [#allocation2], 8
  %v425 = vld [vmem:[%s424] sm:$0xff]
  %s426 = scalar_lea.vmem [#allocation2], 48
  %v427 = vld [vmem:[%s426] sm:$0xff]
  %v428 = vsel %vm265, %v425, %v427
  %v429 = vpack.c.bf16 %v336, %v336
  %431 = vrot.lane.b32.xlu0 %v429, 64
  %v432 = vpop.permute.xlu0 %431
  %v434 = vsel %vm282, %v432, 0
  %436 = vmatpush.bf16.msra.mxu0 0
  %437 = vmatpush.bf16.msra.mxu0 0
  %438 = vmatpush.bf16.msra.mxu0 0
  %439 = vmatpush.bf16.msra.mxu0 0
  %440 = vmatpush.bf16.msra.mxu0 0
  %441 = vmatpush.bf16.msra.mxu0 0
  %442 = vmatpush.bf16.msra.mxu0 %v279
  %443 = vmatpush.bf16.msra.mxu0 %v278
  %444 = vmatmul.bf16.gmra.mxu0 %v434
  %v445 = vpop.f32.mrf.mxu0
  %v446 = vadd.f32 0.0, %v445
  %v447 = vpop.f32.mrf.mxu0
  %448 = vdwg.mxu0
  %v449 = vadd.f32 %v428, %v446
  %v450 = vxor.u32 %v449, 2147483648
  %v451 = vmul.f32 %v450, 1.442695
  %v452 = vpow.pop %v451
  %v453 = vadd.f32 %v452, 1.0
  %v454 = vrcp.pop %v453
  %v455 = vmul.f32 %v453, %v454
  %v456 = vsub.f32 1.0, %v455
  %v457 = vmul.f32 %v454, %v456
  %v458 = vadd.f32 %v454, %v457
  %vm459 = vweird.f32 %v453
  %vm460 = vweird.f32 %v454
  %vm461 = vmor %vm459, %vm460
  %v462 = vsel %vm461, %v454, %v458
  %v463 = vand.u32 2147483647, %v453
  %vm464 = vcmp.eq.f32.partialorder %v463, 8.507059e+37
  %v465 = vand.u32 %v453, 2147483648
  %v466 = vor.u32 1.1754944e-38, %v465
  %v467 = vsel %vm464, %v466, %v462
  %v468 = vmul.f32 1.0, %v467
  %v469 = vtanh.pop %v449
  %v470 = vmul.f32 %v468, %v330
  %472 = vrot.lane.b32.xlu0 %v469, 32
  %v473 = vpop.permute.xlu0 %472
  %v475 = vmul.f32 %v468, %v473
  %477 = vrot.lane.b32.xlu0 %v475, 32
  %v478 = vpop.permute.xlu0 %477
  %v480 = vadd.f32 %v470, %v478
  %v481 = vtanh.pop %v480
  %483 = vrot.lane.b32.xlu0 %v481, 32
  %v484 = vpop.permute.xlu0 %483
  %v486 = vmul.f32 %v468, %v484
  %488 = vrot.lane.b32.xlu0 %v486, 64
  %v489 = vpop.permute.xlu0 %488
  %s491 = scalar_lea.vmem [#allocation3], 8
  %492 = vst.msk [vmem:[%s491] sm:$0xff] %vm203, %v489
  %493 = vrot.lane.b32.xlu0 %v486, 48
  %v494 = vpop.permute.xlu0 %493
  %s496 = scalar_lea.vmem [#allocation4], 48
  %497 = vst.msk [vmem:[%s496] sm:$0xff] %vm203, %v494
  %s498 = scalar_lea.vmem [#allocation5], 8
  %v499 = vld [vmem:[%s498] sm:$0xff]
  %s500 = scalar_lea.vmem [#allocation5], 32
  %v501 = vld [vmem:[%s500] sm:$0xff]
  %v502 = vsel %vm265, %v499, %v501
  %v503 = vpack.c.bf16 %v413, %v413
  %505 = vrot.lane.b32.xlu0 %v503, 64
  %v506 = vpop.permute.xlu0 %505
  %v508 = vsel %vm282, %v506, 0
  %510 = vmatpush.bf16.msra.mxu0 0
  %511 = vmatpush.bf16.msra.mxu0 0
  %512 = vmatpush.bf16.msra.mxu0 0
  %513 = vmatpush.bf16.msra.mxu0 0
  %514 = vmatpush.bf16.msra.mxu0 0
  %515 = vmatpush.bf16.msra.mxu0 0
  %516 = vmatpush.bf16.msra.mxu0 %v360
  %517 = vmatpush.bf16.msra.mxu0 %v359
  %518 = vmatmul.bf16.gmra.mxu0 %v508
  %v519 = vpop.f32.mrf.mxu0
  %v520 = vadd.f32 0.0, %v519
  %v521 = vpop.f32.mrf.mxu0
  %522 = vdwg.mxu0
  %v523 = vadd.f32 %v502, %v520
  %v524 = vxor.u32 %v523, 2147483648
  %v525 = vmul.f32 %v524, 1.442695
  %v526 = vpow.pop %v525
  %v527 = vadd.f32 %v526, 1.0
  %v528 = vrcp.pop %v527
  %v529 = vmul.f32 %v527, %v528
  %v530 = vsub.f32 1.0, %v529
  %v531 = vmul.f32 %v528, %v530
  %v532 = vadd.f32 %v528, %v531
  %vm533 = vweird.f32 %v527
  %vm534 = vweird.f32 %v528
  %vm535 = vmor %vm533, %vm534
  %v536 = vsel %vm535, %v528, %v532
  %v537 = vand.u32 2147483647, %v527
  %vm538 = vcmp.eq.f32.partialorder %v537, 8.507059e+37
  %v539 = vand.u32 %v527, 2147483648
  %v540 = vor.u32 1.1754944e-38, %v539
  %v541 = vsel %vm538, %v540, %v536
  %v542 = vmul.f32 1.0, %v541
  %v543 = vtanh.pop %v523
  %v544 = vmul.f32 %v542, %v407
  %546 = vrot.lane.b32.xlu0 %v543, 32
  %v547 = vpop.permute.xlu0 %546
  %v549 = vmul.f32 %v542, %v547
  %551 = vrot.lane.b32.xlu0 %v549, 32
  %v552 = vpop.permute.xlu0 %551
  %v554 = vadd.f32 %v544, %v552
  %v555 = vtanh.pop %v554
  %557 = vrot.lane.b32.xlu0 %v555, 32
  %v558 = vpop.permute.xlu0 %557
  %v560 = vmul.f32 %v542, %v558
  %562 = vrot.lane.b32.xlu0 %v560, 64
  %v563 = vpop.permute.xlu0 %562
  %s565 = scalar_lea.vmem [#allocation6], 8
  %566 = vst.msk [vmem:[%s565] sm:$0xff] %vm203, %v563
  %567 = vrot.lane.b32.xlu0 %v560, 48
  %v568 = vpop.permute.xlu0 %567
  %s570 = scalar_lea.vmem [#allocation7], 32
  %571 = vst.msk [vmem:[%s570] sm:$0xff] %vm203, %v568
  %s572 = scalar_lea.vmem [#allocation2], 16
  %v573 = vld [vmem:[%s572] sm:$0xff]
  %s574 = scalar_lea.vmem [#allocation2], 40
  %v575 = vld [vmem:[%s574] sm:$0xff]
  %v576 = vsel %vm265, %v573, %v575
  %v577 = vpack.c.bf16 %v486, %v486
  %579 = vrot.lane.b32.xlu0 %v577, 64
  %v580 = vpop.permute.xlu0 %579
  %v582 = vsel %vm282, %v580, 0
  %584 = vmatpush.bf16.msra.mxu0 0
  %585 = vmatpush.bf16.msra.mxu0 0
  %586 = vmatpush.bf16.msra.mxu0 0
  %587 = vmatpush.bf16.msra.mxu0 0
  %588 = vmatpush.bf16.msra.mxu0 0
  %589 = vmatpush.bf16.msra.mxu0 0
  %590 = vmatpush.bf16.msra.mxu0 %v279
  %591 = vmatpush.bf16.msra.mxu0 %v278
  %592 = vmatmul.bf16.gmra.mxu0 %v582
  %v593 = vpop.f32.mrf.mxu0
  %v594 = vadd.f32 0.0, %v593
  %v595 = vpop.f32.mrf.mxu0
  %596 = vdwg.mxu0
  %v597 = vadd.f32 %v576, %v594
  %v598 = vxor.u32 %v597, 2147483648
  %v599 = vmul.f32 %v598, 1.442695
  %v600 = vpow.pop %v599
  %v601 = vadd.f32 %v600, 1.0
  %v602 = vrcp.pop %v601
  %v603 = vmul.f32 %v601, %v602
  %v604 = vsub.f32 1.0, %v603
  %v605 = vmul.f32 %v602, %v604
  %v606 = vadd.f32 %v602, %v605
  %vm607 = vweird.f32 %v601
  %vm608 = vweird.f32 %v602
  %vm609 = vmor %vm607, %vm608
  %v610 = vsel %vm609, %v602, %v606
  %v611 = vand.u32 2147483647, %v601
  %vm612 = vcmp.eq.f32.partialorder %v611, 8.507059e+37
  %v613 = vand.u32 %v601, 2147483648
  %v614 = vor.u32 1.1754944e-38, %v613
  %v615 = vsel %vm612, %v614, %v610
  %v616 = vmul.f32 1.0, %v615
  %v617 = vtanh.pop %v597
  %v618 = vmul.f32 %v616, %v480
  %620 = vrot.lane.b32.xlu0 %v617, 32
  %v621 = vpop.permute.xlu0 %620
  %v623 = vmul.f32 %v616, %v621
  %625 = vrot.lane.b32.xlu0 %v623, 32
  %v626 = vpop.permute.xlu0 %625
  %v628 = vadd.f32 %v618, %v626
  %v629 = vtanh.pop %v628
  %631 = vrot.lane.b32.xlu0 %v629, 32
  %v632 = vpop.permute.xlu0 %631
  %v634 = vmul.f32 %v616, %v632
  %636 = vrot.lane.b32.xlu0 %v634, 64
  %v637 = vpop.permute.xlu0 %636
  %s639 = scalar_lea.vmem [#allocation3], 16
  %640 = vst.msk [vmem:[%s639] sm:$0xff] %vm203, %v637
  %641 = vrot.lane.b32.xlu0 %v634, 48
  %v642 = vpop.permute.xlu0 %641
  %s644 = scalar_lea.vmem [#allocation4], 40
  %645 = vst.msk [vmem:[%s644] sm:$0xff] %vm203, %v642
  %s646 = scalar_lea.vmem [#allocation5], 16
  %v647 = vld [vmem:[%s646] sm:$0xff]
  %s648 = scalar_lea.vmem [#allocation5], 24
  %v649 = vld [vmem:[%s648] sm:$0xff]
  %v650 = vsel %vm265, %v647, %v649
  %v651 = vpack.c.bf16 %v560, %v560
  %653 = vrot.lane.b32.xlu0 %v651, 64
  %v654 = vpop.permute.xlu0 %653
  %v656 = vsel %vm282, %v654, 0
  %658 = vmatpush.bf16.msra.mxu0 0
  %659 = vmatpush.bf16.msra.mxu0 0
  %660 = vmatpush.bf16.msra.mxu0 0
  %661 = vmatpush.bf16.msra.mxu0 0
  %662 = vmatpush.bf16.msra.mxu0 0
  %663 = vmatpush.bf16.msra.mxu0 0
  %664 = vmatpush.bf16.msra.mxu0 %v360
  %665 = vmatpush.bf16.msra.mxu0 %v359
  %666 = vmatmul.bf16.gmra.mxu0 %v656
  %v667 = vpop.f32.mrf.mxu0
  %v668 = vadd.f32 0.0, %v667
  %v669 = vpop.f32.mrf.mxu0
  %670 = vdwg.mxu0
  %v671 = vadd.f32 %v650, %v668
  %v672 = vxor.u32 %v671, 2147483648
  %v673 = vmul.f32 %v672, 1.442695
  %v674 = vpow.pop %v673
  %v675 = vadd.f32 %v674, 1.0
  %v676 = vrcp.pop %v675
  %v677 = vmul.f32 %v675, %v676
  %v678 = vsub.f32 1.0, %v677
  %v679 = vmul.f32 %v676, %v678
  %v680 = vadd.f32 %v676, %v679
  %vm681 = vweird.f32 %v675
  %vm682 = vweird.f32 %v676
  %vm683 = vmor %vm681, %vm682
  %v684 = vsel %vm683, %v676, %v680
  %v685 = vand.u32 2147483647, %v675
  %vm686 = vcmp.eq.f32.partialorder %v685, 8.507059e+37
  %v687 = vand.u32 %v675, 2147483648
  %v688 = vor.u32 1.1754944e-38, %v687
  %v689 = vsel %vm686, %v688, %v684
  %v690 = vmul.f32 1.0, %v689
  %v691 = vtanh.pop %v671
  %v692 = vmul.f32 %v690, %v554
  %694 = vrot.lane.b32.xlu0 %v691, 32
  %v695 = vpop.permute.xlu0 %694
  %v697 = vmul.f32 %v690, %v695
  %699 = vrot.lane.b32.xlu0 %v697, 32
  %v700 = vpop.permute.xlu0 %699
  %v702 = vadd.f32 %v692, %v700
  %v703 = vtanh.pop %v702
  %705 = vrot.lane.b32.xlu0 %v703, 32
  %v706 = vpop.permute.xlu0 %705
  %v708 = vmul.f32 %v690, %v706
  %710 = vrot.lane.b32.xlu0 %v708, 64
  %v711 = vpop.permute.xlu0 %710
  %s713 = scalar_lea.vmem [#allocation6], 16
  %714 = vst.msk [vmem:[%s713] sm:$0xff] %vm203, %v711
  %715 = vrot.lane.b32.xlu0 %v708, 48
  %v716 = vpop.permute.xlu0 %715
  %s718 = scalar_lea.vmem [#allocation7], 24
  %719 = vst.msk [vmem:[%s718] sm:$0xff] %vm203, %v716
  %s720 = scalar_lea.vmem [#allocation2], 24
  %v721 = vld [vmem:[%s720] sm:$0xff]
  %s722 = scalar_lea.vmem [#allocation2], 32
  %v723 = vld [vmem:[%s722] sm:$0xff]
  %v724 = vsel %vm265, %v721, %v723
  %v725 = vpack.c.bf16 %v634, %v634
  %727 = vrot.lane.b32.xlu0 %v725, 64
  %v728 = vpop.permute.xlu0 %727
  %v730 = vsel %vm282, %v728, 0
  %732 = vmatpush.bf16.msra.mxu0 0
  %733 = vmatpush.bf16.msra.mxu0 0
  %734 = vmatpush.bf16.msra.mxu0 0
  %735 = vmatpush.bf16.msra.mxu0 0
  %736 = vmatpush.bf16.msra.mxu0 0
  %737 = vmatpush.bf16.msra.mxu0 0
  %738 = vmatpush.bf16.msra.mxu0 %v279
  %739 = vmatpush.bf16.msra.mxu0 %v278
  %740 = vmatmul.bf16.gmra.mxu0 %v730
  %v741 = vpop.f32.mrf.mxu0
  %v742 = vadd.f32 0.0, %v741
  %v743 = vpop.f32.mrf.mxu0
  %744 = vdwg.mxu0
  %v745 = vadd.f32 %v724, %v742
  %v746 = vxor.u32 %v745, 2147483648
  %v747 = vmul.f32 %v746, 1.442695
  %v748 = vpow.pop %v747
  %v749 = vadd.f32 %v748, 1.0
  %v750 = vrcp.pop %v749
  %v751 = vmul.f32 %v749, %v750
  %v752 = vsub.f32 1.0, %v751
  %v753 = vmul.f32 %v750, %v752
  %v754 = vadd.f32 %v750, %v753
  %vm755 = vweird.f32 %v749
  %vm756 = vweird.f32 %v750
  %vm757 = vmor %vm755, %vm756
  %v758 = vsel %vm757, %v750, %v754
  %v759 = vand.u32 2147483647, %v749
  %vm760 = vcmp.eq.f32.partialorder %v759, 8.507059e+37
  %v761 = vand.u32 %v749, 2147483648
  %v762 = vor.u32 1.1754944e-38, %v761
  %v763 = vsel %vm760, %v762, %v758
  %v764 = vmul.f32 1.0, %v763
  %v765 = vtanh.pop %v745
  %v766 = vmul.f32 %v764, %v628
  %768 = vrot.lane.b32.xlu0 %v765, 32
  %v769 = vpop.permute.xlu0 %768
  %v771 = vmul.f32 %v764, %v769
  %773 = vrot.lane.b32.xlu0 %v771, 32
  %v774 = vpop.permute.xlu0 %773
  %v776 = vadd.f32 %v766, %v774
  %v777 = vtanh.pop %v776
  %779 = vrot.lane.b32.xlu0 %v777, 32
  %v780 = vpop.permute.xlu0 %779
  %v782 = vmul.f32 %v764, %v780
  %784 = vrot.lane.b32.xlu0 %v782, 64
  %v785 = vpop.permute.xlu0 %784
  %s787 = scalar_lea.vmem [#allocation3], 24
  %788 = vst.msk [vmem:[%s787] sm:$0xff] %vm203, %v785
  %789 = vrot.lane.b32.xlu0 %v782, 48
  %v790 = vpop.permute.xlu0 %789
  %s792 = scalar_lea.vmem [#allocation4], 32
  %793 = vst.msk [vmem:[%s792] sm:$0xff] %vm203, %v790
  %v794 = vld [vmem:[%s648] sm:$0xff]
  %v795 = vld [vmem:[%s646] sm:$0xff]
  %v796 = vsel %vm265, %v794, %v795
  %v797 = vpack.c.bf16 %v708, %v708
  %799 = vrot.lane.b32.xlu0 %v797, 64
  %v800 = vpop.permute.xlu0 %799
  %v802 = vsel %vm282, %v800, 0
  %804 = vmatpush.bf16.msra.mxu0 0
  %805 = vmatpush.bf16.msra.mxu0 0
  %806 = vmatpush.bf16.msra.mxu0 0
  %807 = vmatpush.bf16.msra.mxu0 0
  %808 = vmatpush.bf16.msra.mxu0 0
  %809 = vmatpush.bf16.msra.mxu0 0
  %810 = vmatpush.bf16.msra.mxu0 %v360
  %811 = vmatpush.bf16.msra.mxu0 %v359
  %812 = vmatmul.bf16.gmra.mxu0 %v802
  %v813 = vpop.f32.mrf.mxu0
  %v814 = vadd.f32 0.0, %v813
  %v815 = vpop.f32.mrf.mxu0
  %816 = vdwg.mxu0
  %v817 = vadd.f32 %v796, %v814
  %v818 = vxor.u32 %v817, 2147483648
  %v819 = vmul.f32 %v818, 1.442695
  %v820 = vpow.pop %v819
  %v821 = vadd.f32 %v820, 1.0
  %v822 = vrcp.pop %v821
  %v823 = vmul.f32 %v821, %v822
  %v824 = vsub.f32 1.0, %v823
  %v825 = vmul.f32 %v822, %v824
  %v826 = vadd.f32 %v822, %v825
  %vm827 = vweird.f32 %v821
  %vm828 = vweird.f32 %v822
  %vm829 = vmor %vm827, %vm828
  %v830 = vsel %vm829, %v822, %v826
  %v831 = vand.u32 2147483647, %v821
  %vm832 = vcmp.eq.f32.partialorder %v831, 8.507059e+37
  %v833 = vand.u32 %v821, 2147483648
  %v834 = vor.u32 1.1754944e-38, %v833
  %v835 = vsel %vm832, %v834, %v830
  %v836 = vmul.f32 1.0, %v835
  %v837 = vtanh.pop %v817
  %v838 = vmul.f32 %v836, %v702
  %840 = vrot.lane.b32.xlu0 %v837, 32
  %v841 = vpop.permute.xlu0 %840
  %v843 = vmul.f32 %v836, %v841
  %845 = vrot.lane.b32.xlu0 %v843, 32
  %v846 = vpop.permute.xlu0 %845
  %v848 = vadd.f32 %v838, %v846
  %v849 = vtanh.pop %v848
  %851 = vrot.lane.b32.xlu0 %v849, 32
  %v852 = vpop.permute.xlu0 %851
  %v854 = vmul.f32 %v836, %v852
  %856 = vrot.lane.b32.xlu0 %v854, 64
  %v857 = vpop.permute.xlu0 %856
  %s859 = scalar_lea.vmem [#allocation6], 24
  %860 = vst.msk [vmem:[%s859] sm:$0xff] %vm203, %v857
  %861 = vrot.lane.b32.xlu0 %v854, 48
  %v862 = vpop.permute.xlu0 %861
  %s864 = scalar_lea.vmem [#allocation7], 16
  %865 = vst.msk [vmem:[%s864] sm:$0xff] %vm203, %v862
  %v866 = vld [vmem:[%s722] sm:$0xff]
  %v867 = vld [vmem:[%s720] sm:$0xff]
  %v868 = vsel %vm265, %v866, %v867
  %v869 = vpack.c.bf16 %v782, %v782
  %871 = vrot.lane.b32.xlu0 %v869, 64
  %v872 = vpop.permute.xlu0 %871
  %v874 = vsel %vm282, %v872, 0
  %876 = vmatpush.bf16.msra.mxu0 0
  %877 = vmatpush.bf16.msra.mxu0 0
  %878 = vmatpush.bf16.msra.mxu0 0
  %879 = vmatpush.bf16.msra.mxu0 0
  %880 = vmatpush.bf16.msra.mxu0 0
  %881 = vmatpush.bf16.msra.mxu0 0
  %882 = vmatpush.bf16.msra.mxu0 %v279
  %883 = vmatpush.bf16.msra.mxu0 %v278
  %884 = vmatmul.bf16.gmra.mxu0 %v874
  %v885 = vpop.f32.mrf.mxu0
  %v886 = vadd.f32 0.0, %v885
  %v887 = vpop.f32.mrf.mxu0
  %888 = vdwg.mxu0
  %v889 = vadd.f32 %v868, %v886
  %v890 = vxor.u32 %v889, 2147483648
  %v891 = vmul.f32 %v890, 1.442695
  %v892 = vpow.pop %v891
  %v893 = vadd.f32 %v892, 1.0
  %v894 = vrcp.pop %v893
  %v895 = vmul.f32 %v893, %v894
  %v896 = vsub.f32 1.0, %v895
  %v897 = vmul.f32 %v894, %v896
  %v898 = vadd.f32 %v894, %v897
  %vm899 = vweird.f32 %v893
  %vm900 = vweird.f32 %v894
  %vm901 = vmor %vm899, %vm900
  %v902 = vsel %vm901, %v894, %v898
  %v903 = vand.u32 2147483647, %v893
  %vm904 = vcmp.eq.f32.partialorder %v903, 8.507059e+37
  %v905 = vand.u32 %v893, 2147483648
  %v906 = vor.u32 1.1754944e-38, %v905
  %v907 = vsel %vm904, %v906, %v902
  %v908 = vmul.f32 1.0, %v907
  %v909 = vtanh.pop %v889
  %v910 = vmul.f32 %v908, %v776
  %912 = vrot.lane.b32.xlu0 %v909, 32
  %v913 = vpop.permute.xlu0 %912
  %v915 = vmul.f32 %v908, %v913
  %917 = vrot.lane.b32.xlu0 %v915, 32
  %v918 = vpop.permute.xlu0 %917
  %v920 = vadd.f32 %v910, %v918
  %v921 = vtanh.pop %v920
  %923 = vrot.lane.b32.xlu0 %v921, 32
  %v924 = vpop.permute.xlu0 %923
  %v926 = vmul.f32 %v908, %v924
  %928 = vrot.lane.b32.xlu0 %v926, 64
  %v929 = vpop.permute.xlu0 %928
  %s931 = scalar_lea.vmem [#allocation3], 32
  %932 = vst.msk [vmem:[%s931] sm:$0xff] %vm203, %v929
  %933 = vrot.lane.b32.xlu0 %v926, 48
  %v934 = vpop.permute.xlu0 %933
  %s936 = scalar_lea.vmem [#allocation4], 24
  %937 = vst.msk [vmem:[%s936] sm:$0xff] %vm203, %v934
  %v938 = vld [vmem:[%s500] sm:$0xff]
  %v939 = vld [vmem:[%s498] sm:$0xff]
  %v940 = vsel %vm265, %v938, %v939
  %v941 = vpack.c.bf16 %v854, %v854
  %943 = vrot.lane.b32.xlu0 %v941, 64
  %v944 = vpop.permute.xlu0 %943
  %v946 = vsel %vm282, %v944, 0
  %948 = vmatpush.bf16.msra.mxu0 0
  %949 = vmatpush.bf16.msra.mxu0 0
  %950 = vmatpush.bf16.msra.mxu0 0
  %951 = vmatpush.bf16.msra.mxu0 0
  %952 = vmatpush.bf16.msra.mxu0 0
  %953 = vmatpush.bf16.msra.mxu0 0
  %954 = vmatpush.bf16.msra.mxu0 %v360
  %955 = vmatpush.bf16.msra.mxu0 %v359
  %956 = vmatmul.bf16.gmra.mxu0 %v946
  %v957 = vpop.f32.mrf.mxu0
  %v958 = vadd.f32 0.0, %v957
  %v959 = vpop.f32.mrf.mxu0
  %960 = vdwg.mxu0
  %v961 = vadd.f32 %v940, %v958
  %v962 = vxor.u32 %v961, 2147483648
  %v963 = vmul.f32 %v962, 1.442695
  %v964 = vpow.pop %v963
  %v965 = vadd.f32 %v964, 1.0
  %v966 = vrcp.pop %v965
  %v967 = vmul.f32 %v965, %v966
  %v968 = vsub.f32 1.0, %v967
  %v969 = vmul.f32 %v966, %v968
  %v970 = vadd.f32 %v966, %v969
  %vm971 = vweird.f32 %v965
  %vm972 = vweird.f32 %v966
  %vm973 = vmor %vm971, %vm972
  %v974 = vsel %vm973, %v966, %v970
  %v975 = vand.u32 2147483647, %v965
  %vm976 = vcmp.eq.f32.partialorder %v975, 8.507059e+37
  %v977 = vand.u32 %v965, 2147483648
  %v978 = vor.u32 1.1754944e-38, %v977
  %v979 = vsel %vm976, %v978, %v974
  %v980 = vmul.f32 1.0, %v979
  %v981 = vtanh.pop %v961
  %v982 = vmul.f32 %v980, %v848
  %984 = vrot.lane.b32.xlu0 %v981, 32
  %v985 = vpop.permute.xlu0 %984
  %v987 = vmul.f32 %v980, %v985
  %989 = vrot.lane.b32.xlu0 %v987, 32
  %v990 = vpop.permute.xlu0 %989
  %v992 = vadd.f32 %v982, %v990
  %v993 = vtanh.pop %v992
  %995 = vrot.lane.b32.xlu0 %v993, 32
  %v996 = vpop.permute.xlu0 %995
  %v998 = vmul.f32 %v980, %v996
  %1000 = vrot.lane.b32.xlu0 %v998, 64
  %v1001 = vpop.permute.xlu0 %1000
  %s1003 = scalar_lea.vmem [#allocation6], 32
  %1004 = vst.msk [vmem:[%s1003] sm:$0xff] %vm203, %v1001
  %1005 = vrot.lane.b32.xlu0 %v998, 48
  %v1006 = vpop.permute.xlu0 %1005
  %s1008 = scalar_lea.vmem [#allocation7], 8
  %1009 = vst.msk [vmem:[%s1008] sm:$0xff] %vm203, %v1006
  %v1010 = vld [vmem:[%s574] sm:$0xff]
  %v1011 = vld [vmem:[%s572] sm:$0xff]
  %v1012 = vsel %vm265, %v1010, %v1011
  %v1013 = vpack.c.bf16 %v926, %v926
  %1015 = vrot.lane.b32.xlu0 %v1013, 64
  %v1016 = vpop.permute.xlu0 %1015
  %v1018 = vsel %vm282, %v1016, 0
  %1020 = vmatpush.bf16.msra.mxu0 0
  %1021 = vmatpush.bf16.msra.mxu0 0
  %1022 = vmatpush.bf16.msra.mxu0 0
  %1023 = vmatpush.bf16.msra.mxu0 0
  %1024 = vmatpush.bf16.msra.mxu0 0
  %1025 = vmatpush.bf16.msra.mxu0 0
  %1026 = vmatpush.bf16.msra.mxu0 %v279
  %1027 = vmatpush.bf16.msra.mxu0 %v278
  %1028 = vmatmul.bf16.gmra.mxu0 %v1018
  %v1029 = vpop.f32.mrf.mxu0
  %v1030 = vadd.f32 0.0, %v1029
  %v1031 = vpop.f32.mrf.mxu0
  %1032 = vdwg.mxu0
  %v1033 = vadd.f32 %v1012, %v1030
  %v1034 = vxor.u32 %v1033, 2147483648
  %v1035 = vmul.f32 %v1034, 1.442695
  %v1036 = vpow.pop %v1035
  %v1037 = vadd.f32 %v1036, 1.0
  %v1038 = vrcp.pop %v1037
  %v1039 = vmul.f32 %v1037, %v1038
  %v1040 = vsub.f32 1.0, %v1039
  %v1041 = vmul.f32 %v1038, %v1040
  %v1042 = vadd.f32 %v1038, %v1041
  %vm1043 = vweird.f32 %v1037
  %vm1044 = vweird.f32 %v1038
  %vm1045 = vmor %vm1043, %vm1044
  %v1046 = vsel %vm1045, %v1038, %v1042
  %v1047 = vand.u32 2147483647, %v1037
  %vm1048 = vcmp.eq.f32.partialorder %v1047, 8.507059e+37
  %v1049 = vand.u32 %v1037, 2147483648
  %v1050 = vor.u32 1.1754944e-38, %v1049
  %v1051 = vsel %vm1048, %v1050, %v1046
  %v1052 = vmul.f32 1.0, %v1051
  %v1053 = vtanh.pop %v1033
  %v1054 = vmul.f32 %v1052, %v920
  %1056 = vrot.lane.b32.xlu0 %v1053, 32
  %v1057 = vpop.permute.xlu0 %1056
  %v1059 = vmul.f32 %v1052, %v1057
  %1061 = vrot.lane.b32.xlu0 %v1059, 32
  %v1062 = vpop.permute.xlu0 %1061
  %v1064 = vadd.f32 %v1054, %v1062
  %v1065 = vtanh.pop %v1064
  %1067 = vrot.lane.b32.xlu0 %v1065, 32
  %v1068 = vpop.permute.xlu0 %1067
  %v1070 = vmul.f32 %v1052, %v1068
  %1072 = vrot.lane.b32.xlu0 %v1070, 64
  %v1073 = vpop.permute.xlu0 %1072
  %s1075 = scalar_lea.vmem [#allocation3], 40
  %1076 = vst.msk [vmem:[%s1075] sm:$0xff] %vm203, %v1073
  %1077 = vrot.lane.b32.xlu0 %v1070, 48
  %v1078 = vpop.permute.xlu0 %1077
  %s1080 = scalar_lea.vmem [#allocation4], 16
  %1081 = vst.msk [vmem:[%s1080] sm:$0xff] %vm203, %v1078
  %v1082 = vld [vmem:[%s348] sm:$0xff]
  %v1083 = vld [vmem:[#allocation5] sm:$0xff]
  %v1084 = vsel %vm265, %v1082, %v1083
  %v1085 = vpack.c.bf16 %v998, %v998
  %1087 = vrot.lane.b32.xlu0 %v1085, 64
  %v1088 = vpop.permute.xlu0 %1087
  %v1090 = vsel %vm282, %v1088, 0
  %1092 = vmatpush.bf16.msra.mxu0 0
  %1093 = vmatpush.bf16.msra.mxu0 0
  %1094 = vmatpush.bf16.msra.mxu0 0
  %1095 = vmatpush.bf16.msra.mxu0 0
  %1096 = vmatpush.bf16.msra.mxu0 0
  %1097 = vmatpush.bf16.msra.mxu0 0
  %1098 = vmatpush.bf16.msra.mxu0 %v360
  %1099 = vmatpush.bf16.msra.mxu0 %v359
  %1100 = vmatmul.bf16.gmra.mxu0 %v1090
  %v1101 = vpop.f32.mrf.mxu0
  %v1102 = vadd.f32 0.0, %v1101
  %v1103 = vpop.f32.mrf.mxu0
  %1104 = vdwg.mxu0
  %v1105 = vadd.f32 %v1084, %v1102
  %v1106 = vxor.u32 %v1105, 2147483648
  %v1107 = vmul.f32 %v1106, 1.442695
  %v1108 = vpow.pop %v1107
  %v1109 = vadd.f32 %v1108, 1.0
  %v1110 = vrcp.pop %v1109
  %v1111 = vmul.f32 %v1109, %v1110
  %v1112 = vsub.f32 1.0, %v1111
  %v1113 = vmul.f32 %v1110, %v1112
  %v1114 = vadd.f32 %v1110, %v1113
  %vm1115 = vweird.f32 %v1109
  %vm1116 = vweird.f32 %v1110
  %vm1117 = vmor %vm1115, %vm1116
  %v1118 = vsel %vm1117, %v1110, %v1114
  %v1119 = vand.u32 2147483647, %v1109
  %vm1120 = vcmp.eq.f32.partialorder %v1119, 8.507059e+37
  %v1121 = vand.u32 %v1109, 2147483648
  %v1122 = vor.u32 1.1754944e-38, %v1121
  %v1123 = vsel %vm1120, %v1122, %v1118
  %v1124 = vmul.f32 1.0, %v1123
  %v1125 = vtanh.pop %v1105
  %v1126 = vmul.f32 %v1124, %v992
  %1128 = vrot.lane.b32.xlu0 %v1125, 32
  %v1129 = vpop.permute.xlu0 %1128
  %v1131 = vmul.f32 %v1124, %v1129
  %1133 = vrot.lane.b32.xlu0 %v1131, 32
  %v1134 = vpop.permute.xlu0 %1133
  %v1136 = vadd.f32 %v1126, %v1134
  %v1137 = vtanh.pop %v1136
  %1139 = vrot.lane.b32.xlu0 %v1137, 32
  %v1140 = vpop.permute.xlu0 %1139
  %v1142 = vmul.f32 %v1124, %v1140
  %1144 = vrot.lane.b32.xlu0 %v1142, 64
  %v1145 = vpop.permute.xlu0 %1144
  %s1147 = scalar_lea.vmem [#allocation6], 40
  %1148 = vst.msk [vmem:[%s1147] sm:$0xff] %vm203, %v1145
  %1149 = vrot.lane.b32.xlu0 %v1142, 48
  %v1150 = vpop.permute.xlu0 %1149
  %1152 = vst.msk [vmem:[#allocation7] sm:$0xff] %vm203, %v1150
  %v1153 = vld [vmem:[%s426] sm:$0xff]
  %v1154 = vld [vmem:[%s424] sm:$0xff]
  %v1155 = vsel %vm265, %v1153, %v1154
  %v1156 = vpack.c.bf16 %v1070, %v1070
  %1158 = vrot.lane.b32.xlu0 %v1156, 64
  %v1159 = vpop.permute.xlu0 %1158
  %v1161 = vsel %vm282, %v1159, 0
  %1163 = vmatpush.bf16.msra.mxu0 0
  %1164 = vmatpush.bf16.msra.mxu0 0
  %1165 = vmatpush.bf16.msra.mxu0 0
  %1166 = vmatpush.bf16.msra.mxu0 0
  %1167 = vmatpush.bf16.msra.mxu0 0
  %1168 = vmatpush.bf16.msra.mxu0 0
  %1169 = vmatpush.bf16.msra.mxu0 %v279
  %1170 = vmatpush.bf16.msra.mxu0 %v278
  %1171 = vmatmul.bf16.gmra.mxu0 %v1161
  %v1172 = vpop.f32.mrf.mxu0
  %v1173 = vadd.f32 0.0, %v1172
  %v1174 = vpop.f32.mrf.mxu0
  %1175 = vdwg.mxu0
  %v1176 = vadd.f32 %v1155, %v1173
  %v1177 = vxor.u32 %v1176, 2147483648
  %v1178 = vmul.f32 %v1177, 1.442695
  %v1179 = vpow.pop %v1178
  %v1180 = vadd.f32 %v1179, 1.0
  %v1181 = vrcp.pop %v1180
  %v1182 = vmul.f32 %v1180, %v1181
  %v1183 = vsub.f32 1.0, %v1182
  %v1184 = vmul.f32 %v1181, %v1183
  %v1185 = vadd.f32 %v1181, %v1184
  %vm1186 = vweird.f32 %v1180
  %vm1187 = vweird.f32 %v1181
  %vm1188 = vmor %vm1186, %vm1187
  %v1189 = vsel %vm1188, %v1181, %v1185
  %v1190 = vand.u32 2147483647, %v1180
  %vm1191 = vcmp.eq.f32.partialorder %v1190, 8.507059e+37
  %v1192 = vand.u32 %v1180, 2147483648
  %v1193 = vor.u32 1.1754944e-38, %v1192
  %v1194 = vsel %vm1191, %v1193, %v1189
  %v1195 = vmul.f32 1.0, %v1194
  %v1196 = vtanh.pop %v1176
  %v1197 = vmul.f32 %v1195, %v1064
  %1199 = vrot.lane.b32.xlu0 %v1196, 32
  %v1200 = vpop.permute.xlu0 %1199
  %v1202 = vmul.f32 %v1195, %v1200
  %1204 = vrot.lane.b32.xlu0 %v1202, 32
  %v1205 = vpop.permute.xlu0 %1204
  %v1207 = vadd.f32 %v1197, %v1205
  %v1208 = vtanh.pop %v1207
  %1210 = vrot.lane.b32.xlu0 %v1208, 32
  %v1211 = vpop.permute.xlu0 %1210
  %v1213 = vmul.f32 %v1195, %v1211
  %1215 = vrot.lane.b32.xlu0 %v1213, 64
  %v1216 = vpop.permute.xlu0 %1215
  %s1218 = scalar_lea.vmem [#allocation3], 48
  %1219 = vst.msk [vmem:[%s1218] sm:$0xff] %vm203, %v1216
  %1220 = vrot.lane.b32.xlu0 %v1213, 48
  %v1221 = vpop.permute.xlu0 %1220
  %s1223 = scalar_lea.vmem [#allocation4], 8
  %1224 = vst.msk [vmem:[%s1223] sm:$0xff] %vm203, %v1221
  %v1225 = vld [vmem:[%s267] sm:$0xff]
  %v1226 = vld [vmem:[#allocation2] sm:$0xff]
  %v1227 = vsel %vm265, %v1225, %v1226
  %v1228 = vpack.c.bf16 %v1213, %v1213
  %1230 = vrot.lane.b32.xlu0 %v1228, 64
  %v1231 = vpop.permute.xlu0 %1230
  %v1233 = vsel %vm282, %v1231, 0
  %1235 = vmatpush.bf16.msra.mxu0 0
  %1236 = vmatpush.bf16.msra.mxu0 0
  %1237 = vmatpush.bf16.msra.mxu0 0
  %1238 = vmatpush.bf16.msra.mxu0 0
  %1239 = vmatpush.bf16.msra.mxu0 0
  %1240 = vmatpush.bf16.msra.mxu0 0
  %1241 = vmatpush.bf16.msra.mxu0 %v279
  %1242 = vmatpush.bf16.msra.mxu0 %v278
  %1243 = vmatmul.bf16.gmra.mxu0 %v1233
  %v1244 = vpop.f32.mrf.mxu0
  %v1245 = vadd.f32 0.0, %v1244
  %v1246 = vpop.f32.mrf.mxu0
  %1247 = vdwg.mxu0
  %v1248 = vadd.f32 %v1227, %v1245
  %v1249 = vxor.u32 %v1248, 2147483648
  %v1250 = vmul.f32 %v1249, 1.442695
  %v1251 = vpow.pop %v1250
  %v1252 = vadd.f32 %v1251, 1.0
  %v1253 = vrcp.pop %v1252
  %v1254 = vmul.f32 %v1252, %v1253
  %v1255 = vsub.f32 1.0, %v1254
  %v1256 = vmul.f32 %v1253, %v1255
  %v1257 = vadd.f32 %v1253, %v1256
  %vm1258 = vweird.f32 %v1252
  %vm1259 = vweird.f32 %v1253
  %vm1260 = vmor %vm1258, %vm1259
  %v1261 = vsel %vm1260, %v1253, %v1257
  %v1262 = vand.u32 2147483647, %v1252
  %vm1263 = vcmp.eq.f32.partialorder %v1262, 8.507059e+37
  %v1264 = vand.u32 %v1252, 2147483648
  %v1265 = vor.u32 1.1754944e-38, %v1264
  %v1266 = vsel %vm1263, %v1265, %v1261
  %v1267 = vmul.f32 1.0, %v1266
  %v1268 = vtanh.pop %v1248
  %v1269 = vmul.f32 %v1267, %v1207
  %1271 = vrot.lane.b32.xlu0 %v1268, 32
  %v1272 = vpop.permute.xlu0 %1271
  %v1274 = vmul.f32 %v1267, %v1272
  %1276 = vrot.lane.b32.xlu0 %v1274, 32
  %v1277 = vpop.permute.xlu0 %1276
  %v1279 = vadd.f32 %v1269, %v1277
  %v1280 = vtanh.pop %v1279
  %1282 = vrot.lane.b32.xlu0 %v1280, 32
  %v1283 = vpop.permute.xlu0 %1282
  %v1285 = vmul.f32 %v1267, %v1283
  %1287 = vrot.lane.b32.xlu0 %v1285, 64
  %v1288 = vpop.permute.xlu0 %1287
  %s1290 = scalar_lea.vmem [#allocation3], 56
  %1291 = vst.msk [vmem:[%s1290] sm:$0xff] %vm203, %v1288
  %1292 = vrot.lane.b32.xlu0 %v1285, 48
  %v1293 = vpop.permute.xlu0 %1292
  %1295 = vst.msk [vmem:[#allocation4] sm:$0xff] %vm203, %v1293
  %v1296 = vld [vmem:[#allocation3] sm:$0xff]
  %v1297 = vld [vmem:[#allocation3 + $0x8] sm:$0xff]
  %v1298 = vld [vmem:[#allocation3 + $0x10] sm:$0xff]
  %v1299 = vld [vmem:[#allocation3 + $0x18] sm:$0xff]
  %v1300 = vld [vmem:[#allocation3 + $0x20] sm:$0xff]
  %v1301 = vld [vmem:[#allocation3 + $0x28] sm:$0xff]
  %v1302 = vld [vmem:[#allocation3 + $0x30] sm:$0xff]
  %v1303 = vld [vmem:[#allocation3 + $0x38] sm:$0xff]
  %v1304 = vld [vmem:[#allocation4] sm:$0xff]
  %v1305 = vld [vmem:[#allocation4 + $0x8] sm:$0xff]
  %v1306 = vld [vmem:[#allocation4 + $0x10] sm:$0xff]
  %v1307 = vld [vmem:[#allocation4 + $0x18] sm:$0xff]
  %v1308 = vld [vmem:[#allocation4 + $0x20] sm:$0xff]
  %v1309 = vld [vmem:[#allocation4 + $0x28] sm:$0xff]
  %v1310 = vld [vmem:[#allocation4 + $0x30] sm:$0xff]
  %v1311 = vld [vmem:[#allocation4 + $0x38] sm:$0xff]
  %v1312 = vld [vmem:[%s5] sm:$0xff]
  %v1313 = vld [vmem:[%s5 + $0x8] sm:$0xff]
  %v1314 = vld [vmem:[%s6] sm:$0xff]
  %v1315 = vld [vmem:[%s6 + $0x8] sm:$0xff]
  %v1317 = vsel %vm203, %v1304, 0
  %v1320 = vsel %vm203, %v1305, 0
  %v1323 = vsel %vm203, %v1306, 0
  %v1326 = vsel %vm203, %v1307, 0
  %v1329 = vsel %vm203, %v1308, 0
  %v1332 = vsel %vm203, %v1309, 0
  %v1335 = vsel %vm203, %v1310, 0
  %v1338 = vsel %vm203, %v1311, 0
  %1340 = vmatpush.msra.mxu0 0.0
  %1341 = vmatpush.msra.mxu0 0.0
  %1342 = vmatpush.msra.mxu0 0.0
  %1343 = vmatpush.msra.mxu0 0.0
  %1344 = vmatpush.msra.mxu0 0.0
  %1345 = vmatpush.msra.mxu0 0.0
  %1346 = vmatpush.msra.mxu0 0.0
  %1347 = vmatpush.msra.mxu0 0.0
  %1348 = vmatpush.msra.mxu0 0.0
  %1349 = vmatpush.msra.mxu0 0.0
  %1350 = vmatpush.msra.mxu0 0.0
  %1351 = vmatpush.msra.mxu0 0.0
  %1352 = vmatpush.msra.mxu0 0.0
  %1353 = vmatpush.msra.mxu0 0.0
  %1354 = vmatpush.msra.mxu0 %v1315
  %1355 = vmatpush.msra.mxu0 %v1314
  %1356 = vmatmul.f32.gmra.mxu0 %v1317
  %v1357 = vpop.f32.mrf.mxu0
  %v1358 = vadd.f32 0.0, %v1357
  %1359 = vmatmul.f32.gmra.mxu0 %v1320
  %v1360 = vpop.f32.mrf.mxu0
  %v1361 = vadd.f32 0.0, %v1360
  %1362 = vmatmul.f32.gmra.mxu0 %v1323
  %v1363 = vpop.f32.mrf.mxu0
  %v1364 = vadd.f32 0.0, %v1363
  %1365 = vmatmul.f32.gmra.mxu0 %v1326
  %v1366 = vpop.f32.mrf.mxu0
  %v1367 = vadd.f32 0.0, %v1366
  %1368 = vmatmul.f32.gmra.mxu0 %v1329
  %v1369 = vpop.f32.mrf.mxu0
  %v1370 = vadd.f32 0.0, %v1369
  %1371 = vmatmul.f32.gmra.mxu0 %v1332
  %v1372 = vpop.f32.mrf.mxu0
  %v1373 = vadd.f32 0.0, %v1372
  %1374 = vmatmul.f32.gmra.mxu0 %v1335
  %v1375 = vpop.f32.mrf.mxu0
  %v1376 = vadd.f32 0.0, %v1375
  %1377 = vmatmul.f32.gmra.mxu0 %v1338
  %v1378 = vpop.f32.mrf.mxu0
  %v1379 = vadd.f32 0.0, %v1378
  %1380 = vdwg.mxu0
  %v1382 = vsel %vm203, %v1296, 0
  %v1385 = vsel %vm203, %v1297, 0
  %v1388 = vsel %vm203, %v1298, 0
  %v1391 = vsel %vm203, %v1299, 0
  %v1394 = vsel %vm203, %v1300, 0
  %v1397 = vsel %vm203, %v1301, 0
  %v1400 = vsel %vm203, %v1302, 0
  %v1403 = vsel %vm203, %v1303, 0
  %1405 = vmatpush.msra.mxu0 0.0
  %1406 = vmatpush.msra.mxu0 0.0
  %1407 = vmatpush.msra.mxu0 0.0
  %1408 = vmatpush.msra.mxu0 0.0
  %1409 = vmatpush.msra.mxu0 0.0
  %1410 = vmatpush.msra.mxu0 0.0
  %1411 = vmatpush.msra.mxu0 0.0
  %1412 = vmatpush.msra.mxu0 0.0
  %1413 = vmatpush.msra.mxu0 0.0
  %1414 = vmatpush.msra.mxu0 0.0
  %1415 = vmatpush.msra.mxu0 0.0
  %1416 = vmatpush.msra.mxu0 0.0
  %1417 = vmatpush.msra.mxu0 0.0
  %1418 = vmatpush.msra.mxu0 0.0
  %1419 = vmatpush.msra.mxu0 %v1313
  %1420 = vmatpush.msra.mxu0 %v1312
  %1421 = vmatmul.f32.gmra.mxu0 %v1382
  %v1422 = vpop.f32.mrf.mxu0
  %v1423 = vadd.f32 %v1358, %v1422
  %1424 = vmatmul.f32.gmra.mxu0 %v1385
  %v1425 = vpop.f32.mrf.mxu0
  %v1426 = vadd.f32 %v1361, %v1425
  %1427 = vmatmul.f32.gmra.mxu0 %v1388
  %v1428 = vpop.f32.mrf.mxu0
  %v1429 = vadd.f32 %v1364, %v1428
  %1430 = vmatmul.f32.gmra.mxu0 %v1391
  %v1431 = vpop.f32.mrf.mxu0
  %v1432 = vadd.f32 %v1367, %v1431
  %1433 = vmatmul.f32.gmra.mxu0 %v1394
  %v1434 = vpop.f32.mrf.mxu0
  %v1435 = vadd.f32 %v1370, %v1434
  %1436 = vmatmul.f32.gmra.mxu0 %v1397
  %v1437 = vpop.f32.mrf.mxu0
  %v1438 = vadd.f32 %v1373, %v1437
  %1439 = vmatmul.f32.gmra.mxu0 %v1400
  %v1440 = vpop.f32.mrf.mxu0
  %v1441 = vadd.f32 %v1376, %v1440
  %1442 = vmatmul.f32.gmra.mxu0 %v1403
  %v1443 = vpop.f32.mrf.mxu0
  %v1444 = vadd.f32 %v1379, %v1443
  %1445 = vdwg.mxu0
  %v1446 = vld [vmem:[#allocation8] sm:$0x1]
  %v1448 = vperm.slane %v1446, 0
  %v1450 = vadd.f32 %v1423, %v1448
  %v1451 = vadd.f32 %v1426, %v1448
  %v1452 = vadd.f32 %v1429, %v1448
  %v1453 = vadd.f32 %v1432, %v1448
  %v1454 = vadd.f32 %v1435, %v1448
  %v1455 = vadd.f32 %v1438, %v1448
  %v1456 = vadd.f32 %v1441, %v1448
  %v1457 = vadd.f32 %v1444, %v1448
  %v1458 = vtanh.pop %v1450
  %v1459 = vtanh.pop %v1451
  %v1460 = vtanh.pop %v1452
  %v1461 = vtanh.pop %v1453
  %v1462 = vtanh.pop %v1454
  %v1463 = vtanh.pop %v1455
  %v1464 = vtanh.pop %v1456
  %v1465 = vtanh.pop %v1457
  %v1466 = vmul.f32 %v1458, 1.442695
  %v1467 = vpow.pop %v1466
  %v1468 = vmul.f32 %v1459, 1.442695
  %v1469 = vpow.pop %v1468
  %v1470 = vmul.f32 %v1460, 1.442695
  %v1471 = vpow.pop %v1470
  %v1472 = vmul.f32 %v1461, 1.442695
  %v1473 = vpow.pop %v1472
  %v1474 = vmul.f32 %v1462, 1.442695
  %v1475 = vpow.pop %v1474
  %v1476 = vmul.f32 %v1463, 1.442695
  %v1477 = vpow.pop %v1476
  %v1478 = vmul.f32 %v1464, 1.442695
  %v1479 = vpow.pop %v1478
  %v1480 = vmul.f32 %v1465, 1.442695
  %v1481 = vpow.pop %v1480
  %v1482 = vld [vmem:[%s1] sm:$0xff]
  %v1483 = vld [vmem:[%s1 + $0x8] sm:$0xff]
  %v1484 = vld [vmem:[%s1 + $0x10] sm:$0xff]
  %v1485 = vld [vmem:[%s1 + $0x18] sm:$0xff]
  %v1486 = vld [vmem:[%s1 + $0x20] sm:$0xff]
  %v1487 = vld [vmem:[%s1 + $0x28] sm:$0xff]
  %v1488 = vld [vmem:[%s1 + $0x30] sm:$0xff]
  %v1489 = vld [vmem:[%s1 + $0x38] sm:$0xff]
  %v1490 = vmul.f32 %v1467, %v1482
  %v1491 = vmul.f32 %v1469, %v1483
  %v1492 = vmul.f32 %v1471, %v1484
  %v1493 = vmul.f32 %v1473, %v1485
  %v1494 = vmul.f32 %v1475, %v1486
  %v1495 = vmul.f32 %v1477, %v1487
  %v1496 = vmul.f32 %v1479, %v1488
  %v1497 = vmul.f32 %v1481, %v1489
  %vm1498 = vcmask 7168
  %v1499 = vsel %vm1498, %v1490, 0.0
  %v1500 = vsel %vm1498, %v1491, 0.0
  %v1501 = vadd.f32 %v1499, %v1500
  %v1502 = vsel %vm1498, %v1492, 0.0
  %v1503 = vadd.f32 %v1501, %v1502
  %v1504 = vsel %vm1498, %v1493, 0.0
  %v1505 = vadd.f32 %v1503, %v1504
  %v1506 = vsel %vm1498, %v1494, 0.0
  %v1507 = vadd.f32 %v1505, %v1506
  %v1508 = vsel %vm1498, %v1495, 0.0
  %v1509 = vadd.f32 %v1507, %v1508
  %v1510 = vsel %vm1498, %v1496, 0.0
  %v1511 = vadd.f32 %v1509, %v1510
  %v1512 = vsel %vm1498, %v1497, 0.0
  %v1513 = vadd.f32 %v1511, %v1512
  %v1514 = vadd.f32 %v1513, 1e-07
  %v1515 = vrcp.pop %v1514
  %1517 = vset.pattern.permute.xlu0 0
  %1518 = vperm.xlu0 %1517, %v1490
  %v1519 = vpop.permute.xlu0 %1518
  %1522 = vset.pattern.permute.xlu0 0
  %1523 = vperm.xlu0 %1522, %v1491
  %v1524 = vpop.permute.xlu0 %1523
  %1527 = vset.pattern.permute.xlu0 0
  %1528 = vperm.xlu0 %1527, %v1492
  %v1529 = vpop.permute.xlu0 %1528
  %1532 = vset.pattern.permute.xlu0 0
  %1533 = vperm.xlu0 %1532, %v1493
  %v1534 = vpop.permute.xlu0 %1533
  %1537 = vset.pattern.permute.xlu0 0
  %1538 = vperm.xlu0 %1537, %v1494
  %v1539 = vpop.permute.xlu0 %1538
  %1542 = vset.pattern.permute.xlu0 0
  %1543 = vperm.xlu0 %1542, %v1495
  %v1544 = vpop.permute.xlu0 %1543
  %1547 = vset.pattern.permute.xlu0 0
  %1548 = vperm.xlu0 %1547, %v1496
  %v1549 = vpop.permute.xlu0 %1548
  %1552 = vset.pattern.permute.xlu0 0
  %1553 = vperm.xlu0 %1552, %v1497
  %v1554 = vpop.permute.xlu0 %1553
  %v1556 = vmul.f32 %v1519, %v1296
  %v1557 = vmul.f32 %v1524, %v1297
  %v1558 = vmul.f32 %v1529, %v1298
  %v1559 = vmul.f32 %v1534, %v1299
  %v1560 = vmul.f32 %v1539, %v1300
  %v1561 = vmul.f32 %v1544, %v1301
  %v1562 = vmul.f32 %v1549, %v1302
  %v1563 = vmul.f32 %v1554, %v1303
  %v1564 = vsel %vm203, %v1556, 0.0
  %v1565 = vsel %vm203, %v1557, 0.0
  %v1566 = vadd.f32 %v1564, %v1565
  %v1567 = vsel %vm203, %v1558, 0.0
  %v1568 = vadd.f32 %v1566, %v1567
  %v1569 = vsel %vm203, %v1559, 0.0
  %v1570 = vadd.f32 %v1568, %v1569
  %v1571 = vsel %vm203, %v1560, 0.0
  %v1572 = vadd.f32 %v1570, %v1571
  %v1573 = vsel %vm203, %v1561, 0.0
  %v1574 = vadd.f32 %v1572, %v1573
  %v1575 = vsel %vm203, %v1562, 0.0
  %v1576 = vadd.f32 %v1574, %v1575
  %v1577 = vsel %vm203, %v1563, 0.0
  %v1578 = vadd.f32 %v1576, %v1577
  %1580 = vset.pattern.permute.xlu0 0
  %1581 = vperm.xlu0 %1580, %v1515
  %v1582 = vpop.permute.xlu0 %1581
  %v1584 = vmul.f32 %v1582, %v1578
  %v1585 = vmul.f32 %v1519, %v1304
  %v1586 = vmul.f32 %v1524, %v1305
  %v1587 = vmul.f32 %v1529, %v1306
  %v1588 = vmul.f32 %v1534, %v1307
  %v1589 = vmul.f32 %v1539, %v1308
  %v1590 = vmul.f32 %v1544, %v1309
  %v1591 = vmul.f32 %v1549, %v1310
  %v1592 = vmul.f32 %v1554, %v1311
  %v1593 = vsel %vm203, %v1585, 0.0
  %v1594 = vsel %vm203, %v1586, 0.0
  %v1595 = vadd.f32 %v1593, %v1594
  %v1596 = vsel %vm203, %v1587, 0.0
  %v1597 = vadd.f32 %v1595, %v1596
  %v1598 = vsel %vm203, %v1588, 0.0
  %v1599 = vadd.f32 %v1597, %v1598
  %v1600 = vsel %vm203, %v1589, 0.0
  %v1601 = vadd.f32 %v1599, %v1600
  %v1602 = vsel %vm203, %v1590, 0.0
  %v1603 = vadd.f32 %v1601, %v1602
  %v1604 = vsel %vm203, %v1591, 0.0
  %v1605 = vadd.f32 %v1603, %v1604
  %v1606 = vsel %vm203, %v1592, 0.0
  %v1607 = vadd.f32 %v1605, %v1606
  %v1608 = vmul.f32 %v1582, %v1607
  %v1609 = vld [vmem:[%s0] sm:$0xf]
  %v1610 = vld [vmem:[%s0 + $0x4] sm:$0xf]
  %v1611 = vld [vmem:[%s0 + $0x8] sm:$0xf]
  %v1612 = vld [vmem:[%s0 + $0xc] sm:$0xf]
  %v1613 = vld [vmem:[%s0 + $0x10] sm:$0xf]
  %v1614 = vld [vmem:[%s0 + $0x14] sm:$0xf]
  %v1615 = vld [vmem:[%s0 + $0x18] sm:$0xf]
  %v1616 = vld [vmem:[%s0 + $0x1c] sm:$0xf]
  %v1617 = vunpack.c.l.bf16 %v1609
  %v1618 = vunpack.c.l.bf16 %v1610
  %v1619 = vunpack.c.l.bf16 %v1611
  %v1620 = vunpack.c.l.bf16 %v1612
  %v1621 = vunpack.c.l.bf16 %v1613
  %v1622 = vunpack.c.l.bf16 %v1614
  %v1623 = vunpack.c.l.bf16 %v1615
  %v1624 = vunpack.c.l.bf16 %v1616
  %v1625 = vmul.f32 %v1519, %v1617
  %v1626 = vmul.f32 %v1524, %v1618
  %v1627 = vmul.f32 %v1529, %v1619
  %v1628 = vmul.f32 %v1534, %v1620
  %v1629 = vmul.f32 %v1539, %v1621
  %v1630 = vmul.f32 %v1544, %v1622
  %v1631 = vmul.f32 %v1549, %v1623
  %v1632 = vmul.f32 %v1554, %v1624
  %v1633 = vsel %vm116, %v1625, 0.0
  %v1634 = vsel %vm116, %v1626, 0.0
  %v1635 = vadd.f32 %v1633, %v1634
  %v1636 = vsel %vm116, %v1627, 0.0
  %v1637 = vadd.f32 %v1635, %v1636
  %v1638 = vsel %vm116, %v1628, 0.0
  %v1639 = vadd.f32 %v1637, %v1638
  %v1640 = vsel %vm116, %v1629, 0.0
  %v1641 = vadd.f32 %v1639, %v1640
  %v1642 = vsel %vm116, %v1630, 0.0
  %v1643 = vadd.f32 %v1641, %v1642
  %v1644 = vsel %vm116, %v1631, 0.0
  %v1645 = vadd.f32 %v1643, %v1644
  %v1646 = vsel %vm116, %v1632, 0.0
  %v1647 = vadd.f32 %v1645, %v1646
  %v1648 = vmul.f32 %v1582, %v1647
  %1650 = vrot.lane.b32.xlu0 %v1608, 16
  %v1651 = vpop.permute.xlu0 %1650
  %v1653 = vsel %vm203, %v1584, %v1651
  %v1654 = vld [vmem:[#allocation6] sm:$0xff]
  %v1655 = vld [vmem:[#allocation6 + $0x8] sm:$0xff]
  %v1656 = vld [vmem:[#allocation6 + $0x10] sm:$0xff]
  %v1657 = vld [vmem:[#allocation6 + $0x18] sm:$0xff]
  %v1658 = vld [vmem:[#allocation6 + $0x20] sm:$0xff]
  %v1659 = vld [vmem:[#allocation6 + $0x28] sm:$0xff]
  %v1660 = vld [vmem:[#allocation7] sm:$0xff]
  %v1661 = vld [vmem:[#allocation7 + $0x8] sm:$0xff]
  %v1662 = vld [vmem:[#allocation7 + $0x10] sm:$0xff]
  %v1663 = vld [vmem:[#allocation7 + $0x18] sm:$0xff]
  %v1664 = vld [vmem:[#allocation7 + $0x20] sm:$0xff]
  %v1665 = vld [vmem:[#allocation7 + $0x28] sm:$0xff]
  %v1666 = vld [vmem:[%s13] sm:$0xff]
  %v1667 = vld [vmem:[%s13 + $0x8] sm:$0xff]
  %v1668 = vld [vmem:[%s14] sm:$0xff]
  %v1669 = vld [vmem:[%s14 + $0x8] sm:$0xff]
  %v1671 = vsel %vm203, %v1660, 0
  %v1674 = vsel %vm203, %v1661, 0
  %v1677 = vsel %vm203, %v1662, 0
  %v1680 = vsel %vm203, %v1663, 0
  %v1683 = vsel %vm203, %v1664, 0
  %v1686 = vsel %vm203, %v1665, 0
  %1688 = vmatpush.msra.mxu0 0.0
  %1689 = vmatpush.msra.mxu0 0.0
  %1690 = vmatpush.msra.mxu0 0.0
  %1691 = vmatpush.msra.mxu0 0.0
  %1692 = vmatpush.msra.mxu0 0.0
  %1693 = vmatpush.msra.mxu0 0.0
  %1694 = vmatpush.msra.mxu0 0.0
  %1695 = vmatpush.msra.mxu0 0.0
  %1696 = vmatpush.msra.mxu0 0.0
  %1697 = vmatpush.msra.mxu0 0.0
  %1698 = vmatpush.msra.mxu0 0.0
  %1699 = vmatpush.msra.mxu0 0.0
  %1700 = vmatpush.msra.mxu0 0.0
  %1701 = vmatpush.msra.mxu0 0.0
  %1702 = vmatpush.msra.mxu0 %v1669
  %1703 = vmatpush.msra.mxu0 %v1668
  %1704 = vmatmul.f32.gmra.mxu0 %v1671
  %v1705 = vpop.f32.mrf.mxu0
  %v1706 = vadd.f32 0.0, %v1705
  %1707 = vmatmul.f32.gmra.mxu0 %v1674
  %v1708 = vpop.f32.mrf.mxu0
  %v1709 = vadd.f32 0.0, %v1708
  %1710 = vmatmul.f32.gmra.mxu0 %v1677
  %v1711 = vpop.f32.mrf.mxu0
  %v1712 = vadd.f32 0.0, %v1711
  %1713 = vmatmul.f32.gmra.mxu0 %v1680
  %v1714 = vpop.f32.mrf.mxu0
  %v1715 = vadd.f32 0.0, %v1714
  %1716 = vmatmul.f32.gmra.mxu0 %v1683
  %v1717 = vpop.f32.mrf.mxu0
  %v1718 = vadd.f32 0.0, %v1717
  %1719 = vmatmul.f32.gmra.mxu0 %v1686
  %v1720 = vpop.f32.mrf.mxu0
  %v1721 = vadd.f32 0.0, %v1720
  %1722 = vdwg.mxu0
  %v1724 = vsel %vm203, %v1654, 0
  %v1727 = vsel %vm203, %v1655, 0
  %v1730 = vsel %vm203, %v1656, 0
  %v1733 = vsel %vm203, %v1657, 0
  %v1736 = vsel %vm203, %v1658, 0
  %v1739 = vsel %vm203, %v1659, 0
  %1741 = vmatpush.msra.mxu0 0.0
  %1742 = vmatpush.msra.mxu0 0.0
  %1743 = vmatpush.msra.mxu0 0.0
  %1744 = vmatpush.msra.mxu0 0.0
  %1745 = vmatpush.msra.mxu0 0.0
  %1746 = vmatpush.msra.mxu0 0.0
  %1747 = vmatpush.msra.mxu0 0.0
  %1748 = vmatpush.msra.mxu0 0.0
  %1749 = vmatpush.msra.mxu0 0.0
  %1750 = vmatpush.msra.mxu0 0.0
  %1751 = vmatpush.msra.mxu0 0.0
  %1752 = vmatpush.msra.mxu0 0.0
  %1753 = vmatpush.msra.mxu0 0.0
  %1754 = vmatpush.msra.mxu0 0.0
  %1755 = vmatpush.msra.mxu0 %v1667
  %1756 = vmatpush.msra.mxu0 %v1666
  %1757 = vmatmul.f32.gmra.mxu0 %v1724
  %v1758 = vpop.f32.mrf.mxu0
  %v1759 = vadd.f32 %v1706, %v1758
  %1760 = vmatmul.f32.gmra.mxu0 %v1727
  %v1761 = vpop.f32.mrf.mxu0
  %v1762 = vadd.f32 %v1709, %v1761
  %1763 = vmatmul.f32.gmra.mxu0 %v1730
  %v1764 = vpop.f32.mrf.mxu0
  %v1765 = vadd.f32 %v1712, %v1764
  %1766 = vmatmul.f32.gmra.mxu0 %v1733
  %v1767 = vpop.f32.mrf.mxu0
  %v1768 = vadd.f32 %v1715, %v1767
  %1769 = vmatmul.f32.gmra.mxu0 %v1736
  %v1770 = vpop.f32.mrf.mxu0
  %v1771 = vadd.f32 %v1718, %v1770
  %1772 = vmatmul.f32.gmra.mxu0 %v1739
  %v1773 = vpop.f32.mrf.mxu0
  %v1774 = vadd.f32 %v1721, %v1773
  %1775 = vdwg.mxu0
  %v1776 = vld [vmem:[#allocation9] sm:$0x1]
  %v1778 = vperm.slane %v1776, 0
  %v1780 = vadd.f32 %v1759, %v1778
  %v1781 = vadd.f32 %v1762, %v1778
  %v1782 = vadd.f32 %v1765, %v1778
  %v1783 = vadd.f32 %v1768, %v1778
  %v1784 = vadd.f32 %v1771, %v1778
  %v1785 = vadd.f32 %v1774, %v1778
  %v1786 = vtanh.pop %v1780
  %v1787 = vtanh.pop %v1781
  %v1788 = vtanh.pop %v1782
  %v1789 = vtanh.pop %v1783
  %v1790 = vtanh.pop %v1784
  %v1791 = vtanh.pop %v1785
  %v1792 = vmul.f32 %v1786, 1.442695
  %v1793 = vpow.pop %v1792
  %v1794 = vmul.f32 %v1787, 1.442695
  %v1795 = vpow.pop %v1794
  %v1796 = vmul.f32 %v1788, 1.442695
  %v1797 = vpow.pop %v1796
  %v1798 = vmul.f32 %v1789, 1.442695
  %v1799 = vpow.pop %v1798
  %v1800 = vmul.f32 %v1790, 1.442695
  %v1801 = vpow.pop %v1800
  %v1802 = vmul.f32 %v1791, 1.442695
  %v1803 = vpow.pop %v1802
  %v1804 = vld [vmem:[%s9] sm:$0xff]
  %v1805 = vld [vmem:[%s9 + $0x8] sm:$0xff]
  %v1806 = vld [vmem:[%s9 + $0x10] sm:$0xff]
  %v1807 = vld [vmem:[%s9 + $0x18] sm:$0xff]
  %v1808 = vld [vmem:[%s9 + $0x20] sm:$0xff]
  %v1809 = vld [vmem:[%s9 + $0x28] sm:$0xff]
  %v1810 = vmul.f32 %v1793, %v1804
  %v1811 = vmul.f32 %v1795, %v1805
  %v1812 = vmul.f32 %v1797, %v1806
  %v1813 = vmul.f32 %v1799, %v1807
  %v1814 = vmul.f32 %v1801, %v1808
  %v1815 = vmul.f32 %v1803, %v1809
  %v1816 = vsel %vm1498, %v1810, 0.0
  %v1817 = vsel %vm1498, %v1811, 0.0
  %v1818 = vadd.f32 %v1816, %v1817
  %v1819 = vsel %vm1498, %v1812, 0.0
  %v1820 = vadd.f32 %v1818, %v1819
  %v1821 = vsel %vm1498, %v1813, 0.0
  %v1822 = vadd.f32 %v1820, %v1821
  %v1823 = vsel %vm1498, %v1814, 0.0
  %v1824 = vadd.f32 %v1822, %v1823
  %v1825 = vsel %vm1498, %v1815, 0.0
  %v1826 = vadd.f32 %v1824, %v1825
  %v1827 = vadd.f32 %v1826, 1e-07
  %v1828 = vrcp.pop %v1827
  %1830 = vset.pattern.permute.xlu0 0
  %1831 = vperm.xlu0 %1830, %v1810
  %v1832 = vpop.permute.xlu0 %1831
  %1835 = vset.pattern.permute.xlu0 0
  %1836 = vperm.xlu0 %1835, %v1811
  %v1837 = vpop.permute.xlu0 %1836
  %1840 = vset.pattern.permute.xlu0 0
  %1841 = vperm.xlu0 %1840, %v1812
  %v1842 = vpop.permute.xlu0 %1841
  %1845 = vset.pattern.permute.xlu0 0
  %1846 = vperm.xlu0 %1845, %v1813
  %v1847 = vpop.permute.xlu0 %1846
  %1850 = vset.pattern.permute.xlu0 0
  %1851 = vperm.xlu0 %1850, %v1814
  %v1852 = vpop.permute.xlu0 %1851
  %1855 = vset.pattern.permute.xlu0 0
  %1856 = vperm.xlu0 %1855, %v1815
  %v1857 = vpop.permute.xlu0 %1856
  %v1859 = vmul.f32 %v1832, %v1654
  %v1860 = vmul.f32 %v1837, %v1655
  %v1861 = vmul.f32 %v1842, %v1656
  %v1862 = vmul.f32 %v1847, %v1657
  %v1863 = vmul.f32 %v1852, %v1658
  %v1864 = vmul.f32 %v1857, %v1659
  %v1865 = vsel %vm203, %v1859, 0.0
  %v1866 = vsel %vm203, %v1860, 0.0
  %v1867 = vadd.f32 %v1865, %v1866
  %v1868 = vsel %vm203, %v1861, 0.0
  %v1869 = vadd.f32 %v1867, %v1868
  %v1870 = vsel %vm203, %v1862, 0.0
  %v1871 = vadd.f32 %v1869, %v1870
  %v1872 = vsel %vm203, %v1863, 0.0
  %v1873 = vadd.f32 %v1871, %v1872
  %v1874 = vsel %vm203, %v1864, 0.0
  %v1875 = vadd.f32 %v1873, %v1874
  %1877 = vset.pattern.permute.xlu0 0
  %1878 = vperm.xlu0 %1877, %v1828
  %v1879 = vpop.permute.xlu0 %1878
  %v1881 = vmul.f32 %v1879, %v1875
  %v1882 = vmul.f32 %v1832, %v1660
  %v1883 = vmul.f32 %v1837, %v1661
  %v1884 = vmul.f32 %v1842, %v1662
  %v1885 = vmul.f32 %v1847, %v1663
  %v1886 = vmul.f32 %v1852, %v1664
  %v1887 = vmul.f32 %v1857, %v1665
  %v1888 = vsel %vm203, %v1882, 0.0
  %v1889 = vsel %vm203, %v1883, 0.0
  %v1890 = vadd.f32 %v1888, %v1889
  %v1891 = vsel %vm203, %v1884, 0.0
  %v1892 = vadd.f32 %v1890, %v1891
  %v1893 = vsel %vm203, %v1885, 0.0
  %v1894 = vadd.f32 %v1892, %v1893
  %v1895 = vsel %vm203, %v1886, 0.0
  %v1896 = vadd.f32 %v1894, %v1895
  %v1897 = vsel %vm203, %v1887, 0.0
  %v1898 = vadd.f32 %v1896, %v1897
  %v1899 = vmul.f32 %v1879, %v1898
  %v1900 = vld [vmem:[%s8] sm:$0xf]
  %v1901 = vld [vmem:[%s8 + $0x4] sm:$0xf]
  %v1902 = vld [vmem:[%s8 + $0x8] sm:$0xf]
  %v1903 = vld [vmem:[%s8 + $0xc] sm:$0xf]
  %v1904 = vld [vmem:[%s8 + $0x10] sm:$0xf]
  %v1905 = vld [vmem:[%s8 + $0x14] sm:$0xf]
  %v1906 = vunpack.c.l.bf16 %v1900
  %v1907 = vunpack.c.l.bf16 %v1901
  %v1908 = vunpack.c.l.bf16 %v1902
  %v1909 = vunpack.c.l.bf16 %v1903
  %v1910 = vunpack.c.l.bf16 %v1904
  %v1911 = vunpack.c.l.bf16 %v1905
  %v1912 = vmul.f32 %v1832, %v1906
  %v1913 = vmul.f32 %v1837, %v1907
  %v1914 = vmul.f32 %v1842, %v1908
  %v1915 = vmul.f32 %v1847, %v1909
  %v1916 = vmul.f32 %v1852, %v1910
  %v1917 = vmul.f32 %v1857, %v1911
  %v1918 = vsel %vm203, %v1912, 0.0
  %v1919 = vsel %vm203, %v1913, 0.0
  %v1920 = vadd.f32 %v1918, %v1919
  %v1921 = vsel %vm203, %v1914, 0.0
  %v1922 = vadd.f32 %v1920, %v1921
  %v1923 = vsel %vm203, %v1915, 0.0
  %v1924 = vadd.f32 %v1922, %v1923
  %v1925 = vsel %vm203, %v1916, 0.0
  %v1926 = vadd.f32 %v1924, %v1925
  %v1927 = vsel %vm203, %v1917, 0.0
  %v1928 = vadd.f32 %v1926, %v1927
  %v1929 = vmul.f32 %v1879, %v1928
  %1931 = vrot.lane.b32.xlu0 %v1899, 16
  %v1932 = vpop.permute.xlu0 %1931
  %v1934 = vsel %vm203, %v1881, %v1932
  %v1935 = vld [vmem:[%s16] sm:$0xff]
  %1937 = vrot.lane.b32.xlu0 %v1929, 24
  %v1938 = vpop.permute.xlu0 %1937
  %1941 = vrot.lane.b32.xlu0 %v1935, 40
  %v1942 = vpop.permute.xlu0 %1941
  %v1944 = vsel %vm116, %v1648, %v1938
  %vm1945 = vcmask 326656
  %v1946 = vsel %vm1945, %v1944, %v1942
  %vm1947 = vcmask 343040
  %v1948 = vsel %vm1947, %v1946, 0.0
  %1949 = vst [vmem:[%s21] sm:$0xff] %v1948
  %1951 = vrot.lane.b32.xlu0 %v1934, 32
  %v1952 = vpop.permute.xlu0 %1951
  %1954 = vrot.lane.b32.xlu0 %v1935, 64
  %v1955 = vpop.permute.xlu0 %1954
  %v1957 = vsel %vm282, %v1653, %v1952
  %vm1958 = vcmask 523264
  %v1959 = vsel %vm1958, %v1957, %v1955
  %v1960 = vld [vmem:[%s17] sm:$0xff]
  %v1961 = vld [vmem:[%s17 + $0x8] sm:$0xff]
  %v1962 = vld [vmem:[%s17 + $0x10] sm:$0xff]
  %v1963 = vld [vmem:[%s17 + $0x18] sm:$0xff]
  %v1964 = vld [vmem:[%s17 + $0x20] sm:$0xff]
  %v1965 = vld [vmem:[%s17 + $0x28] sm:$0xff]
  %v1966 = vld [vmem:[%s17 + $0x30] sm:$0xff]
  %v1967 = vld [vmem:[%s17 + $0x38] sm:$0xff]
  %v1968 = vld [vmem:[%s17 + $0x40] sm:$0x3]
  %v1969 = vld [vmem:[%s18] sm:$0x1]
  %v1971 = vperm.slane %v1969, 0
  %vm1973 = vcmask 539648
  %v1975 = vsel %vm1973, %v1959, 0
  %vm1977 = vcmask 1041408
  %v1979 = vsel %vm1977, %v1968, 0
  %1981 = vmatpush.msra.mxu0 0.0
  %1982 = vmatpush.msra.mxu0 0.0
  %1983 = vmatpush.msra.mxu0 0.0
  %1984 = vmatpush.msra.mxu0 0.0
  %1985 = vmatpush.msra.mxu0 0.0
  %1986 = vmatpush.msra.mxu0 0.0
  %1987 = vmatpush.msra.mxu0 0.0
  %1988 = vmatpush.msra.mxu0 %v1979
  %1989 = vmatpush.msra.mxu0 %v1967
  %1990 = vmatpush.msra.mxu0 %v1966
  %1991 = vmatpush.msra.mxu0 %v1965
  %1992 = vmatpush.msra.mxu0 %v1964
  %1993 = vmatpush.msra.mxu0 %v1963
  %1994 = vmatpush.msra.mxu0 %v1962
  %1995 = vmatpush.msra.mxu0 %v1961
  %1996 = vmatpush.msra.mxu0 %v1960
  %1997 = vmatmul.f32.gmra.mxu0 %v1975
  %v1998 = vpop.f32.mrf.mxu0
  %v1999 = vadd.f32 %v1971, %v1998
  %2000 = vdwg.mxu0
  %v2001 = vmax.f32 %v1999, 0.0
  %v2002 = vld [vmem:[%s19] sm:$0xff]
  %v2003 = vld [vmem:[%s19 + $0x8] sm:$0xff]
  %v2004 = vld [vmem:[%s19 + $0x10] sm:$0xff]
  %v2005 = vld [vmem:[%s19 + $0x18] sm:$0xff]
  %v2007 = vsel %vm282, %v2001, 0
  %2009 = vmatpush.msra.mxu0 0.0
  %2010 = vmatpush.msra.mxu0 0.0
  %2011 = vmatpush.msra.mxu0 0.0
  %2012 = vmatpush.msra.mxu0 0.0
  %2013 = vmatpush.msra.mxu0 0.0
  %2014 = vmatpush.msra.mxu0 0.0
  %2015 = vmatpush.msra.mxu0 0.0
  %2016 = vmatpush.msra.mxu0 0.0
  %2017 = vmatpush.msra.mxu0 0.0
  %2018 = vmatpush.msra.mxu0 0.0
  %2019 = vmatpush.msra.mxu0 0.0
  %2020 = vmatpush.msra.mxu0 0.0
  %2021 = vmatpush.msra.mxu0 %v2005
  %2022 = vmatpush.msra.mxu0 %v2004
  %2023 = vmatpush.msra.mxu0 %v2003
  %2024 = vmatpush.msra.mxu0 %v2002
  %2025 = vmatmul.f32.gmra.mxu0 %v2007
  %v2026 = vpop.f32.mrf.mxu0
  %v2027 = vadd.f32 0.0, %v2026
  %2028 = vdwg.mxu0
  %2029 = vst [vmem:[%s20] sm:$0xff] %v2027
  // Predicated region
  $region82: #{model_forward.1} parent=0 // pred_check
    _
  $region83: #{model_forward.1} parent=0 // pred_check_branch
    %2031 = sbr.rel (0) target = $region85
  $region84: #{model_forward.1} parent=0 // pred_region
    _
  $region85: #{model_forward.1} parent=0 // pred_fallthru
    _
  // Predicated region
  $region86: #{model_forward.1} parent=0 // pred_check
    _
  $region87: #{model_forward.1} parent=0 // pred_check_branch
    %2033 = sbr.rel (0) target = $region89
  $region88: #{model_forward.1} parent=0 // pred_region
    _
  $region89: #{model_forward.1} parent=0 // pred_fallthru
    _
  // Predicated region
  $region90: #{model_forward.1} parent=0 // pred_check
    _
  $region91: #{model_forward.1} parent=0 // pred_check_branch
    %2035 = sbr.rel (0) target = $region93
  $region92: #{model_forward.1} parent=0 // pred_region
    _
  $region93: #{model_forward.1} parent=0 // pred_fallthru
    _
  // Predicated region
  $region94: #{model_forward.1} parent=0 // pred_check
    _
  $region95: #{model_forward.1} parent=0 // pred_check_branch
    %2037 = sbr.rel (0) target = $region97
  $region96: #{model_forward.1} parent=0 // pred_region
    _
  $region97: #{model_forward.1} parent=0 // pred_fallthru
    _

</llo_original>
